<compile_context>
chip_gen: v5e
topology: v5e:2x2
jax: 0.10.0
libtpu: 0.0.40
codegen_flags: <defaults>
</compile_context>

<pallas_src>
import jax
import jax.numpy as jnp
from jax import lax
from jax.experimental import pallas as pl
from jax.experimental.pallas import tpu as pltpu


# ----------------------------- fused kernel --------------------------------

def fused_bilstm_att_kernel(
    ids_ref,      # (T*2B, 1) int32 stacked ids: rows t*2B+[0:B]=X[t], +[B:2B]=X[T-1-t]
    embw0_ref,    # (V,  8H)   emb @ layer-0 [fwd | bwd] W_ih^T (gate order i,f,g,o)
    b0_ref,       # (1,  8H)   layer-0 [fwd | bwd] (b_ih + b_hh)
    whh0_ref,     # (H,  8H)   layer-0 [fwd | bwd] W_hh^T
    wih1_ref,     # (2H, 8H)   layer-1 [fwd | bwd] W_ih^T
    whh1_ref,     # (H,  8H)   layer-1 [fwd | bwd] W_hh^T
    b1_ref,       # (1,  8H)   layer-1 [fwd | bwd] (b_ih + b_hh)
    watt_ref,     # (1, 2H)    attention vector
    fc1w_ref,     # (2H, 64)   fc1 weight^T
    fc1b_ref,     # (1, 64)
    fc2w_ref,     # (64, C)    fc weight^T
    fc2b_ref,     # (1, C)
    out_ref,      # (T, C)     sigmoid logits
    hn_ref,       # (4, B, H)  final hidden states (l0_f, l0_b, l1_f, l1_b)
    cn_ref,       # (4, B, H)  final cell states
    xproj_sc,     # (T, 2B, 4H)   hoisted input projection (reused per layer)
    out0_sc,      # (T, 2B, 2H)   layer-0 output already in layer-1 stacked-input layout
    hout_sc,      # (T, B, 2H)    layer-1 bidirectional output (attention input layout)
):
    T = out_ref.shape[0]
    B = hn_ref.shape[1]
    H = hn_ref.shape[2]
    B2 = 2 * B
    H4 = 4 * H
    V = embw0_ref.shape[0]
    TB2 = T * B2

    # Direction-select masks: rows 0..B-1 forward, rows B..2B-1 backward.
    row_mask = lax.broadcasted_iota(jnp.int32, (B2, H4), 0) < B
    row_mask3 = lax.broadcasted_iota(jnp.int32, (T, B2, H4), 1) < B

    def fast_sigmoid(x):
        # 1 / (1 + exp(-x)) with the divide on the EUP recip slot.
        return pl.reciprocal(1.0 + jnp.exp(-x), approx=True)

    # ---- 1) layer-0 input projection, embedding folded in (one-hot matmul) ----
    ids = ids_ref[...]                                               # (T*2B, 1)
    onehot = (lax.broadcasted_iota(jnp.int32, (TB2, V), 1) == ids).astype(jnp.float32)
    full0 = jnp.dot(onehot, embw0_ref[...],
                    preferred_element_type=jnp.float32) + b0_ref[...]   # (T*2B, 8H)
    full0 = full0.reshape(T, B2, 2 * H4)                 # [fwd gates | bwd gates]
    xproj_sc[...] = jnp.where(row_mask3, full0[:, :, :H4], full0[:, :, H4:])

    # ---- helpers -----------------------------------------------------------
    def input_projection(x2, wih_ref, b_ref):
        """Hoisted x @ W_ih^T + b for both directions at once -> xproj_sc."""
        full = jnp.dot(x2, wih_ref[...],
                       preferred_element_type=jnp.float32) + b_ref[...]
        full = full.reshape(T, B2, 2 * H4)
        xproj_sc[...] = jnp.where(row_mask3, full[:, :, :H4], full[:, :, H4:])

    def run_layer(whh_ref, write_fn):
        """Batch-stacked bidirectional LSTM recurrence (both dirs at once)."""
        whh = whh_ref[...]                                           # (H, 8H)
        h = jnp.zeros((B2, H), jnp.float32)
        c = jnp.zeros((B2, H), jnp.float32)
        for t in range(T):                 # fully unrolled, static indices
            if t == 0:
                gates = xproj_sc[0]        # h==0 -> skip the recurrent matmul
            else:
                hW = jnp.dot(h, whh, preferred_element_type=jnp.float32)  # (2B, 8H)
                gates = xproj_sc[t] + jnp.where(row_mask, hW[:, :H4], hW[:, H4:])
            sig = fast_sigmoid(gates)      # full-width pass
            th = jnp.tanh(gates)           # full-width pass
            i = sig[:, 0:H]
            f = sig[:, H:2 * H]
            g = th[:, 2 * H:3 * H]
            o = sig[:, 3 * H:4 * H]
            c = f * c + i * g
            h = o * jnp.tanh(c)
            write_fn(t, h)
        return h, c

    # ---- 2) LSTM layer 0 ----------------------------------------------------
    # Write directly into the layer-1 stacked-input layout:
    #   out0[t, 0:B]  = [fwd0(t) | bwd0(t)]          (layer-1 fwd-dir input)
    #   out0[t, B:2B] = [fwd0(T-1-t) | bwd0(T-1-t)]  (layer-1 bwd-dir input)
    def write_layer0(t, h):
        hf = h[0:B, :]        # forward hidden at time t
        hb = h[B:B2, :]       # backward hidden at time T-1-t
        out0_sc[t, 0:B, 0:H] = hf
        out0_sc[T - 1 - t, B:B2, 0:H] = hf
        out0_sc[T - 1 - t, 0:B, H:2 * H] = hb
        out0_sc[t, B:B2, H:2 * H] = hb

    h0, c0 = run_layer(whh0_ref, write_layer0)
    hn_ref[0] = h0[0:B, :]
    hn_ref[1] = h0[B:B2, :]
    cn_ref[0] = c0[0:B, :]
    cn_ref[1] = c0[B:B2, :]

    # ---- 3) LSTM layer 1 ----------------------------------------------------
    input_projection(out0_sc[...].reshape(TB2, 2 * H), wih1_ref, b1_ref)

    # Write directly into the attention-input layout Hout[t] = [fwd1(t) | bwd1(t)].
    def write_layer1(t, h):
        hout_sc[t, :, 0:H] = h[0:B, :]
        hout_sc[T - 1 - t, :, H:2 * H] = h[B:B2, :]

    h1, c1 = run_layer(whh1_ref, write_layer1)
    hn_ref[2] = h1[0:B, :]
    hn_ref[3] = h1[B:B2, :]
    cn_ref[2] = c1[0:B, :]
    cn_ref[3] = c1[B:B2, :]

    # ---- 4) attention (softmax over dim=1) + FC head ------------------------
    Hout = hout_sc[...]                                      # (T, B, 2H)
    M = jnp.tanh(Hout)
    w = watt_ref[...]                                        # (1, 2H)
    scores = jnp.sum(M * w[None, :, :], axis=-1)             # (T, B)
    smax = jnp.max(scores, axis=1, keepdims=True)
    e = jnp.exp(scores - smax)
    alpha = e * pl.reciprocal(jnp.sum(e, axis=1, keepdims=True), approx=True)
    ctx = jnp.sum(Hout * alpha[:, :, None], axis=1)          # (T, 2H)
    ctx = jnp.maximum(ctx, 0.0)                              # relu
    z1 = jnp.dot(ctx, fc1w_ref[...],
                 preferred_element_type=jnp.float32) + fc1b_ref[...]
    z2 = jnp.dot(z1, fc2w_ref[...],
                 preferred_element_type=jnp.float32) + fc2b_ref[...]
    out_ref[...] = jax.nn.sigmoid(z2)


# ----------------------------- wrapper --------------------------------------

def _vmem():
    return pl.BlockSpec(memory_space=pltpu.MemorySpace.VMEM)


def bilstm_att_forward(params, X):
    T, B = X.shape
    H = params["whh0"].shape[0]
    C = params["fc_b"].shape[1]
    n_states = 4  # num_layers(2) * num_directions(2)

    # Fold the embedding table into the layer-0 input weights (weights-only, tiny).
    embw0 = jnp.dot(params["emb"], params["wih0"])                  # (V, 8H)
    # Stacked ids: rows 0:B forward order, rows B:2B time-reversed (backward dir).
    ids = jnp.concatenate([X, jnp.flip(X, axis=0)], axis=1)         # (T, 2B)
    ids = ids.reshape(T * 2 * B, 1).astype(jnp.int32)

    out, h_n, c_n = pl.pallas_call(
        fused_bilstm_att_kernel,
        out_shape=(
            jax.ShapeDtypeStruct((T, C), jnp.float32),
            jax.ShapeDtypeStruct((n_states, B, H), jnp.float32),
            jax.ShapeDtypeStruct((n_states, B, H), jnp.float32),
        ),
        in_specs=[_vmem() for _ in range(12)],
        out_specs=(_vmem(), _vmem(), _vmem()),
        scratch_shapes=[
            pltpu.VMEM((T, 2 * B, 4 * H), jnp.float32),   # hoisted input projection
            pltpu.VMEM((T, 2 * B, 2 * H), jnp.float32),   # layer-0 out / layer-1 stacked input
            pltpu.VMEM((T, B, 2 * H), jnp.float32),       # layer-1 bidir output (attention input)
        ],
    )(ids, embw0,
      params["b0"], params["whh0"],
      params["wih1"], params["whh1"], params["b1"],
      params["w_att"], params["fc1w_t"], params["fc1_b"],
      params["fcw_t"], params["fc_b"])
    return out, (h_n, c_n)


# ----------------------------- parameters ------------------------------------

def kaiming_uniform(key, shape):
    fan_in = shape[1]
    bound = (6.0 / fan_in) ** 0.5
    return jax.random.uniform(key, shape, jnp.float32, -bound, bound)


def orthogonal_init(key, shape):
    a = jax.random.normal(key, shape, jnp.float32)
    q, r = jnp.linalg.qr(a)
    q = q * jnp.sign(jnp.diagonal(r))
    return q.astype(jnp.float32)


def make_lstm_dir_params(k1, k2, input_dim, hidden):
    w_ih = kaiming_uniform(k1, (4 * hidden, input_dim))
    w_hh = orthogonal_init(k2, (4 * hidden, hidden))
    b_ih = jnp.zeros((4 * hidden,), jnp.float32)
    b_hh = jnp.zeros((4 * hidden,), jnp.float32).at[hidden:2 * hidden].set(1.0)
    return w_ih, w_hh, b_ih, b_hh


def pack_bidir(fwd, bwd):
    """Pack the two directions along the gate/output dimension (N = 8H = 256)."""
    w_ih_f, w_hh_f, b_ih_f, b_hh_f = fwd
    w_ih_b, w_hh_b, b_ih_b, b_hh_b = bwd
    wih_t = jnp.concatenate([w_ih_f.T, w_ih_b.T], axis=1)     # (I, 8H)
    whh_t = jnp.concatenate([w_hh_f.T, w_hh_b.T], axis=1)     # (H, 8H)
    b = jnp.concatenate([b_ih_f + b_hh_f, b_ih_b + b_hh_b]).reshape(1, -1)
    return wih_t, whh_t, b


def build_params(vocab_size, embedding_dim, n_hidden, num_classes, key):
    ks = jax.random.split(key, 12)
    l0f = make_lstm_dir_params(ks[1], ks[2], embedding_dim, n_hidden)
    l0b = make_lstm_dir_params(ks[3], ks[4], embedding_dim, n_hidden)
    l1f = make_lstm_dir_params(ks[5], ks[6], 2 * n_hidden, n_hidden)
    l1b = make_lstm_dir_params(ks[7], ks[8], 2 * n_hidden, n_hidden)
    wih0, whh0, b0 = pack_bidir(l0f, l0b)
    wih1, whh1, b1 = pack_bidir(l1f, l1b)
    emb = jax.random.normal(ks[0], (vocab_size, embedding_dim), jnp.float32)
    fc1_w = kaiming_uniform(ks[9], (64, 2 * n_hidden))
    fc_w = kaiming_uniform(ks[10], (num_classes, 64))
    return {
        "emb": emb,
        "wih0": wih0, "whh0": whh0, "b0": b0,
        "wih1": wih1, "whh1": whh1, "b1": b1,
        "w_att": jnp.zeros((1, 2 * n_hidden), jnp.float32),   # nn.Parameter(zeros(2H))
        "fc1w_t": fc1_w.T, "fc1_b": jnp.zeros((1, 64), jnp.float32),
        "fcw_t": fc_w.T, "fc_b": jnp.zeros((1, num_classes), jnp.float32),
    }


# ----------------------------- main ------------------------------------------

if __name__ == "__main__":
    vocab_size, embedding_dim, n_hidden, num_classes = 50, 16, 32, 3
    T, B = 8, 4   # X shape (d0, d1) as fed to the PyTorch module

    root = jax.random.PRNGKey(0)
    k_par, k_inp = jax.random.split(root)
    params = build_params(vocab_size, embedding_dim, n_hidden, num_classes, k_par)

    X = jax.random.randint(k_inp, (T, B), 0, vocab_size, dtype=jnp.int32)

    fwd = jax.jit(bilstm_att_forward)
    out, (h_n, c_n) = fwd(params, X)
    jax.block_until_ready((out, h_n, c_n))

    assert out.shape == (T, num_classes)
    assert h_n.shape == (4, B, n_hidden) and c_n.shape == (4, B, n_hidden)
    assert bool(jnp.all(jnp.isfinite(out)))
    assert bool(jnp.all((out >= 0.0) & (out <= 1.0)))
    print("KERNEL_OK")
</pallas_src>

<mosaic_0001>
module attributes {stable_mosaic.version = 11 : i64} {
  func.func @fused_bilstm_att_kernel(%arg0: memref<64x1xi32, #tpu.memory_space<vmem>>, %arg1: memref<50x256xf32, #tpu.memory_space<vmem>>, %arg2: memref<1x256xf32, #tpu.memory_space<vmem>>, %arg3: memref<32x256xf32, #tpu.memory_space<vmem>>, %arg4: memref<64x256xf32, #tpu.memory_space<vmem>>, %arg5: memref<32x256xf32, #tpu.memory_space<vmem>>, %arg6: memref<1x256xf32, #tpu.memory_space<vmem>>, %arg7: memref<1x64xf32, #tpu.memory_space<vmem>>, %arg8: memref<64x64xf32, #tpu.memory_space<vmem>>, %arg9: memref<1x64xf32, #tpu.memory_space<vmem>>, %arg10: memref<64x3xf32, #tpu.memory_space<vmem>>, %arg11: memref<1x3xf32, #tpu.memory_space<vmem>>, %arg12: memref<8x3xf32, #tpu.memory_space<vmem>>, %arg13: memref<4x4x32xf32, #tpu.memory_space<vmem>>, %arg14: memref<4x4x32xf32, #tpu.memory_space<vmem>>, %arg15: memref<8x8x128xf32, #tpu.memory_space<vmem>>, %arg16: memref<8x8x64xf32, #tpu.memory_space<vmem>>, %arg17: memref<8x4x64xf32, #tpu.memory_space<vmem>>) attributes {dimension_semantics = [], scalar_prefetch = 0 : i64, scratch_operands = 3 : i64, tpu.core_type = #tpu.core_type<tc>} {
    %0 = tpu.iota {dimensions = array<i32: 0>} : vector<8x128xi32>
    %c4_i32 = arith.constant 4 : i32
    %1 = vector.broadcast %c4_i32 : i32 to vector<8x128xi32>
    %2 = arith.cmpi slt, %0, %1 : vector<8x128xi32>
    %3 = tpu.iota {dimensions = array<i32: 1>} : vector<8x8x128xi32>
    %c4_i32_0 = arith.constant 4 : i32
    %4 = vector.broadcast %c4_i32_0 : i32 to vector<8x8x128xi32>
    %5 = arith.cmpi slt, %3, %4 : vector<8x8x128xi32>
    %c0 = arith.constant 0 : index
    %c0_1 = arith.constant 0 : index
    %6 = vector.load %arg0[%c0, %c0_1] : memref<64x1xi32, #tpu.memory_space<vmem>>, vector<64x1xi32>
    %7 = tpu.iota {dimensions = array<i32: 1>} : vector<64x50xi32>
    %8 = vector.broadcast %6 : vector<64x1xi32> to vector<64x50xi32>
    %9 = arith.cmpi eq, %7, %8 : vector<64x50xi32>
    %10 = arith.extui %9 : vector<64x50xi1> to vector<64x50xi32>
    %11 = arith.sitofp %10 : vector<64x50xi32> to vector<64x50xf32>
    %c0_2 = arith.constant 0 : index
    %c0_3 = arith.constant 0 : index
    %12 = vector.load %arg1[%c0_2, %c0_3] : memref<50x256xf32, #tpu.memory_space<vmem>>, vector<50x256xf32>
    %cst = arith.constant dense<0.000000e+00> : vector<64x256xf32>
    %13 = tpu.matmul %11, %12, %cst {dimension_numbers = #tpu.dot_dimension_numbers<[1], [0], [0], [1], [0, 0, 1, 1], [], []>} : vector<64x50xf32>, vector<50x256xf32>, vector<64x256xf32> -> vector<64x256xf32>
    %c0_4 = arith.constant 0 : index
    %c0_5 = arith.constant 0 : index
    %14 = vector.load %arg2[%c0_4, %c0_5] : memref<1x256xf32, #tpu.memory_space<vmem>>, vector<1x256xf32>
    %15 = vector.broadcast %14 : vector<1x256xf32> to vector<64x256xf32>
    %16 = arith.addf %13, %15 : vector<64x256xf32>
    %17 = vector.shape_cast %16 : vector<64x256xf32> to vector<8x8x256xf32>
    %18 = vector.extract_strided_slice %17 {offsets = [0, 0, 0], sizes = [8, 8, 128], strides = [1, 1, 1]} : vector<8x8x256xf32> to vector<8x8x128xf32>
    %19 = vector.extract_strided_slice %17 {offsets = [0, 0, 128], sizes = [8, 8, 128], strides = [1, 1, 1]} : vector<8x8x256xf32> to vector<8x8x128xf32>
    %20 = arith.select %5, %18, %19 : vector<8x8x128xi1>, vector<8x8x128xf32>
    %c0_6 = arith.constant 0 : index
    %c0_7 = arith.constant 0 : index
    %c0_8 = arith.constant 0 : index
    %21 = vector.load %arg15[%c0_6, %c0_7, %c0_8] : memref<8x8x128xf32, #tpu.memory_space<vmem>>, vector<8x8x128xf32>
    tpu.vector_store %arg15[%c0_6, %c0_7, %c0_8], %20 {strides = array<i32>} : memref<8x8x128xf32, #tpu.memory_space<vmem>>, vector<8x8x128xf32>,
    %c0_9 = arith.constant 0 : index
    %c0_10 = arith.constant 0 : index
    %22 = vector.load %arg3[%c0_9, %c0_10] : memref<32x256xf32, #tpu.memory_space<vmem>>, vector<32x256xf32>
    %cst_11 = arith.constant 0.000000e+00 : f32
    %23 = vector.broadcast %cst_11 : f32 to vector<8x32xf32>
    %c0_12 = arith.constant 0 : index
    %c0_13 = arith.constant 0 : index
    %c0_14 = arith.constant 0 : index
    %24 = vector.load %arg15[%c0_12, %c0_13, %c0_14] : memref<8x8x128xf32, #tpu.memory_space<vmem>>, vector<1x8x128xf32>
    %25 = vector.shape_cast %24 : vector<1x8x128xf32> to vector<8x128xf32>
    %cst_15 = arith.constant 0.000000e+00 : f32
    %26 = vector.broadcast %cst_15 : f32 to vector<8x128xf32>
    %27 = arith.subf %26, %25 : vector<8x128xf32>
    %28 = math.exp %27 : vector<8x128xf32>
    %cst_16 = arith.constant 1.000000e+00 : f32
    %29 = vector.broadcast %cst_16 : f32 to vector<8x128xf32>
    %30 = arith.addf %29, %28 : vector<8x128xf32>
    %31 = tpu.reciprocal %30 {approx = true} : vector<8x128xf32> -> vector<8x128xf32>
    %32 = math.tanh %25 : vector<8x128xf32>
    %33 = vector.extract_strided_slice %31 {offsets = [0, 0], sizes = [8, 32], strides = [1, 1]} : vector<8x128xf32> to vector<8x32xf32>
    %34 = vector.extract_strided_slice %31 {offsets = [0, 32], sizes = [8, 32], strides = [1, 1]} : vector<8x128xf32> to vector<8x32xf32>
    %35 = vector.extract_strided_slice %32 {offsets = [0, 64], sizes = [8, 32], strides = [1, 1]} : vector<8x128xf32> to vector<8x32xf32>
    %36 = vector.extract_strided_slice %31 {offsets = [0, 96], sizes = [8, 32], strides = [1, 1]} : vector<8x128xf32> to vector<8x32xf32>
    %37 = arith.mulf %34, %23 : vector<8x32xf32>
    %38 = arith.mulf %33, %35 : vector<8x32xf32>
    %39 = arith.addf %37, %38 : vector<8x32xf32>
    %40 = math.tanh %39 : vector<8x32xf32>
    %41 = arith.mulf %36, %40 : vector<8x32xf32>
    %42 = vector.extract_strided_slice %41 {offsets = [0, 0], sizes = [4, 32], strides = [1, 1]} : vector<8x32xf32> to vector<4x32xf32>
    %43 = vector.extract_strided_slice %41 {offsets = [4, 0], sizes = [4, 32], strides = [1, 1]} : vector<8x32xf32> to vector<4x32xf32>
    %c0_17 = arith.constant 0 : index
    %c0_18 = arith.constant 0 : index
    %c0_19 = arith.constant 0 : index
    %44 = vector.load %arg16[%c0_17, %c0_18, %c0_19] : memref<8x8x64xf32, #tpu.memory_space<vmem>>, vector<1x4x32xf32>
    %45 = vector.shape_cast %44 : vector<1x4x32xf32> to vector<4x32xf32>
    %46 = vector.shape_cast %42 : vector<4x32xf32> to vector<1x4x32xf32>
    tpu.vector_store %arg16[%c0_17, %c0_18, %c0_19], %46 {strides = array<i32>} : memref<8x8x64xf32, #tpu.memory_space<vmem>>, vector<1x4x32xf32>,
    %c7 = arith.constant 7 : index
    %c4 = arith.constant 4 : index
    %c0_20 = arith.constant 0 : index
    %47 = vector.load %arg16[%c7, %c4, %c0_20] : memref<8x8x64xf32, #tpu.memory_space<vmem>>, vector<1x4x32xf32>
    %48 = vector.shape_cast %47 : vector<1x4x32xf32> to vector<4x32xf32>
    %49 = vector.shape_cast %42 : vector<4x32xf32> to vector<1x4x32xf32>
    tpu.vector_store %arg16[%c7, %c4, %c0_20], %49 {strides = array<i32>} : memref<8x8x64xf32, #tpu.memory_space<vmem>>, vector<1x4x32xf32>,
    %c7_21 = arith.constant 7 : index
    %c0_22 = arith.constant 0 : index
    %c32 = arith.constant 32 : index
    %50 = vector.load %arg16[%c7_21, %c0_22, %c32] : memref<8x8x64xf32, #tpu.memory_space<vmem>>, vector<1x4x32xf32>
    %51 = vector.shape_cast %50 : vector<1x4x32xf32> to vector<4x32xf32>
    %52 = vector.shape_cast %43 : vector<4x32xf32> to vector<1x4x32xf32>
    tpu.vector_store %arg16[%c7_21, %c0_22, %c32], %52 {strides = array<i32>} : memref<8x8x64xf32, #tpu.memory_space<vmem>>, vector<1x4x32xf32>,
    %c0_23 = arith.constant 0 : index
    %c4_24 = arith.constant 4 : index
    %c32_25 = arith.constant 32 : index
    %53 = vector.load %arg16[%c0_23, %c4_24, %c32_25] : memref<8x8x64xf32, #tpu.memory_space<vmem>>, vector<1x4x32xf32>
    %54 = vector.shape_cast %53 : vector<1x4x32xf32> to vector<4x32xf32>
    %55 = vector.shape_cast %43 : vector<4x32xf32> to vector<1x4x32xf32>
    tpu.vector_store %arg16[%c0_23, %c4_24, %c32_25], %55 {strides = array<i32>} : memref<8x8x64xf32, #tpu.memory_space<vmem>>, vector<1x4x32xf32>,
    %cst_26 = arith.constant dense<0.000000e+00> : vector<8x256xf32>
    %56 = tpu.matmul %41, %22, %cst_26 {dimension_numbers = #tpu.dot_dimension_numbers<[1], [0], [0], [1], [0, 0, 1, 1], [], []>} : vector<8x32xf32>, vector<32x256xf32>, vector<8x256xf32> -> vector<8x256xf32>
    %c1 = arith.constant 1 : index
    %c0_27 = arith.constant 0 : index
    %c0_28 = arith.constant 0 : index
    %57 = vector.load %arg15[%c1, %c0_27, %c0_28] : memref<8x8x128xf32, #tpu.memory_space<vmem>>, vector<1x8x128xf32>
    %58 = vector.shape_cast %57 : vector<1x8x128xf32> to vector<8x128xf32>
    %59 = vector.extract_strided_slice %56 {offsets = [0, 0], sizes = [8, 128], strides = [1, 1]} : vector<8x256xf32> to vector<8x128xf32>
    %60 = vector.extract_strided_slice %56 {offsets = [0, 128], sizes = [8, 128], strides = [1, 1]} : vector<8x256xf32> to vector<8x128xf32>
    %61 = arith.select %2, %59, %60 : vector<8x128xi1>, vector<8x128xf32>
    %62 = arith.addf %58, %61 : vector<8x128xf32>
    %cst_29 = arith.constant 0.000000e+00 : f32
    %63 = vector.broadcast %cst_29 : f32 to vector<8x128xf32>
    %64 = arith.subf %63, %62 : vector<8x128xf32>
    %65 = math.exp %64 : vector<8x128xf32>
    %cst_30 = arith.constant 1.000000e+00 : f32
    %66 = vector.broadcast %cst_30 : f32 to vector<8x128xf32>
    %67 = arith.addf %66, %65 : vector<8x128xf32>
    %68 = tpu.reciprocal %67 {approx = true} : vector<8x128xf32> -> vector<8x128xf32>
    %69 = math.tanh %62 : vector<8x128xf32>
    %70 = vector.extract_strided_slice %68 {offsets = [0, 0], sizes = [8, 32], strides = [1, 1]} : vector<8x128xf32> to vector<8x32xf32>
    %71 = vector.extract_strided_slice %68 {offsets = [0, 32], sizes = [8, 32], strides = [1, 1]} : vector<8x128xf32> to vector<8x32xf32>
    %72 = vector.extract_strided_slice %69 {offsets = [0, 64], sizes = [8, 32], strides = [1, 1]} : vector<8x128xf32> to vector<8x32xf32>
    %73 = vector.extract_strided_slice %68 {offsets = [0, 96], sizes = [8, 32], strides = [1, 1]} : vector<8x128xf32> to vector<8x32xf32>
    %74 = arith.mulf %71, %39 : vector<8x32xf32>
    %75 = arith.mulf %70, %72 : vector<8x32xf32>
    %76 = arith.addf %74, %75 : vector<8x32xf32>
    %77 = math.tanh %76 : vector<8x32xf32>
    %78 = arith.mulf %73, %77 : vector<8x32xf32>
    %79 = vector.extract_strided_slice %78 {offsets = [0, 0], sizes = [4, 32], strides = [1, 1]} : vector<8x32xf32> to vector<4x32xf32>
    %80 = vector.extract_strided_slice %78 {offsets = [4, 0], sizes = [4, 32], strides = [1, 1]} : vector<8x32xf32> to vector<4x32xf32>
    %c1_31 = arith.constant 1 : index
    %c0_32 = arith.constant 0 : index
    %c0_33 = arith.constant 0 : index
    %81 = vector.load %arg16[%c1_31, %c0_32, %c0_33] : memref<8x8x64xf32, #tpu.memory_space<vmem>>, vector<1x4x32xf32>
    %82 = vector.shape_cast %81 : vector<1x4x32xf32> to vector<4x32xf32>
    %83 = vector.shape_cast %79 : vector<4x32xf32> to vector<1x4x32xf32>
    tpu.vector_store %arg16[%c1_31, %c0_32, %c0_33], %83 {strides = array<i32>} : memref<8x8x64xf32, #tpu.memory_space<vmem>>, vector<1x4x32xf32>,
    %c6 = arith.constant 6 : index
    %c4_34 = arith.constant 4 : index
    %c0_35 = arith.constant 0 : index
    %84 = vector.load %arg16[%c6, %c4_34, %c0_35] : memref<8x8x64xf32, #tpu.memory_space<vmem>>, vector<1x4x32xf32>
    %85 = vector.shape_cast %84 : vector<1x4x32xf32> to vector<4x32xf32>
    %86 = vector.shape_cast %79 : vector<4x32xf32> to vector<1x4x32xf32>
    tpu.vector_store %arg16[%c6, %c4_34, %c0_35], %86 {strides = array<i32>} : memref<8x8x64xf32, #tpu.memory_space<vmem>>, vector<1x4x32xf32>,
    %c6_36 = arith.constant 6 : index
    %c0_37 = arith.constant 0 : index
    %c32_38 = arith.constant 32 : index
    %87 = vector.load %arg16[%c6_36, %c0_37, %c32_38] : memref<8x8x64xf32, #tpu.memory_space<vmem>>, vector<1x4x32xf32>
    %88 = vector.shape_cast %87 : vector<1x4x32xf32> to vector<4x32xf32>
    %89 = vector.shape_cast %80 : vector<4x32xf32> to vector<1x4x32xf32>
    tpu.vector_store %arg16[%c6_36, %c0_37, %c32_38], %89 {strides = array<i32>} : memref<8x8x64xf32, #tpu.memory_space<vmem>>, vector<1x4x32xf32>,
    %c1_39 = arith.constant 1 : index
    %c4_40 = arith.constant 4 : index
    %c32_41 = arith.constant 32 : index
    %90 = vector.load %arg16[%c1_39, %c4_40, %c32_41] : memref<8x8x64xf32, #tpu.memory_space<vmem>>, vector<1x4x32xf32>
    %91 = vector.shape_cast %90 : vector<1x4x32xf32> to vector<4x32xf32>
    %92 = vector.shape_cast %80 : vector<4x32xf32> to vector<1x4x32xf32>
    tpu.vector_store %arg16[%c1_39, %c4_40, %c32_41], %92 {strides = array<i32>} : memref<8x8x64xf32, #tpu.memory_space<vmem>>, vector<1x4x32xf32>,
    %cst_42 = arith.constant dense<0.000000e+00> : vector<8x256xf32>
    %93 = tpu.matmul %78, %22, %cst_42 {dimension_numbers = #tpu.dot_dimension_numbers<[1], [0], [0], [1], [0, 0, 1, 1], [], []>} : vector<8x32xf32>, vector<32x256xf32>, vector<8x256xf32> -> vector<8x256xf32>
    %c2 = arith.constant 2 : index
    %c0_43 = arith.constant 0 : index
    %c0_44 = arith.constant 0 : index
    %94 = vector.load %arg15[%c2, %c0_43, %c0_44] : memref<8x8x128xf32, #tpu.memory_space<vmem>>, vector<1x8x128xf32>
    %95 = vector.shape_cast %94 : vector<1x8x128xf32> to vector<8x128xf32>
    %96 = vector.extract_strided_slice %93 {offsets = [0, 0], sizes = [8, 128], strides = [1, 1]} : vector<8x256xf32> to vector<8x128xf32>
    %97 = vector.extract_strided_slice %93 {offsets = [0, 128], sizes = [8, 128], strides = [1, 1]} : vector<8x256xf32> to vector<8x128xf32>
    %98 = arith.select %2, %96, %97 : vector<8x128xi1>, vector<8x128xf32>
    %99 = arith.addf %95, %98 : vector<8x128xf32>
    %cst_45 = arith.constant 0.000000e+00 : f32
    %100 = vector.broadcast %cst_45 : f32 to vector<8x128xf32>
    %101 = arith.subf %100, %99 : vector<8x128xf32>
    %102 = math.exp %101 : vector<8x128xf32>
    %cst_46 = arith.constant 1.000000e+00 : f32
    %103 = vector.broadcast %cst_46 : f32 to vector<8x128xf32>
    %104 = arith.addf %103, %102 : vector<8x128xf32>
    %105 = tpu.reciprocal %104 {approx = true} : vector<8x128xf32> -> vector<8x128xf32>
    %106 = math.tanh %99 : vector<8x128xf32>
    %107 = vector.extract_strided_slice %105 {offsets = [0, 0], sizes = [8, 32], strides = [1, 1]} : vector<8x128xf32> to vector<8x32xf32>
    %108 = vector.extract_strided_slice %105 {offsets = [0, 32], sizes = [8, 32], strides = [1, 1]} : vector<8x128xf32> to vector<8x32xf32>
    %109 = vector.extract_strided_slice %106 {offsets = [0, 64], sizes = [8, 32], strides = [1, 1]} : vector<8x128xf32> to vector<8x32xf32>
    %110 = vector.extract_strided_slice %105 {offsets = [0, 96], sizes = [8, 32], strides = [1, 1]} : vector<8x128xf32> to vector<8x32xf32>
    %111 = arith.mulf %108, %76 : vector<8x32xf32>
    %112 = arith.mulf %107, %109 : vector<8x32xf32>
    %113 = arith.addf %111, %112 : vector<8x32xf32>
    %114 = math.tanh %113 : vector<8x32xf32>
    %115 = arith.mulf %110, %114 : vector<8x32xf32>
    %116 = vector.extract_strided_slice %115 {offsets = [0, 0], sizes = [4, 32], strides = [1, 1]} : vector<8x32xf32> to vector<4x32xf32>
    %117 = vector.extract_strided_slice %115 {offsets = [4, 0], sizes = [4, 32], strides = [1, 1]} : vector<8x32xf32> to vector<4x32xf32>
    %c2_47 = arith.constant 2 : index
    %c0_48 = arith.constant 0 : index
    %c0_49 = arith.constant 0 : index
    %118 = vector.load %arg16[%c2_47, %c0_48, %c0_49] : memref<8x8x64xf32, #tpu.memory_space<vmem>>, vector<1x4x32xf32>
    %119 = vector.shape_cast %118 : vector<1x4x32xf32> to vector<4x32xf32>
    %120 = vector.shape_cast %116 : vector<4x32xf32> to vector<1x4x32xf32>
    tpu.vector_store %arg16[%c2_47, %c0_48, %c0_49], %120 {strides = array<i32>} : memref<8x8x64xf32, #tpu.memory_space<vmem>>, vector<1x4x32xf32>,
    %c5 = arith.constant 5 : index
    %c4_50 = arith.constant 4 : index
    %c0_51 = arith.constant 0 : index
    %121 = vector.load %arg16[%c5, %c4_50, %c0_51] : memref<8x8x64xf32, #tpu.memory_space<vmem>>, vector<1x4x32xf32>
    %122 = vector.shape_cast %121 : vector<1x4x32xf32> to vector<4x32xf32>
    %123 = vector.shape_cast %116 : vector<4x32xf32> to vector<1x4x32xf32>
    tpu.vector_store %arg16[%c5, %c4_50, %c0_51], %123 {strides = array<i32>} : memref<8x8x64xf32, #tpu.memory_space<vmem>>, vector<1x4x32xf32>,
    %c5_52 = arith.constant 5 : index
    %c0_53 = arith.constant 0 : index
    %c32_54 = arith.constant 32 : index
    %124 = vector.load %arg16[%c5_52, %c0_53, %c32_54] : memref<8x8x64xf32, #tpu.memory_space<vmem>>, vector<1x4x32xf32>
    %125 = vector.shape_cast %124 : vector<1x4x32xf32> to vector<4x32xf32>
    %126 = vector.shape_cast %117 : vector<4x32xf32> to vector<1x4x32xf32>
    tpu.vector_store %arg16[%c5_52, %c0_53, %c32_54], %126 {strides = array<i32>} : memref<8x8x64xf32, #tpu.memory_space<vmem>>, vector<1x4x32xf32>,
    %c2_55 = arith.constant 2 : index
    %c4_56 = arith.constant 4 : index
    %c32_57 = arith.constant 32 : index
    %127 = vector.load %arg16[%c2_55, %c4_56, %c32_57] : memref<8x8x64xf32, #tpu.memory_space<vmem>>, vector<1x4x32xf32>
    %128 = vector.shape_cast %127 : vector<1x4x32xf32> to vector<4x32xf32>
    %129 = vector.shape_cast %117 : vector<4x32xf32> to vector<1x4x32xf32>
    tpu.vector_store %arg16[%c2_55, %c4_56, %c32_57], %129 {strides = array<i32>} : memref<8x8x64xf32, #tpu.memory_space<vmem>>, vector<1x4x32xf32>,
    %cst_58 = arith.constant dense<0.000000e+00> : vector<8x256xf32>
    %130 = tpu.matmul %115, %22, %cst_58 {dimension_numbers = #tpu.dot_dimension_numbers<[1], [0], [0], [1], [0, 0, 1, 1], [], []>} : vector<8x32xf32>, vector<32x256xf32>, vector<8x256xf32> -> vector<8x256xf32>
    %c3 = arith.constant 3 : index
    %c0_59 = arith.constant 0 : index
    %c0_60 = arith.constant 0 : index
    %131 = vector.load %arg15[%c3, %c0_59, %c0_60] : memref<8x8x128xf32, #tpu.memory_space<vmem>>, vector<1x8x128xf32>
    %132 = vector.shape_cast %131 : vector<1x8x128xf32> to vector<8x128xf32>
    %133 = vector.extract_strided_slice %130 {offsets = [0, 0], sizes = [8, 128], strides = [1, 1]} : vector<8x256xf32> to vector<8x128xf32>
    %134 = vector.extract_strided_slice %130 {offsets = [0, 128], sizes = [8, 128], strides = [1, 1]} : vector<8x256xf32> to vector<8x128xf32>
    %135 = arith.select %2, %133, %134 : vector<8x128xi1>, vector<8x128xf32>
    %136 = arith.addf %132, %135 : vector<8x128xf32>
    %cst_61 = arith.constant 0.000000e+00 : f32
    %137 = vector.broadcast %cst_61 : f32 to vector<8x128xf32>
    %138 = arith.subf %137, %136 : vector<8x128xf32>
    %139 = math.exp %138 : vector<8x128xf32>
    %cst_62 = arith.constant 1.000000e+00 : f32
    %140 = vector.broadcast %cst_62 : f32 to vector<8x128xf32>
    %141 = arith.addf %140, %139 : vector<8x128xf32>
    %142 = tpu.reciprocal %141 {approx = true} : vector<8x128xf32> -> vector<8x128xf32>
    %143 = math.tanh %136 : vector<8x128xf32>
    %144 = vector.extract_strided_slice %142 {offsets = [0, 0], sizes = [8, 32], strides = [1, 1]} : vector<8x128xf32> to vector<8x32xf32>
    %145 = vector.extract_strided_slice %142 {offsets = [0, 32], sizes = [8, 32], strides = [1, 1]} : vector<8x128xf32> to vector<8x32xf32>
    %146 = vector.extract_strided_slice %143 {offsets = [0, 64], sizes = [8, 32], strides = [1, 1]} : vector<8x128xf32> to vector<8x32xf32>
    %147 = vector.extract_strided_slice %142 {offsets = [0, 96], sizes = [8, 32], strides = [1, 1]} : vector<8x128xf32> to vector<8x32xf32>
    %148 = arith.mulf %145, %113 : vector<8x32xf32>
    %149 = arith.mulf %144, %146 : vector<8x32xf32>
    %150 = arith.addf %148, %149 : vector<8x32xf32>
    %151 = math.tanh %150 : vector<8x32xf32>
    %152 = arith.mulf %147, %151 : vector<8x32xf32>
    %153 = vector.extract_strided_slice %152 {offsets = [0, 0], sizes = [4, 32], strides = [1, 1]} : vector<8x32xf32> to vector<4x32xf32>
    %154 = vector.extract_strided_slice %152 {offsets = [4, 0], sizes = [4, 32], strides = [1, 1]} : vector<8x32xf32> to vector<4x32xf32>
    %c3_63 = arith.constant 3 : index
    %c0_64 = arith.constant 0 : index
    %c0_65 = arith.constant 0 : index
    %155 = vector.load %arg16[%c3_63, %c0_64, %c0_65] : memref<8x8x64xf32, #tpu.memory_space<vmem>>, vector<1x4x32xf32>
    %156 = vector.shape_cast %155 : vector<1x4x32xf32> to vector<4x32xf32>
    %157 = vector.shape_cast %153 : vector<4x32xf32> to vector<1x4x32xf32>
    tpu.vector_store %arg16[%c3_63, %c0_64, %c0_65], %157 {strides = array<i32>} : memref<8x8x64xf32, #tpu.memory_space<vmem>>, vector<1x4x32xf32>,
    %c4_66 = arith.constant 4 : index
    %c4_67 = arith.constant 4 : index
    %c0_68 = arith.constant 0 : index
    %158 = vector.load %arg16[%c4_66, %c4_67, %c0_68] : memref<8x8x64xf32, #tpu.memory_space<vmem>>, vector<1x4x32xf32>
    %159 = vector.shape_cast %158 : vector<1x4x32xf32> to vector<4x32xf32>
    %160 = vector.shape_cast %153 : vector<4x32xf32> to vector<1x4x32xf32>
    tpu.vector_store %arg16[%c4_66, %c4_67, %c0_68], %160 {strides = array<i32>} : memref<8x8x64xf32, #tpu.memory_space<vmem>>, vector<1x4x32xf32>,
    %c4_69 = arith.constant 4 : index
    %c0_70 = arith.constant 0 : index
    %c32_71 = arith.constant 32 : index
    %161 = vector.load %arg16[%c4_69, %c0_70, %c32_71] : memref<8x8x64xf32, #tpu.memory_space<vmem>>, vector<1x4x32xf32>
    %162 = vector.shape_cast %161 : vector<1x4x32xf32> to vector<4x32xf32>
    %163 = vector.shape_cast %154 : vector<4x32xf32> to vector<1x4x32xf32>
    tpu.vector_store %arg16[%c4_69, %c0_70, %c32_71], %163 {strides = array<i32>} : memref<8x8x64xf32, #tpu.memory_space<vmem>>, vector<1x4x32xf32>,
    %c3_72 = arith.constant 3 : index
    %c4_73 = arith.constant 4 : index
    %c32_74 = arith.constant 32 : index
    %164 = vector.load %arg16[%c3_72, %c4_73, %c32_74] : memref<8x8x64xf32, #tpu.memory_space<vmem>>, vector<1x4x32xf32>
    %165 = vector.shape_cast %164 : vector<1x4x32xf32> to vector<4x32xf32>
    %166 = vector.shape_cast %154 : vector<4x32xf32> to vector<1x4x32xf32>
    tpu.vector_store %arg16[%c3_72, %c4_73, %c32_74], %166 {strides = array<i32>} : memref<8x8x64xf32, #tpu.memory_space<vmem>>, vector<1x4x32xf32>,
    %cst_75 = arith.constant dense<0.000000e+00> : vector<8x256xf32>
    %167 = tpu.matmul %152, %22, %cst_75 {dimension_numbers = #tpu.dot_dimension_numbers<[1], [0], [0], [1], [0, 0, 1, 1], [], []>} : vector<8x32xf32>, vector<32x256xf32>, vector<8x256xf32> -> vector<8x256xf32>
    %c4_76 = arith.constant 4 : index
    %c0_77 = arith.constant 0 : index
    %c0_78 = arith.constant 0 : index
    %168 = vector.load %arg15[%c4_76, %c0_77, %c0_78] : memref<8x8x128xf32, #tpu.memory_space<vmem>>, vector<1x8x128xf32>
    %169 = vector.shape_cast %168 : vector<1x8x128xf32> to vector<8x128xf32>
    %170 = vector.extract_strided_slice %167 {offsets = [0, 0], sizes = [8, 128], strides = [1, 1]} : vector<8x256xf32> to vector<8x128xf32>
    %171 = vector.extract_strided_slice %167 {offsets = [0, 128], sizes = [8, 128], strides = [1, 1]} : vector<8x256xf32> to vector<8x128xf32>
    %172 = arith.select %2, %170, %171 : vector<8x128xi1>, vector<8x128xf32>
    %173 = arith.addf %169, %172 : vector<8x128xf32>
    %cst_79 = arith.constant 0.000000e+00 : f32
    %174 = vector.broadcast %cst_79 : f32 to vector<8x128xf32>
    %175 = arith.subf %174, %173 : vector<8x128xf32>
    %176 = math.exp %175 : vector<8x128xf32>
    %cst_80 = arith.constant 1.000000e+00 : f32
    %177 = vector.broadcast %cst_80 : f32 to vector<8x128xf32>
    %178 = arith.addf %177, %176 : vector<8x128xf32>
    %179 = tpu.reciprocal %178 {approx = true} : vector<8x128xf32> -> vector<8x128xf32>
    %180 = math.tanh %173 : vector<8x128xf32>
    %181 = vector.extract_strided_slice %179 {offsets = [0, 0], sizes = [8, 32], strides = [1, 1]} : vector<8x128xf32> to vector<8x32xf32>
    %182 = vector.extract_strided_slice %179 {offsets = [0, 32], sizes = [8, 32], strides = [1, 1]} : vector<8x128xf32> to vector<8x32xf32>
    %183 = vector.extract_strided_slice %180 {offsets = [0, 64], sizes = [8, 32], strides = [1, 1]} : vector<8x128xf32> to vector<8x32xf32>
    %184 = vector.extract_strided_slice %179 {offsets = [0, 96], sizes = [8, 32], strides = [1, 1]} : vector<8x128xf32> to vector<8x32xf32>
    %185 = arith.mulf %182, %150 : vector<8x32xf32>
    %186 = arith.mulf %181, %183 : vector<8x32xf32>
    %187 = arith.addf %185, %186 : vector<8x32xf32>
    %188 = math.tanh %187 : vector<8x32xf32>
    %189 = arith.mulf %184, %188 : vector<8x32xf32>
    %190 = vector.extract_strided_slice %189 {offsets = [0, 0], sizes = [4, 32], strides = [1, 1]} : vector<8x32xf32> to vector<4x32xf32>
    %191 = vector.extract_strided_slice %189 {offsets = [4, 0], sizes = [4, 32], strides = [1, 1]} : vector<8x32xf32> to vector<4x32xf32>
    %c4_81 = arith.constant 4 : index
    %c0_82 = arith.constant 0 : index
    %c0_83 = arith.constant 0 : index
    %192 = vector.load %arg16[%c4_81, %c0_82, %c0_83] : memref<8x8x64xf32, #tpu.memory_space<vmem>>, vector<1x4x32xf32>
    %193 = vector.shape_cast %192 : vector<1x4x32xf32> to vector<4x32xf32>
    %194 = vector.shape_cast %190 : vector<4x32xf32> to vector<1x4x32xf32>
    tpu.vector_store %arg16[%c4_81, %c0_82, %c0_83], %194 {strides = array<i32>} : memref<8x8x64xf32, #tpu.memory_space<vmem>>, vector<1x4x32xf32>,
    %c3_84 = arith.constant 3 : index
    %c4_85 = arith.constant 4 : index
    %c0_86 = arith.constant 0 : index
    %195 = vector.load %arg16[%c3_84, %c4_85, %c0_86] : memref<8x8x64xf32, #tpu.memory_space<vmem>>, vector<1x4x32xf32>
    %196 = vector.shape_cast %195 : vector<1x4x32xf32> to vector<4x32xf32>
    %197 = vector.shape_cast %190 : vector<4x32xf32> to vector<1x4x32xf32>
    tpu.vector_store %arg16[%c3_84, %c4_85, %c0_86], %197 {strides = array<i32>} : memref<8x8x64xf32, #tpu.memory_space<vmem>>, vector<1x4x32xf32>,
    %c3_87 = arith.constant 3 : index
    %c0_88 = arith.constant 0 : index
    %c32_89 = arith.constant 32 : index
    %198 = vector.load %arg16[%c3_87, %c0_88, %c32_89] : memref<8x8x64xf32, #tpu.memory_space<vmem>>, vector<1x4x32xf32>
    %199 = vector.shape_cast %198 : vector<1x4x32xf32> to vector<4x32xf32>
    %200 = vector.shape_cast %191 : vector<4x32xf32> to vector<1x4x32xf32>
    tpu.vector_store %arg16[%c3_87, %c0_88, %c32_89], %200 {strides = array<i32>} : memref<8x8x64xf32, #tpu.memory_space<vmem>>, vector<1x4x32xf32>,
    %c4_90 = arith.constant 4 : index
    %c4_91 = arith.constant 4 : index
    %c32_92 = arith.constant 32 : index
    %201 = vector.load %arg16[%c4_90, %c4_91, %c32_92] : memref<8x8x64xf32, #tpu.memory_space<vmem>>, vector<1x4x32xf32>
    %202 = vector.shape_cast %201 : vector<1x4x32xf32> to vector<4x32xf32>
    %203 = vector.shape_cast %191 : vector<4x32xf32> to vector<1x4x32xf32>
    tpu.vector_store %arg16[%c4_90, %c4_91, %c32_92], %203 {strides = array<i32>} : memref<8x8x64xf32, #tpu.memory_space<vmem>>, vector<1x4x32xf32>,
    %cst_93 = arith.constant dense<0.000000e+00> : vector<8x256xf32>
    %204 = tpu.matmul %189, %22, %cst_93 {dimension_numbers = #tpu.dot_dimension_numbers<[1], [0], [0], [1], [0, 0, 1, 1], [], []>} : vector<8x32xf32>, vector<32x256xf32>, vector<8x256xf32> -> vector<8x256xf32>
    %c5_94 = arith.constant 5 : index
    %c0_95 = arith.constant 0 : index
    %c0_96 = arith.constant 0 : index
    %205 = vector.load %arg15[%c5_94, %c0_95, %c0_96] : memref<8x8x128xf32, #tpu.memory_space<vmem>>, vector<1x8x128xf32>
    %206 = vector.shape_cast %205 : vector<1x8x128xf32> to vector<8x128xf32>
    %207 = vector.extract_strided_slice %204 {offsets = [0, 0], sizes = [8, 128], strides = [1, 1]} : vector<8x256xf32> to vector<8x128xf32>
    %208 = vector.extract_strided_slice %204 {offsets = [0, 128], sizes = [8, 128], strides = [1, 1]} : vector<8x256xf32> to vector<8x128xf32>
    %209 = arith.select %2, %207, %208 : vector<8x128xi1>, vector<8x128xf32>
    %210 = arith.addf %206, %209 : vector<8x128xf32>
    %cst_97 = arith.constant 0.000000e+00 : f32
    %211 = vector.broadcast %cst_97 : f32 to vector<8x128xf32>
    %212 = arith.subf %211, %210 : vector<8x128xf32>
    %213 = math.exp %212 : vector<8x128xf32>
    %cst_98 = arith.constant 1.000000e+00 : f32
    %214 = vector.broadcast %cst_98 : f32 to vector<8x128xf32>
    %215 = arith.addf %214, %213 : vector<8x128xf32>
    %216 = tpu.reciprocal %215 {approx = true} : vector<8x128xf32> -> vector<8x128xf32>
    %217 = math.tanh %210 : vector<8x128xf32>
    %218 = vector.extract_strided_slice %216 {offsets = [0, 0], sizes = [8, 32], strides = [1, 1]} : vector<8x128xf32> to vector<8x32xf32>
    %219 = vector.extract_strided_slice %216 {offsets = [0, 32], sizes = [8, 32], strides = [1, 1]} : vector<8x128xf32> to vector<8x32xf32>
    %220 = vector.extract_strided_slice %217 {offsets = [0, 64], sizes = [8, 32], strides = [1, 1]} : vector<8x128xf32> to vector<8x32xf32>
    %221 = vector.extract_strided_slice %216 {offsets = [0, 96], sizes = [8, 32], strides = [1, 1]} : vector<8x128xf32> to vector<8x32xf32>
    %222 = arith.mulf %219, %187 : vector<8x32xf32>
    %223 = arith.mulf %218, %220 : vector<8x32xf32>
    %224 = arith.addf %222, %223 : vector<8x32xf32>
    %225 = math.tanh %224 : vector<8x32xf32>
    %226 = arith.mulf %221, %225 : vector<8x32xf32>
    %227 = vector.extract_strided_slice %226 {offsets = [0, 0], sizes = [4, 32], strides = [1, 1]} : vector<8x32xf32> to vector<4x32xf32>
    %228 = vector.extract_strided_slice %226 {offsets = [4, 0], sizes = [4, 32], strides = [1, 1]} : vector<8x32xf32> to vector<4x32xf32>
    %c5_99 = arith.constant 5 : index
    %c0_100 = arith.constant 0 : index
    %c0_101 = arith.constant 0 : index
    %229 = vector.load %arg16[%c5_99, %c0_100, %c0_101] : memref<8x8x64xf32, #tpu.memory_space<vmem>>, vector<1x4x32xf32>
    %230 = vector.shape_cast %229 : vector<1x4x32xf32> to vector<4x32xf32>
    %231 = vector.shape_cast %227 : vector<4x32xf32> to vector<1x4x32xf32>
    tpu.vector_store %arg16[%c5_99, %c0_100, %c0_101], %231 {strides = array<i32>} : memref<8x8x64xf32, #tpu.memory_space<vmem>>, vector<1x4x32xf32>,
    %c2_102 = arith.constant 2 : index
    %c4_103 = arith.constant 4 : index
    %c0_104 = arith.constant 0 : index
    %232 = vector.load %arg16[%c2_102, %c4_103, %c0_104] : memref<8x8x64xf32, #tpu.memory_space<vmem>>, vector<1x4x32xf32>
    %233 = vector.shape_cast %232 : vector<1x4x32xf32> to vector<4x32xf32>
    %234 = vector.shape_cast %227 : vector<4x32xf32> to vector<1x4x32xf32>
    tpu.vector_store %arg16[%c2_102, %c4_103, %c0_104], %234 {strides = array<i32>} : memref<8x8x64xf32, #tpu.memory_space<vmem>>, vector<1x4x32xf32>,
    %c2_105 = arith.constant 2 : index
    %c0_106 = arith.constant 0 : index
    %c32_107 = arith.constant 32 : index
    %235 = vector.load %arg16[%c2_105, %c0_106, %c32_107] : memref<8x8x64xf32, #tpu.memory_space<vmem>>, vector<1x4x32xf32>
    %236 = vector.shape_cast %235 : vector<1x4x32xf32> to vector<4x32xf32>
    %237 = vector.shape_cast %228 : vector<4x32xf32> to vector<1x4x32xf32>
    tpu.vector_store %arg16[%c2_105, %c0_106, %c32_107], %237 {strides = array<i32>} : memref<8x8x64xf32, #tpu.memory_space<vmem>>, vector<1x4x32xf32>,
    %c5_108 = arith.constant 5 : index
    %c4_109 = arith.constant 4 : index
    %c32_110 = arith.constant 32 : index
    %238 = vector.load %arg16[%c5_108, %c4_109, %c32_110] : memref<8x8x64xf32, #tpu.memory_space<vmem>>, vector<1x4x32xf32>
    %239 = vector.shape_cast %238 : vector<1x4x32xf32> to vector<4x32xf32>
    %240 = vector.shape_cast %228 : vector<4x32xf32> to vector<1x4x32xf32>
    tpu.vector_store %arg16[%c5_108, %c4_109, %c32_110], %240 {strides = array<i32>} : memref<8x8x64xf32, #tpu.memory_space<vmem>>, vector<1x4x32xf32>,
    %cst_111 = arith.constant dense<0.000000e+00> : vector<8x256xf32>
    %241 = tpu.matmul %226, %22, %cst_111 {dimension_numbers = #tpu.dot_dimension_numbers<[1], [0], [0], [1], [0, 0, 1, 1], [], []>} : vector<8x32xf32>, vector<32x256xf32>, vector<8x256xf32> -> vector<8x256xf32>
    %c6_112 = arith.constant 6 : index
    %c0_113 = arith.constant 0 : index
    %c0_114 = arith.constant 0 : index
    %242 = vector.load %arg15[%c6_112, %c0_113, %c0_114] : memref<8x8x128xf32, #tpu.memory_space<vmem>>, vector<1x8x128xf32>
    %243 = vector.shape_cast %242 : vector<1x8x128xf32> to vector<8x128xf32>
    %244 = vector.extract_strided_slice %241 {offsets = [0, 0], sizes = [8, 128], strides = [1, 1]} : vector<8x256xf32> to vector<8x128xf32>
    %245 = vector.extract_strided_slice %241 {offsets = [0, 128], sizes = [8, 128], strides = [1, 1]} : vector<8x256xf32> to vector<8x128xf32>
    %246 = arith.select %2, %244, %245 : vector<8x128xi1>, vector<8x128xf32>
    %247 = arith.addf %243, %246 : vector<8x128xf32>
    %cst_115 = arith.constant 0.000000e+00 : f32
    %248 = vector.broadcast %cst_115 : f32 to vector<8x128xf32>
    %249 = arith.subf %248, %247 : vector<8x128xf32>
    %250 = math.exp %249 : vector<8x128xf32>
    %cst_116 = arith.constant 1.000000e+00 : f32
    %251 = vector.broadcast %cst_116 : f32 to vector<8x128xf32>
    %252 = arith.addf %251, %250 : vector<8x128xf32>
    %253 = tpu.reciprocal %252 {approx = true} : vector<8x128xf32> -> vector<8x128xf32>
    %254 = math.tanh %247 : vector<8x128xf32>
    %255 = vector.extract_strided_slice %253 {offsets = [0, 0], sizes = [8, 32], strides = [1, 1]} : vector<8x128xf32> to vector<8x32xf32>
    %256 = vector.extract_strided_slice %253 {offsets = [0, 32], sizes = [8, 32], strides = [1, 1]} : vector<8x128xf32> to vector<8x32xf32>
    %257 = vector.extract_strided_slice %254 {offsets = [0, 64], sizes = [8, 32], strides = [1, 1]} : vector<8x128xf32> to vector<8x32xf32>
    %258 = vector.extract_strided_slice %253 {offsets = [0, 96], sizes = [8, 32], strides = [1, 1]} : vector<8x128xf32> to vector<8x32xf32>
    %259 = arith.mulf %256, %224 : vector<8x32xf32>
    %260 = arith.mulf %255, %257 : vector<8x32xf32>
    %261 = arith.addf %259, %260 : vector<8x32xf32>
    %262 = math.tanh %261 : vector<8x32xf32>
    %263 = arith.mulf %258, %262 : vector<8x32xf32>
    %264 = vector.extract_strided_slice %263 {offsets = [0, 0], sizes = [4, 32], strides = [1, 1]} : vector<8x32xf32> to vector<4x32xf32>
    %265 = vector.extract_strided_slice %263 {offsets = [4, 0], sizes = [4, 32], strides = [1, 1]} : vector<8x32xf32> to vector<4x32xf32>
    %c6_117 = arith.constant 6 : index
    %c0_118 = arith.constant 0 : index
    %c0_119 = arith.constant 0 : index
    %266 = vector.load %arg16[%c6_117, %c0_118, %c0_119] : memref<8x8x64xf32, #tpu.memory_space<vmem>>, vector<1x4x32xf32>
    %267 = vector.shape_cast %266 : vector<1x4x32xf32> to vector<4x32xf32>
    %268 = vector.shape_cast %264 : vector<4x32xf32> to vector<1x4x32xf32>
    tpu.vector_store %arg16[%c6_117, %c0_118, %c0_119], %268 {strides = array<i32>} : memref<8x8x64xf32, #tpu.memory_space<vmem>>, vector<1x4x32xf32>,
    %c1_120 = arith.constant 1 : index
    %c4_121 = arith.constant 4 : index
    %c0_122 = arith.constant 0 : index
    %269 = vector.load %arg16[%c1_120, %c4_121, %c0_122] : memref<8x8x64xf32, #tpu.memory_space<vmem>>, vector<1x4x32xf32>
    %270 = vector.shape_cast %269 : vector<1x4x32xf32> to vector<4x32xf32>
    %271 = vector.shape_cast %264 : vector<4x32xf32> to vector<1x4x32xf32>
    tpu.vector_store %arg16[%c1_120, %c4_121, %c0_122], %271 {strides = array<i32>} : memref<8x8x64xf32, #tpu.memory_space<vmem>>, vector<1x4x32xf32>,
    %c1_123 = arith.constant 1 : index
    %c0_124 = arith.constant 0 : index
    %c32_125 = arith.constant 32 : index
    %272 = vector.load %arg16[%c1_123, %c0_124, %c32_125] : memref<8x8x64xf32, #tpu.memory_space<vmem>>, vector<1x4x32xf32>
    %273 = vector.shape_cast %272 : vector<1x4x32xf32> to vector<4x32xf32>
    %274 = vector.shape_cast %265 : vector<4x32xf32> to vector<1x4x32xf32>
    tpu.vector_store %arg16[%c1_123, %c0_124, %c32_125], %274 {strides = array<i32>} : memref<8x8x64xf32, #tpu.memory_space<vmem>>, vector<1x4x32xf32>,
    %c6_126 = arith.constant 6 : index
    %c4_127 = arith.constant 4 : index
    %c32_128 = arith.constant 32 : index
    %275 = vector.load %arg16[%c6_126, %c4_127, %c32_128] : memref<8x8x64xf32, #tpu.memory_space<vmem>>, vector<1x4x32xf32>
    %276 = vector.shape_cast %275 : vector<1x4x32xf32> to vector<4x32xf32>
    %277 = vector.shape_cast %265 : vector<4x32xf32> to vector<1x4x32xf32>
    tpu.vector_store %arg16[%c6_126, %c4_127, %c32_128], %277 {strides = array<i32>} : memref<8x8x64xf32, #tpu.memory_space<vmem>>, vector<1x4x32xf32>,
    %cst_129 = arith.constant dense<0.000000e+00> : vector<8x256xf32>
    %278 = tpu.matmul %263, %22, %cst_129 {dimension_numbers = #tpu.dot_dimension_numbers<[1], [0], [0], [1], [0, 0, 1, 1], [], []>} : vector<8x32xf32>, vector<32x256xf32>, vector<8x256xf32> -> vector<8x256xf32>
    %c7_130 = arith.constant 7 : index
    %c0_131 = arith.constant 0 : index
    %c0_132 = arith.constant 0 : index
    %279 = vector.load %arg15[%c7_130, %c0_131, %c0_132] : memref<8x8x128xf32, #tpu.memory_space<vmem>>, vector<1x8x128xf32>
    %280 = vector.shape_cast %279 : vector<1x8x128xf32> to vector<8x128xf32>
    %281 = vector.extract_strided_slice %278 {offsets = [0, 0], sizes = [8, 128], strides = [1, 1]} : vector<8x256xf32> to vector<8x128xf32>
    %282 = vector.extract_strided_slice %278 {offsets = [0, 128], sizes = [8, 128], strides = [1, 1]} : vector<8x256xf32> to vector<8x128xf32>
    %283 = arith.select %2, %281, %282 : vector<8x128xi1>, vector<8x128xf32>
    %284 = arith.addf %280, %283 : vector<8x128xf32>
    %cst_133 = arith.constant 0.000000e+00 : f32
    %285 = vector.broadcast %cst_133 : f32 to vector<8x128xf32>
    %286 = arith.subf %285, %284 : vector<8x128xf32>
    %287 = math.exp %286 : vector<8x128xf32>
    %cst_134 = arith.constant 1.000000e+00 : f32
    %288 = vector.broadcast %cst_134 : f32 to vector<8x128xf32>
    %289 = arith.addf %288, %287 : vector<8x128xf32>
    %290 = tpu.reciprocal %289 {approx = true} : vector<8x128xf32> -> vector<8x128xf32>
    %291 = math.tanh %284 : vector<8x128xf32>
    %292 = vector.extract_strided_slice %290 {offsets = [0, 0], sizes = [8, 32], strides = [1, 1]} : vector<8x128xf32> to vector<8x32xf32>
    %293 = vector.extract_strided_slice %290 {offsets = [0, 32], sizes = [8, 32], strides = [1, 1]} : vector<8x128xf32> to vector<8x32xf32>
    %294 = vector.extract_strided_slice %291 {offsets = [0, 64], sizes = [8, 32], strides = [1, 1]} : vector<8x128xf32> to vector<8x32xf32>
    %295 = vector.extract_strided_slice %290 {offsets = [0, 96], sizes = [8, 32], strides = [1, 1]} : vector<8x128xf32> to vector<8x32xf32>
    %296 = arith.mulf %293, %261 : vector<8x32xf32>
    %297 = arith.mulf %292, %294 : vector<8x32xf32>
    %298 = arith.addf %296, %297 : vector<8x32xf32>
    %299 = math.tanh %298 : vector<8x32xf32>
    %300 = arith.mulf %295, %299 : vector<8x32xf32>
    %301 = vector.extract_strided_slice %300 {offsets = [0, 0], sizes = [4, 32], strides = [1, 1]} : vector<8x32xf32> to vector<4x32xf32>
    %302 = vector.extract_strided_slice %300 {offsets = [4, 0], sizes = [4, 32], strides = [1, 1]} : vector<8x32xf32> to vector<4x32xf32>
    %c7_135 = arith.constant 7 : index
    %c0_136 = arith.constant 0 : index
    %c0_137 = arith.constant 0 : index
    %303 = vector.load %arg16[%c7_135, %c0_136, %c0_137] : memref<8x8x64xf32, #tpu.memory_space<vmem>>, vector<1x4x32xf32>
    %304 = vector.shape_cast %303 : vector<1x4x32xf32> to vector<4x32xf32>
    %305 = vector.shape_cast %301 : vector<4x32xf32> to vector<1x4x32xf32>
    tpu.vector_store %arg16[%c7_135, %c0_136, %c0_137], %305 {strides = array<i32>} : memref<8x8x64xf32, #tpu.memory_space<vmem>>, vector<1x4x32xf32>,
    %c0_138 = arith.constant 0 : index
    %c4_139 = arith.constant 4 : index
    %c0_140 = arith.constant 0 : index
    %306 = vector.load %arg16[%c0_138, %c4_139, %c0_140] : memref<8x8x64xf32, #tpu.memory_space<vmem>>, vector<1x4x32xf32>
    %307 = vector.shape_cast %306 : vector<1x4x32xf32> to vector<4x32xf32>
    %308 = vector.shape_cast %301 : vector<4x32xf32> to vector<1x4x32xf32>
    tpu.vector_store %arg16[%c0_138, %c4_139, %c0_140], %308 {strides = array<i32>} : memref<8x8x64xf32, #tpu.memory_space<vmem>>, vector<1x4x32xf32>,
    %c0_141 = arith.constant 0 : index
    %c0_142 = arith.constant 0 : index
    %c32_143 = arith.constant 32 : index
    %309 = vector.load %arg16[%c0_141, %c0_142, %c32_143] : memref<8x8x64xf32, #tpu.memory_space<vmem>>, vector<1x4x32xf32>
    %310 = vector.shape_cast %309 : vector<1x4x32xf32> to vector<4x32xf32>
    %311 = vector.shape_cast %302 : vector<4x32xf32> to vector<1x4x32xf32>
    tpu.vector_store %arg16[%c0_141, %c0_142, %c32_143], %311 {strides = array<i32>} : memref<8x8x64xf32, #tpu.memory_space<vmem>>, vector<1x4x32xf32>,
    %c7_144 = arith.constant 7 : index
    %c4_145 = arith.constant 4 : index
    %c32_146 = arith.constant 32 : index
    %312 = vector.load %arg16[%c7_144, %c4_145, %c32_146] : memref<8x8x64xf32, #tpu.memory_space<vmem>>, vector<1x4x32xf32>
    %313 = vector.shape_cast %312 : vector<1x4x32xf32> to vector<4x32xf32>
    %314 = vector.shape_cast %302 : vector<4x32xf32> to vector<1x4x32xf32>
    tpu.vector_store %arg16[%c7_144, %c4_145, %c32_146], %314 {strides = array<i32>} : memref<8x8x64xf32, #tpu.memory_space<vmem>>, vector<1x4x32xf32>,
    %315 = vector.extract_strided_slice %300 {offsets = [0, 0], sizes = [4, 32], strides = [1, 1]} : vector<8x32xf32> to vector<4x32xf32>
    %c0_147 = arith.constant 0 : index
    %c0_148 = arith.constant 0 : index
    %c0_149 = arith.constant 0 : index
    %316 = vector.load %arg13[%c0_147, %c0_148, %c0_149] : memref<4x4x32xf32, #tpu.memory_space<vmem>>, vector<1x4x32xf32>
    %317 = vector.shape_cast %316 : vector<1x4x32xf32> to vector<4x32xf32>
    %318 = vector.shape_cast %315 : vector<4x32xf32> to vector<1x4x32xf32>
    tpu.vector_store %arg13[%c0_147, %c0_148, %c0_149], %318 {strides = array<i32>} : memref<4x4x32xf32, #tpu.memory_space<vmem>>, vector<1x4x32xf32>,
    %319 = vector.extract_strided_slice %300 {offsets = [4, 0], sizes = [4, 32], strides = [1, 1]} : vector<8x32xf32> to vector<4x32xf32>
    %c1_150 = arith.constant 1 : index
    %c0_151 = arith.constant 0 : index
    %c0_152 = arith.constant 0 : index
    %320 = vector.load %arg13[%c1_150, %c0_151, %c0_152] : memref<4x4x32xf32, #tpu.memory_space<vmem>>, vector<1x4x32xf32>
    %321 = vector.shape_cast %320 : vector<1x4x32xf32> to vector<4x32xf32>
    %322 = vector.shape_cast %319 : vector<4x32xf32> to vector<1x4x32xf32>
    tpu.vector_store %arg13[%c1_150, %c0_151, %c0_152], %322 {strides = array<i32>} : memref<4x4x32xf32, #tpu.memory_space<vmem>>, vector<1x4x32xf32>,
    %323 = vector.extract_strided_slice %298 {offsets = [0, 0], sizes = [4, 32], strides = [1, 1]} : vector<8x32xf32> to vector<4x32xf32>
    %c0_153 = arith.constant 0 : index
    %c0_154 = arith.constant 0 : index
    %c0_155 = arith.constant 0 : index
    %324 = vector.load %arg14[%c0_153, %c0_154, %c0_155] : memref<4x4x32xf32, #tpu.memory_space<vmem>>, vector<1x4x32xf32>
    %325 = vector.shape_cast %324 : vector<1x4x32xf32> to vector<4x32xf32>
    %326 = vector.shape_cast %323 : vector<4x32xf32> to vector<1x4x32xf32>
    tpu.vector_store %arg14[%c0_153, %c0_154, %c0_155], %326 {strides = array<i32>} : memref<4x4x32xf32, #tpu.memory_space<vmem>>, vector<1x4x32xf32>,
    %327 = vector.extract_strided_slice %298 {offsets = [4, 0], sizes = [4, 32], strides = [1, 1]} : vector<8x32xf32> to vector<4x32xf32>
    %c1_156 = arith.constant 1 : index
    %c0_157 = arith.constant 0 : index
    %c0_158 = arith.constant 0 : index
    %328 = vector.load %arg14[%c1_156, %c0_157, %c0_158] : memref<4x4x32xf32, #tpu.memory_space<vmem>>, vector<1x4x32xf32>
    %329 = vector.shape_cast %328 : vector<1x4x32xf32> to vector<4x32xf32>
    %330 = vector.shape_cast %327 : vector<4x32xf32> to vector<1x4x32xf32>
    tpu.vector_store %arg14[%c1_156, %c0_157, %c0_158], %330 {strides = array<i32>} : memref<4x4x32xf32, #tpu.memory_space<vmem>>, vector<1x4x32xf32>,
    %c0_159 = arith.constant 0 : index
    %c0_160 = arith.constant 0 : index
    %c0_161 = arith.constant 0 : index
    %331 = vector.load %arg16[%c0_159, %c0_160, %c0_161] : memref<8x8x64xf32, #tpu.memory_space<vmem>>, vector<8x8x64xf32>
    %332 = vector.shape_cast %331 : vector<8x8x64xf32> to vector<64x64xf32>
    %c0_162 = arith.constant 0 : index
    %c0_163 = arith.constant 0 : index
    %333 = vector.load %arg4[%c0_162, %c0_163] : memref<64x256xf32, #tpu.memory_space<vmem>>, vector<64x256xf32>
    %cst_164 = arith.constant dense<0.000000e+00> : vector<64x256xf32>
    %334 = tpu.matmul %332, %333, %cst_164 {dimension_numbers = #tpu.dot_dimension_numbers<[1], [0], [0], [1], [0, 0, 1, 1], [], []>} : vector<64x64xf32>, vector<64x256xf32>, vector<64x256xf32> -> vector<64x256xf32>
    %c0_165 = arith.constant 0 : index
    %c0_166 = arith.constant 0 : index
    %335 = vector.load %arg6[%c0_165, %c0_166] : memref<1x256xf32, #tpu.memory_space<vmem>>, vector<1x256xf32>
    %336 = vector.broadcast %335 : vector<1x256xf32> to vector<64x256xf32>
    %337 = arith.addf %334, %336 : vector<64x256xf32>
    %338 = vector.shape_cast %337 : vector<64x256xf32> to vector<8x8x256xf32>
    %339 = vector.extract_strided_slice %338 {offsets = [0, 0, 0], sizes = [8, 8, 128], strides = [1, 1, 1]} : vector<8x8x256xf32> to vector<8x8x128xf32>
    %340 = vector.extract_strided_slice %338 {offsets = [0, 0, 128], sizes = [8, 8, 128], strides = [1, 1, 1]} : vector<8x8x256xf32> to vector<8x8x128xf32>
    %341 = arith.select %5, %339, %340 : vector<8x8x128xi1>, vector<8x8x128xf32>
    %c0_167 = arith.constant 0 : index
    %c0_168 = arith.constant 0 : index
    %c0_169 = arith.constant 0 : index
    %342 = vector.load %arg15[%c0_167, %c0_168, %c0_169] : memref<8x8x128xf32, #tpu.memory_space<vmem>>, vector<8x8x128xf32>
    tpu.vector_store %arg15[%c0_167, %c0_168, %c0_169], %341 {strides = array<i32>} : memref<8x8x128xf32, #tpu.memory_space<vmem>>, vector<8x8x128xf32>,
    %c0_170 = arith.constant 0 : index
    %c0_171 = arith.constant 0 : index
    %343 = vector.load %arg5[%c0_170, %c0_171] : memref<32x256xf32, #tpu.memory_space<vmem>>, vector<32x256xf32>
    %cst_172 = arith.constant 0.000000e+00 : f32
    %344 = vector.broadcast %cst_172 : f32 to vector<8x32xf32>
    %c0_173 = arith.constant 0 : index
    %c0_174 = arith.constant 0 : index
    %c0_175 = arith.constant 0 : index
    %345 = vector.load %arg15[%c0_173, %c0_174, %c0_175] : memref<8x8x128xf32, #tpu.memory_space<vmem>>, vector<1x8x128xf32>
    %346 = vector.shape_cast %345 : vector<1x8x128xf32> to vector<8x128xf32>
    %cst_176 = arith.constant 0.000000e+00 : f32
    %347 = vector.broadcast %cst_176 : f32 to vector<8x128xf32>
    %348 = arith.subf %347, %346 : vector<8x128xf32>
    %349 = math.exp %348 : vector<8x128xf32>
    %cst_177 = arith.constant 1.000000e+00 : f32
    %350 = vector.broadcast %cst_177 : f32 to vector<8x128xf32>
    %351 = arith.addf %350, %349 : vector<8x128xf32>
    %352 = tpu.reciprocal %351 {approx = true} : vector<8x128xf32> -> vector<8x128xf32>
    %353 = math.tanh %346 : vector<8x128xf32>
    %354 = vector.extract_strided_slice %352 {offsets = [0, 0], sizes = [8, 32], strides = [1, 1]} : vector<8x128xf32> to vector<8x32xf32>
    %355 = vector.extract_strided_slice %352 {offsets = [0, 32], sizes = [8, 32], strides = [1, 1]} : vector<8x128xf32> to vector<8x32xf32>
    %356 = vector.extract_strided_slice %353 {offsets = [0, 64], sizes = [8, 32], strides = [1, 1]} : vector<8x128xf32> to vector<8x32xf32>
    %357 = vector.extract_strided_slice %352 {offsets = [0, 96], sizes = [8, 32], strides = [1, 1]} : vector<8x128xf32> to vector<8x32xf32>
    %358 = arith.mulf %355, %344 : vector<8x32xf32>
    %359 = arith.mulf %354, %356 : vector<8x32xf32>
    %360 = arith.addf %358, %359 : vector<8x32xf32>
    %361 = math.tanh %360 : vector<8x32xf32>
    %362 = arith.mulf %357, %361 : vector<8x32xf32>
    %363 = vector.extract_strided_slice %362 {offsets = [0, 0], sizes = [4, 32], strides = [1, 1]} : vector<8x32xf32> to vector<4x32xf32>
    %c0_178 = arith.constant 0 : index
    %c0_179 = arith.constant 0 : index
    %c0_180 = arith.constant 0 : index
    %364 = vector.load %arg17[%c0_178, %c0_179, %c0_180] : memref<8x4x64xf32, #tpu.memory_space<vmem>>, vector<1x4x32xf32>
    %365 = vector.shape_cast %364 : vector<1x4x32xf32> to vector<4x32xf32>
    %366 = vector.shape_cast %363 : vector<4x32xf32> to vector<1x4x32xf32>
    tpu.vector_store %arg17[%c0_178, %c0_179, %c0_180], %366 {strides = array<i32>} : memref<8x4x64xf32, #tpu.memory_space<vmem>>, vector<1x4x32xf32>,
    %367 = vector.extract_strided_slice %362 {offsets = [4, 0], sizes = [4, 32], strides = [1, 1]} : vector<8x32xf32> to vector<4x32xf32>
    %c7_181 = arith.constant 7 : index
    %c0_182 = arith.constant 0 : index
    %c32_183 = arith.constant 32 : index
    %368 = vector.load %arg17[%c7_181, %c0_182, %c32_183] : memref<8x4x64xf32, #tpu.memory_space<vmem>>, vector<1x4x32xf32>
    %369 = vector.shape_cast %368 : vector<1x4x32xf32> to vector<4x32xf32>
    %370 = vector.shape_cast %367 : vector<4x32xf32> to vector<1x4x32xf32>
    tpu.vector_store %arg17[%c7_181, %c0_182, %c32_183], %370 {strides = array<i32>} : memref<8x4x64xf32, #tpu.memory_space<vmem>>, vector<1x4x32xf32>,
    %cst_184 = arith.constant dense<0.000000e+00> : vector<8x256xf32>
    %371 = tpu.matmul %362, %343, %cst_184 {dimension_numbers = #tpu.dot_dimension_numbers<[1], [0], [0], [1], [0, 0, 1, 1], [], []>} : vector<8x32xf32>, vector<32x256xf32>, vector<8x256xf32> -> vector<8x256xf32>
    %c1_185 = arith.constant 1 : index
    %c0_186 = arith.constant 0 : index
    %c0_187 = arith.constant 0 : index
    %372 = vector.load %arg15[%c1_185, %c0_186, %c0_187] : memref<8x8x128xf32, #tpu.memory_space<vmem>>, vector<1x8x128xf32>
    %373 = vector.shape_cast %372 : vector<1x8x128xf32> to vector<8x128xf32>
    %374 = vector.extract_strided_slice %371 {offsets = [0, 0], sizes = [8, 128], strides = [1, 1]} : vector<8x256xf32> to vector<8x128xf32>
    %375 = vector.extract_strided_slice %371 {offsets = [0, 128], sizes = [8, 128], strides = [1, 1]} : vector<8x256xf32> to vector<8x128xf32>
    %376 = arith.select %2, %374, %375 : vector<8x128xi1>, vector<8x128xf32>
    %377 = arith.addf %373, %376 : vector<8x128xf32>
    %cst_188 = arith.constant 0.000000e+00 : f32
    %378 = vector.broadcast %cst_188 : f32 to vector<8x128xf32>
    %379 = arith.subf %378, %377 : vector<8x128xf32>
    %380 = math.exp %379 : vector<8x128xf32>
    %cst_189 = arith.constant 1.000000e+00 : f32
    %381 = vector.broadcast %cst_189 : f32 to vector<8x128xf32>
    %382 = arith.addf %381, %380 : vector<8x128xf32>
    %383 = tpu.reciprocal %382 {approx = true} : vector<8x128xf32> -> vector<8x128xf32>
    %384 = math.tanh %377 : vector<8x128xf32>
    %385 = vector.extract_strided_slice %383 {offsets = [0, 0], sizes = [8, 32], strides = [1, 1]} : vector<8x128xf32> to vector<8x32xf32>
    %386 = vector.extract_strided_slice %383 {offsets = [0, 32], sizes = [8, 32], strides = [1, 1]} : vector<8x128xf32> to vector<8x32xf32>
    %387 = vector.extract_strided_slice %384 {offsets = [0, 64], sizes = [8, 32], strides = [1, 1]} : vector<8x128xf32> to vector<8x32xf32>
    %388 = vector.extract_strided_slice %383 {offsets = [0, 96], sizes = [8, 32], strides = [1, 1]} : vector<8x128xf32> to vector<8x32xf32>
    %389 = arith.mulf %386, %360 : vector<8x32xf32>
    %390 = arith.mulf %385, %387 : vector<8x32xf32>
    %391 = arith.addf %389, %390 : vector<8x32xf32>
    %392 = math.tanh %391 : vector<8x32xf32>
    %393 = arith.mulf %388, %392 : vector<8x32xf32>
    %394 = vector.extract_strided_slice %393 {offsets = [0, 0], sizes = [4, 32], strides = [1, 1]} : vector<8x32xf32> to vector<4x32xf32>
    %c1_190 = arith.constant 1 : index
    %c0_191 = arith.constant 0 : index
    %c0_192 = arith.constant 0 : index
    %395 = vector.load %arg17[%c1_190, %c0_191, %c0_192] : memref<8x4x64xf32, #tpu.memory_space<vmem>>, vector<1x4x32xf32>
    %396 = vector.shape_cast %395 : vector<1x4x32xf32> to vector<4x32xf32>
    %397 = vector.shape_cast %394 : vector<4x32xf32> to vector<1x4x32xf32>
    tpu.vector_store %arg17[%c1_190, %c0_191, %c0_192], %397 {strides = array<i32>} : memref<8x4x64xf32, #tpu.memory_space<vmem>>, vector<1x4x32xf32>,
    %398 = vector.extract_strided_slice %393 {offsets = [4, 0], sizes = [4, 32], strides = [1, 1]} : vector<8x32xf32> to vector<4x32xf32>
    %c6_193 = arith.constant 6 : index
    %c0_194 = arith.constant 0 : index
    %c32_195 = arith.constant 32 : index
    %399 = vector.load %arg17[%c6_193, %c0_194, %c32_195] : memref<8x4x64xf32, #tpu.memory_space<vmem>>, vector<1x4x32xf32>
    %400 = vector.shape_cast %399 : vector<1x4x32xf32> to vector<4x32xf32>
    %401 = vector.shape_cast %398 : vector<4x32xf32> to vector<1x4x32xf32>
    tpu.vector_store %arg17[%c6_193, %c0_194, %c32_195], %401 {strides = array<i32>} : memref<8x4x64xf32, #tpu.memory_space<vmem>>, vector<1x4x32xf32>,
    %cst_196 = arith.constant dense<0.000000e+00> : vector<8x256xf32>
    %402 = tpu.matmul %393, %343, %cst_196 {dimension_numbers = #tpu.dot_dimension_numbers<[1], [0], [0], [1], [0, 0, 1, 1], [], []>} : vector<8x32xf32>, vector<32x256xf32>, vector<8x256xf32> -> vector<8x256xf32>
    %c2_197 = arith.constant 2 : index
    %c0_198 = arith.constant 0 : index
    %c0_199 = arith.constant 0 : index
    %403 = vector.load %arg15[%c2_197, %c0_198, %c0_199] : memref<8x8x128xf32, #tpu.memory_space<vmem>>, vector<1x8x128xf32>
    %404 = vector.shape_cast %403 : vector<1x8x128xf32> to vector<8x128xf32>
    %405 = vector.extract_strided_slice %402 {offsets = [0, 0], sizes = [8, 128], strides = [1, 1]} : vector<8x256xf32> to vector<8x128xf32>
    %406 = vector.extract_strided_slice %402 {offsets = [0, 128], sizes = [8, 128], strides = [1, 1]} : vector<8x256xf32> to vector<8x128xf32>
    %407 = arith.select %2, %405, %406 : vector<8x128xi1>, vector<8x128xf32>
    %408 = arith.addf %404, %407 : vector<8x128xf32>
    %cst_200 = arith.constant 0.000000e+00 : f32
    %409 = vector.broadcast %cst_200 : f32 to vector<8x128xf32>
    %410 = arith.subf %409, %408 : vector<8x128xf32>
    %411 = math.exp %410 : vector<8x128xf32>
    %cst_201 = arith.constant 1.000000e+00 : f32
    %412 = vector.broadcast %cst_201 : f32 to vector<8x128xf32>
    %413 = arith.addf %412, %411 : vector<8x128xf32>
    %414 = tpu.reciprocal %413 {approx = true} : vector<8x128xf32> -> vector<8x128xf32>
    %415 = math.tanh %408 : vector<8x128xf32>
    %416 = vector.extract_strided_slice %414 {offsets = [0, 0], sizes = [8, 32], strides = [1, 1]} : vector<8x128xf32> to vector<8x32xf32>
    %417 = vector.extract_strided_slice %414 {offsets = [0, 32], sizes = [8, 32], strides = [1, 1]} : vector<8x128xf32> to vector<8x32xf32>
    %418 = vector.extract_strided_slice %415 {offsets = [0, 64], sizes = [8, 32], strides = [1, 1]} : vector<8x128xf32> to vector<8x32xf32>
    %419 = vector.extract_strided_slice %414 {offsets = [0, 96], sizes = [8, 32], strides = [1, 1]} : vector<8x128xf32> to vector<8x32xf32>
    %420 = arith.mulf %417, %391 : vector<8x32xf32>
    %421 = arith.mulf %416, %418 : vector<8x32xf32>
    %422 = arith.addf %420, %421 : vector<8x32xf32>
    %423 = math.tanh %422 : vector<8x32xf32>
    %424 = arith.mulf %419, %423 : vector<8x32xf32>
    %425 = vector.extract_strided_slice %424 {offsets = [0, 0], sizes = [4, 32], strides = [1, 1]} : vector<8x32xf32> to vector<4x32xf32>
    %c2_202 = arith.constant 2 : index
    %c0_203 = arith.constant 0 : index
    %c0_204 = arith.constant 0 : index
    %426 = vector.load %arg17[%c2_202, %c0_203, %c0_204] : memref<8x4x64xf32, #tpu.memory_space<vmem>>, vector<1x4x32xf32>
    %427 = vector.shape_cast %426 : vector<1x4x32xf32> to vector<4x32xf32>
    %428 = vector.shape_cast %425 : vector<4x32xf32> to vector<1x4x32xf32>
    tpu.vector_store %arg17[%c2_202, %c0_203, %c0_204], %428 {strides = array<i32>} : memref<8x4x64xf32, #tpu.memory_space<vmem>>, vector<1x4x32xf32>,
    %429 = vector.extract_strided_slice %424 {offsets = [4, 0], sizes = [4, 32], strides = [1, 1]} : vector<8x32xf32> to vector<4x32xf32>
    %c5_205 = arith.constant 5 : index
    %c0_206 = arith.constant 0 : index
    %c32_207 = arith.constant 32 : index
    %430 = vector.load %arg17[%c5_205, %c0_206, %c32_207] : memref<8x4x64xf32, #tpu.memory_space<vmem>>, vector<1x4x32xf32>
    %431 = vector.shape_cast %430 : vector<1x4x32xf32> to vector<4x32xf32>
    %432 = vector.shape_cast %429 : vector<4x32xf32> to vector<1x4x32xf32>
    tpu.vector_store %arg17[%c5_205, %c0_206, %c32_207], %432 {strides = array<i32>} : memref<8x4x64xf32, #tpu.memory_space<vmem>>, vector<1x4x32xf32>,
    %cst_208 = arith.constant dense<0.000000e+00> : vector<8x256xf32>
    %433 = tpu.matmul %424, %343, %cst_208 {dimension_numbers = #tpu.dot_dimension_numbers<[1], [0], [0], [1], [0, 0, 1, 1], [], []>} : vector<8x32xf32>, vector<32x256xf32>, vector<8x256xf32> -> vector<8x256xf32>
    %c3_209 = arith.constant 3 : index
    %c0_210 = arith.constant 0 : index
    %c0_211 = arith.constant 0 : index
    %434 = vector.load %arg15[%c3_209, %c0_210, %c0_211] : memref<8x8x128xf32, #tpu.memory_space<vmem>>, vector<1x8x128xf32>
    %435 = vector.shape_cast %434 : vector<1x8x128xf32> to vector<8x128xf32>
    %436 = vector.extract_strided_slice %433 {offsets = [0, 0], sizes = [8, 128], strides = [1, 1]} : vector<8x256xf32> to vector<8x128xf32>
    %437 = vector.extract_strided_slice %433 {offsets = [0, 128], sizes = [8, 128], strides = [1, 1]} : vector<8x256xf32> to vector<8x128xf32>
    %438 = arith.select %2, %436, %437 : vector<8x128xi1>, vector<8x128xf32>
    %439 = arith.addf %435, %438 : vector<8x128xf32>
    %cst_212 = arith.constant 0.000000e+00 : f32
    %440 = vector.broadcast %cst_212 : f32 to vector<8x128xf32>
    %441 = arith.subf %440, %439 : vector<8x128xf32>
    %442 = math.exp %441 : vector<8x128xf32>
    %cst_213 = arith.constant 1.000000e+00 : f32
    %443 = vector.broadcast %cst_213 : f32 to vector<8x128xf32>
    %444 = arith.addf %443, %442 : vector<8x128xf32>
    %445 = tpu.reciprocal %444 {approx = true} : vector<8x128xf32> -> vector<8x128xf32>
    %446 = math.tanh %439 : vector<8x128xf32>
    %447 = vector.extract_strided_slice %445 {offsets = [0, 0], sizes = [8, 32], strides = [1, 1]} : vector<8x128xf32> to vector<8x32xf32>
    %448 = vector.extract_strided_slice %445 {offsets = [0, 32], sizes = [8, 32], strides = [1, 1]} : vector<8x128xf32> to vector<8x32xf32>
    %449 = vector.extract_strided_slice %446 {offsets = [0, 64], sizes = [8, 32], strides = [1, 1]} : vector<8x128xf32> to vector<8x32xf32>
    %450 = vector.extract_strided_slice %445 {offsets = [0, 96], sizes = [8, 32], strides = [1, 1]} : vector<8x128xf32> to vector<8x32xf32>
    %451 = arith.mulf %448, %422 : vector<8x32xf32>
    %452 = arith.mulf %447, %449 : vector<8x32xf32>
    %453 = arith.addf %451, %452 : vector<8x32xf32>
    %454 = math.tanh %453 : vector<8x32xf32>
    %455 = arith.mulf %450, %454 : vector<8x32xf32>
    %456 = vector.extract_strided_slice %455 {offsets = [0, 0], sizes = [4, 32], strides = [1, 1]} : vector<8x32xf32> to vector<4x32xf32>
    %c3_214 = arith.constant 3 : index
    %c0_215 = arith.constant 0 : index
    %c0_216 = arith.constant 0 : index
    %457 = vector.load %arg17[%c3_214, %c0_215, %c0_216] : memref<8x4x64xf32, #tpu.memory_space<vmem>>, vector<1x4x32xf32>
    %458 = vector.shape_cast %457 : vector<1x4x32xf32> to vector<4x32xf32>
    %459 = vector.shape_cast %456 : vector<4x32xf32> to vector<1x4x32xf32>
    tpu.vector_store %arg17[%c3_214, %c0_215, %c0_216], %459 {strides = array<i32>} : memref<8x4x64xf32, #tpu.memory_space<vmem>>, vector<1x4x32xf32>,
    %460 = vector.extract_strided_slice %455 {offsets = [4, 0], sizes = [4, 32], strides = [1, 1]} : vector<8x32xf32> to vector<4x32xf32>
    %c4_217 = arith.constant 4 : index
    %c0_218 = arith.constant 0 : index
    %c32_219 = arith.constant 32 : index
    %461 = vector.load %arg17[%c4_217, %c0_218, %c32_219] : memref<8x4x64xf32, #tpu.memory_space<vmem>>, vector<1x4x32xf32>
    %462 = vector.shape_cast %461 : vector<1x4x32xf32> to vector<4x32xf32>
    %463 = vector.shape_cast %460 : vector<4x32xf32> to vector<1x4x32xf32>
    tpu.vector_store %arg17[%c4_217, %c0_218, %c32_219], %463 {strides = array<i32>} : memref<8x4x64xf32, #tpu.memory_space<vmem>>, vector<1x4x32xf32>,
    %cst_220 = arith.constant dense<0.000000e+00> : vector<8x256xf32>
    %464 = tpu.matmul %455, %343, %cst_220 {dimension_numbers = #tpu.dot_dimension_numbers<[1], [0], [0], [1], [0, 0, 1, 1], [], []>} : vector<8x32xf32>, vector<32x256xf32>, vector<8x256xf32> -> vector<8x256xf32>
    %c4_221 = arith.constant 4 : index
    %c0_222 = arith.constant 0 : index
    %c0_223 = arith.constant 0 : index
    %465 = vector.load %arg15[%c4_221, %c0_222, %c0_223] : memref<8x8x128xf32, #tpu.memory_space<vmem>>, vector<1x8x128xf32>
    %466 = vector.shape_cast %465 : vector<1x8x128xf32> to vector<8x128xf32>
    %467 = vector.extract_strided_slice %464 {offsets = [0, 0], sizes = [8, 128], strides = [1, 1]} : vector<8x256xf32> to vector<8x128xf32>
    %468 = vector.extract_strided_slice %464 {offsets = [0, 128], sizes = [8, 128], strides = [1, 1]} : vector<8x256xf32> to vector<8x128xf32>
    %469 = arith.select %2, %467, %468 : vector<8x128xi1>, vector<8x128xf32>
    %470 = arith.addf %466, %469 : vector<8x128xf32>
    %cst_224 = arith.constant 0.000000e+00 : f32
    %471 = vector.broadcast %cst_224 : f32 to vector<8x128xf32>
    %472 = arith.subf %471, %470 : vector<8x128xf32>
    %473 = math.exp %472 : vector<8x128xf32>
    %cst_225 = arith.constant 1.000000e+00 : f32
    %474 = vector.broadcast %cst_225 : f32 to vector<8x128xf32>
    %475 = arith.addf %474, %473 : vector<8x128xf32>
    %476 = tpu.reciprocal %475 {approx = true} : vector<8x128xf32> -> vector<8x128xf32>
    %477 = math.tanh %470 : vector<8x128xf32>
    %478 = vector.extract_strided_slice %476 {offsets = [0, 0], sizes = [8, 32], strides = [1, 1]} : vector<8x128xf32> to vector<8x32xf32>
    %479 = vector.extract_strided_slice %476 {offsets = [0, 32], sizes = [8, 32], strides = [1, 1]} : vector<8x128xf32> to vector<8x32xf32>
    %480 = vector.extract_strided_slice %477 {offsets = [0, 64], sizes = [8, 32], strides = [1, 1]} : vector<8x128xf32> to vector<8x32xf32>
    %481 = vector.extract_strided_slice %476 {offsets = [0, 96], sizes = [8, 32], strides = [1, 1]} : vector<8x128xf32> to vector<8x32xf32>
    %482 = arith.mulf %479, %453 : vector<8x32xf32>
    %483 = arith.mulf %478, %480 : vector<8x32xf32>
    %484 = arith.addf %482, %483 : vector<8x32xf32>
    %485 = math.tanh %484 : vector<8x32xf32>
    %486 = arith.mulf %481, %485 : vector<8x32xf32>
    %487 = vector.extract_strided_slice %486 {offsets = [0, 0], sizes = [4, 32], strides = [1, 1]} : vector<8x32xf32> to vector<4x32xf32>
    %c4_226 = arith.constant 4 : index
    %c0_227 = arith.constant 0 : index
    %c0_228 = arith.constant 0 : index
    %488 = vector.load %arg17[%c4_226, %c0_227, %c0_228] : memref<8x4x64xf32, #tpu.memory_space<vmem>>, vector<1x4x32xf32>
    %489 = vector.shape_cast %488 : vector<1x4x32xf32> to vector<4x32xf32>
    %490 = vector.shape_cast %487 : vector<4x32xf32> to vector<1x4x32xf32>
    tpu.vector_store %arg17[%c4_226, %c0_227, %c0_228], %490 {strides = array<i32>} : memref<8x4x64xf32, #tpu.memory_space<vmem>>, vector<1x4x32xf32>,
    %491 = vector.extract_strided_slice %486 {offsets = [4, 0], sizes = [4, 32], strides = [1, 1]} : vector<8x32xf32> to vector<4x32xf32>
    %c3_229 = arith.constant 3 : index
    %c0_230 = arith.constant 0 : index
    %c32_231 = arith.constant 32 : index
    %492 = vector.load %arg17[%c3_229, %c0_230, %c32_231] : memref<8x4x64xf32, #tpu.memory_space<vmem>>, vector<1x4x32xf32>
    %493 = vector.shape_cast %492 : vector<1x4x32xf32> to vector<4x32xf32>
    %494 = vector.shape_cast %491 : vector<4x32xf32> to vector<1x4x32xf32>
    tpu.vector_store %arg17[%c3_229, %c0_230, %c32_231], %494 {strides = array<i32>} : memref<8x4x64xf32, #tpu.memory_space<vmem>>, vector<1x4x32xf32>,
    %cst_232 = arith.constant dense<0.000000e+00> : vector<8x256xf32>
    %495 = tpu.matmul %486, %343, %cst_232 {dimension_numbers = #tpu.dot_dimension_numbers<[1], [0], [0], [1], [0, 0, 1, 1], [], []>} : vector<8x32xf32>, vector<32x256xf32>, vector<8x256xf32> -> vector<8x256xf32>
    %c5_233 = arith.constant 5 : index
    %c0_234 = arith.constant 0 : index
    %c0_235 = arith.constant 0 : index
    %496 = vector.load %arg15[%c5_233, %c0_234, %c0_235] : memref<8x8x128xf32, #tpu.memory_space<vmem>>, vector<1x8x128xf32>
    %497 = vector.shape_cast %496 : vector<1x8x128xf32> to vector<8x128xf32>
    %498 = vector.extract_strided_slice %495 {offsets = [0, 0], sizes = [8, 128], strides = [1, 1]} : vector<8x256xf32> to vector<8x128xf32>
    %499 = vector.extract_strided_slice %495 {offsets = [0, 128], sizes = [8, 128], strides = [1, 1]} : vector<8x256xf32> to vector<8x128xf32>
    %500 = arith.select %2, %498, %499 : vector<8x128xi1>, vector<8x128xf32>
    %501 = arith.addf %497, %500 : vector<8x128xf32>
    %cst_236 = arith.constant 0.000000e+00 : f32
    %502 = vector.broadcast %cst_236 : f32 to vector<8x128xf32>
    %503 = arith.subf %502, %501 : vector<8x128xf32>
    %504 = math.exp %503 : vector<8x128xf32>
    %cst_237 = arith.constant 1.000000e+00 : f32
    %505 = vector.broadcast %cst_237 : f32 to vector<8x128xf32>
    %506 = arith.addf %505, %504 : vector<8x128xf32>
    %507 = tpu.reciprocal %506 {approx = true} : vector<8x128xf32> -> vector<8x128xf32>
    %508 = math.tanh %501 : vector<8x128xf32>
    %509 = vector.extract_strided_slice %507 {offsets = [0, 0], sizes = [8, 32], strides = [1, 1]} : vector<8x128xf32> to vector<8x32xf32>
    %510 = vector.extract_strided_slice %507 {offsets = [0, 32], sizes = [8, 32], strides = [1, 1]} : vector<8x128xf32> to vector<8x32xf32>
    %511 = vector.extract_strided_slice %508 {offsets = [0, 64], sizes = [8, 32], strides = [1, 1]} : vector<8x128xf32> to vector<8x32xf32>
    %512 = vector.extract_strided_slice %507 {offsets = [0, 96], sizes = [8, 32], strides = [1, 1]} : vector<8x128xf32> to vector<8x32xf32>
    %513 = arith.mulf %510, %484 : vector<8x32xf32>
    %514 = arith.mulf %509, %511 : vector<8x32xf32>
    %515 = arith.addf %513, %514 : vector<8x32xf32>
    %516 = math.tanh %515 : vector<8x32xf32>
    %517 = arith.mulf %512, %516 : vector<8x32xf32>
    %518 = vector.extract_strided_slice %517 {offsets = [0, 0], sizes = [4, 32], strides = [1, 1]} : vector<8x32xf32> to vector<4x32xf32>
    %c5_238 = arith.constant 5 : index
    %c0_239 = arith.constant 0 : index
    %c0_240 = arith.constant 0 : index
    %519 = vector.load %arg17[%c5_238, %c0_239, %c0_240] : memref<8x4x64xf32, #tpu.memory_space<vmem>>, vector<1x4x32xf32>
    %520 = vector.shape_cast %519 : vector<1x4x32xf32> to vector<4x32xf32>
    %521 = vector.shape_cast %518 : vector<4x32xf32> to vector<1x4x32xf32>
    tpu.vector_store %arg17[%c5_238, %c0_239, %c0_240], %521 {strides = array<i32>} : memref<8x4x64xf32, #tpu.memory_space<vmem>>, vector<1x4x32xf32>,
    %522 = vector.extract_strided_slice %517 {offsets = [4, 0], sizes = [4, 32], strides = [1, 1]} : vector<8x32xf32> to vector<4x32xf32>
    %c2_241 = arith.constant 2 : index
    %c0_242 = arith.constant 0 : index
    %c32_243 = arith.constant 32 : index
    %523 = vector.load %arg17[%c2_241, %c0_242, %c32_243] : memref<8x4x64xf32, #tpu.memory_space<vmem>>, vector<1x4x32xf32>
    %524 = vector.shape_cast %523 : vector<1x4x32xf32> to vector<4x32xf32>
    %525 = vector.shape_cast %522 : vector<4x32xf32> to vector<1x4x32xf32>
    tpu.vector_store %arg17[%c2_241, %c0_242, %c32_243], %525 {strides = array<i32>} : memref<8x4x64xf32, #tpu.memory_space<vmem>>, vector<1x4x32xf32>,
    %cst_244 = arith.constant dense<0.000000e+00> : vector<8x256xf32>
    %526 = tpu.matmul %517, %343, %cst_244 {dimension_numbers = #tpu.dot_dimension_numbers<[1], [0], [0], [1], [0, 0, 1, 1], [], []>} : vector<8x32xf32>, vector<32x256xf32>, vector<8x256xf32> -> vector<8x256xf32>
    %c6_245 = arith.constant 6 : index
    %c0_246 = arith.constant 0 : index
    %c0_247 = arith.constant 0 : index
    %527 = vector.load %arg15[%c6_245, %c0_246, %c0_247] : memref<8x8x128xf32, #tpu.memory_space<vmem>>, vector<1x8x128xf32>
    %528 = vector.shape_cast %527 : vector<1x8x128xf32> to vector<8x128xf32>
    %529 = vector.extract_strided_slice %526 {offsets = [0, 0], sizes = [8, 128], strides = [1, 1]} : vector<8x256xf32> to vector<8x128xf32>
    %530 = vector.extract_strided_slice %526 {offsets = [0, 128], sizes = [8, 128], strides = [1, 1]} : vector<8x256xf32> to vector<8x128xf32>
    %531 = arith.select %2, %529, %530 : vector<8x128xi1>, vector<8x128xf32>
    %532 = arith.addf %528, %531 : vector<8x128xf32>
    %cst_248 = arith.constant 0.000000e+00 : f32
    %533 = vector.broadcast %cst_248 : f32 to vector<8x128xf32>
    %534 = arith.subf %533, %532 : vector<8x128xf32>
    %535 = math.exp %534 : vector<8x128xf32>
    %cst_249 = arith.constant 1.000000e+00 : f32
    %536 = vector.broadcast %cst_249 : f32 to vector<8x128xf32>
    %537 = arith.addf %536, %535 : vector<8x128xf32>
    %538 = tpu.reciprocal %537 {approx = true} : vector<8x128xf32> -> vector<8x128xf32>
    %539 = math.tanh %532 : vector<8x128xf32>
    %540 = vector.extract_strided_slice %538 {offsets = [0, 0], sizes = [8, 32], strides = [1, 1]} : vector<8x128xf32> to vector<8x32xf32>
    %541 = vector.extract_strided_slice %538 {offsets = [0, 32], sizes = [8, 32], strides = [1, 1]} : vector<8x128xf32> to vector<8x32xf32>
    %542 = vector.extract_strided_slice %539 {offsets = [0, 64], sizes = [8, 32], strides = [1, 1]} : vector<8x128xf32> to vector<8x32xf32>
    %543 = vector.extract_strided_slice %538 {offsets = [0, 96], sizes = [8, 32], strides = [1, 1]} : vector<8x128xf32> to vector<8x32xf32>
    %544 = arith.mulf %541, %515 : vector<8x32xf32>
    %545 = arith.mulf %540, %542 : vector<8x32xf32>
    %546 = arith.addf %544, %545 : vector<8x32xf32>
    %547 = math.tanh %546 : vector<8x32xf32>
    %548 = arith.mulf %543, %547 : vector<8x32xf32>
    %549 = vector.extract_strided_slice %548 {offsets = [0, 0], sizes = [4, 32], strides = [1, 1]} : vector<8x32xf32> to vector<4x32xf32>
    %c6_250 = arith.constant 6 : index
    %c0_251 = arith.constant 0 : index
    %c0_252 = arith.constant 0 : index
    %550 = vector.load %arg17[%c6_250, %c0_251, %c0_252] : memref<8x4x64xf32, #tpu.memory_space<vmem>>, vector<1x4x32xf32>
    %551 = vector.shape_cast %550 : vector<1x4x32xf32> to vector<4x32xf32>
    %552 = vector.shape_cast %549 : vector<4x32xf32> to vector<1x4x32xf32>
    tpu.vector_store %arg17[%c6_250, %c0_251, %c0_252], %552 {strides = array<i32>} : memref<8x4x64xf32, #tpu.memory_space<vmem>>, vector<1x4x32xf32>,
    %553 = vector.extract_strided_slice %548 {offsets = [4, 0], sizes = [4, 32], strides = [1, 1]} : vector<8x32xf32> to vector<4x32xf32>
    %c1_253 = arith.constant 1 : index
    %c0_254 = arith.constant 0 : index
    %c32_255 = arith.constant 32 : index
    %554 = vector.load %arg17[%c1_253, %c0_254, %c32_255] : memref<8x4x64xf32, #tpu.memory_space<vmem>>, vector<1x4x32xf32>
    %555 = vector.shape_cast %554 : vector<1x4x32xf32> to vector<4x32xf32>
    %556 = vector.shape_cast %553 : vector<4x32xf32> to vector<1x4x32xf32>
    tpu.vector_store %arg17[%c1_253, %c0_254, %c32_255], %556 {strides = array<i32>} : memref<8x4x64xf32, #tpu.memory_space<vmem>>, vector<1x4x32xf32>,
    %cst_256 = arith.constant dense<0.000000e+00> : vector<8x256xf32>
    %557 = tpu.matmul %548, %343, %cst_256 {dimension_numbers = #tpu.dot_dimension_numbers<[1], [0], [0], [1], [0, 0, 1, 1], [], []>} : vector<8x32xf32>, vector<32x256xf32>, vector<8x256xf32> -> vector<8x256xf32>
    %c7_257 = arith.constant 7 : index
    %c0_258 = arith.constant 0 : index
    %c0_259 = arith.constant 0 : index
    %558 = vector.load %arg15[%c7_257, %c0_258, %c0_259] : memref<8x8x128xf32, #tpu.memory_space<vmem>>, vector<1x8x128xf32>
    %559 = vector.shape_cast %558 : vector<1x8x128xf32> to vector<8x128xf32>
    %560 = vector.extract_strided_slice %557 {offsets = [0, 0], sizes = [8, 128], strides = [1, 1]} : vector<8x256xf32> to vector<8x128xf32>
    %561 = vector.extract_strided_slice %557 {offsets = [0, 128], sizes = [8, 128], strides = [1, 1]} : vector<8x256xf32> to vector<8x128xf32>
    %562 = arith.select %2, %560, %561 : vector<8x128xi1>, vector<8x128xf32>
    %563 = arith.addf %559, %562 : vector<8x128xf32>
    %cst_260 = arith.constant 0.000000e+00 : f32
    %564 = vector.broadcast %cst_260 : f32 to vector<8x128xf32>
    %565 = arith.subf %564, %563 : vector<8x128xf32>
    %566 = math.exp %565 : vector<8x128xf32>
    %cst_261 = arith.constant 1.000000e+00 : f32
    %567 = vector.broadcast %cst_261 : f32 to vector<8x128xf32>
    %568 = arith.addf %567, %566 : vector<8x128xf32>
    %569 = tpu.reciprocal %568 {approx = true} : vector<8x128xf32> -> vector<8x128xf32>
    %570 = math.tanh %563 : vector<8x128xf32>
    %571 = vector.extract_strided_slice %569 {offsets = [0, 0], sizes = [8, 32], strides = [1, 1]} : vector<8x128xf32> to vector<8x32xf32>
    %572 = vector.extract_strided_slice %569 {offsets = [0, 32], sizes = [8, 32], strides = [1, 1]} : vector<8x128xf32> to vector<8x32xf32>
    %573 = vector.extract_strided_slice %570 {offsets = [0, 64], sizes = [8, 32], strides = [1, 1]} : vector<8x128xf32> to vector<8x32xf32>
    %574 = vector.extract_strided_slice %569 {offsets = [0, 96], sizes = [8, 32], strides = [1, 1]} : vector<8x128xf32> to vector<8x32xf32>
    %575 = arith.mulf %572, %546 : vector<8x32xf32>
    %576 = arith.mulf %571, %573 : vector<8x32xf32>
    %577 = arith.addf %575, %576 : vector<8x32xf32>
    %578 = math.tanh %577 : vector<8x32xf32>
    %579 = arith.mulf %574, %578 : vector<8x32xf32>
    %580 = vector.extract_strided_slice %579 {offsets = [0, 0], sizes = [4, 32], strides = [1, 1]} : vector<8x32xf32> to vector<4x32xf32>
    %c7_262 = arith.constant 7 : index
    %c0_263 = arith.constant 0 : index
    %c0_264 = arith.constant 0 : index
    %581 = vector.load %arg17[%c7_262, %c0_263, %c0_264] : memref<8x4x64xf32, #tpu.memory_space<vmem>>, vector<1x4x32xf32>
    %582 = vector.shape_cast %581 : vector<1x4x32xf32> to vector<4x32xf32>
    %583 = vector.shape_cast %580 : vector<4x32xf32> to vector<1x4x32xf32>
    tpu.vector_store %arg17[%c7_262, %c0_263, %c0_264], %583 {strides = array<i32>} : memref<8x4x64xf32, #tpu.memory_space<vmem>>, vector<1x4x32xf32>,
    %584 = vector.extract_strided_slice %579 {offsets = [4, 0], sizes = [4, 32], strides = [1, 1]} : vector<8x32xf32> to vector<4x32xf32>
    %c0_265 = arith.constant 0 : index
    %c0_266 = arith.constant 0 : index
    %c32_267 = arith.constant 32 : index
    %585 = vector.load %arg17[%c0_265, %c0_266, %c32_267] : memref<8x4x64xf32, #tpu.memory_space<vmem>>, vector<1x4x32xf32>
    %586 = vector.shape_cast %585 : vector<1x4x32xf32> to vector<4x32xf32>
    %587 = vector.shape_cast %584 : vector<4x32xf32> to vector<1x4x32xf32>
    tpu.vector_store %arg17[%c0_265, %c0_266, %c32_267], %587 {strides = array<i32>} : memref<8x4x64xf32, #tpu.memory_space<vmem>>, vector<1x4x32xf32>,
    %588 = vector.extract_strided_slice %579 {offsets = [0, 0], sizes = [4, 32], strides = [1, 1]} : vector<8x32xf32> to vector<4x32xf32>
    %c2_268 = arith.constant 2 : index
    %c0_269 = arith.constant 0 : index
    %c0_270 = arith.constant 0 : index
    %589 = vector.load %arg13[%c2_268, %c0_269, %c0_270] : memref<4x4x32xf32, #tpu.memory_space<vmem>>, vector<1x4x32xf32>
    %590 = vector.shape_cast %589 : vector<1x4x32xf32> to vector<4x32xf32>
    %591 = vector.shape_cast %588 : vector<4x32xf32> to vector<1x4x32xf32>
    tpu.vector_store %arg13[%c2_268, %c0_269, %c0_270], %591 {strides = array<i32>} : memref<4x4x32xf32, #tpu.memory_space<vmem>>, vector<1x4x32xf32>,
    %592 = vector.extract_strided_slice %579 {offsets = [4, 0], sizes = [4, 32], strides = [1, 1]} : vector<8x32xf32> to vector<4x32xf32>
    %c3_271 = arith.constant 3 : index
    %c0_272 = arith.constant 0 : index
    %c0_273 = arith.constant 0 : index
    %593 = vector.load %arg13[%c3_271, %c0_272, %c0_273] : memref<4x4x32xf32, #tpu.memory_space<vmem>>, vector<1x4x32xf32>
    %594 = vector.shape_cast %593 : vector<1x4x32xf32> to vector<4x32xf32>
    %595 = vector.shape_cast %592 : vector<4x32xf32> to vector<1x4x32xf32>
    tpu.vector_store %arg13[%c3_271, %c0_272, %c0_273], %595 {strides = array<i32>} : memref<4x4x32xf32, #tpu.memory_space<vmem>>, vector<1x4x32xf32>,
    %596 = vector.extract_strided_slice %577 {offsets = [0, 0], sizes = [4, 32], strides = [1, 1]} : vector<8x32xf32> to vector<4x32xf32>
    %c2_274 = arith.constant 2 : index
    %c0_275 = arith.constant 0 : index
    %c0_276 = arith.constant 0 : index
    %597 = vector.load %arg14[%c2_274, %c0_275, %c0_276] : memref<4x4x32xf32, #tpu.memory_space<vmem>>, vector<1x4x32xf32>
    %598 = vector.shape_cast %597 : vector<1x4x32xf32> to vector<4x32xf32>
    %599 = vector.shape_cast %596 : vector<4x32xf32> to vector<1x4x32xf32>
    tpu.vector_store %arg14[%c2_274, %c0_275, %c0_276], %599 {strides = array<i32>} : memref<4x4x32xf32, #tpu.memory_space<vmem>>, vector<1x4x32xf32>,
    %600 = vector.extract_strided_slice %577 {offsets = [4, 0], sizes = [4, 32], strides = [1, 1]} : vector<8x32xf32> to vector<4x32xf32>
    %c3_277 = arith.constant 3 : index
    %c0_278 = arith.constant 0 : index
    %c0_279 = arith.constant 0 : index
    %601 = vector.load %arg14[%c3_277, %c0_278, %c0_279] : memref<4x4x32xf32, #tpu.memory_space<vmem>>, vector<1x4x32xf32>
    %602 = vector.shape_cast %601 : vector<1x4x32xf32> to vector<4x32xf32>
    %603 = vector.shape_cast %600 : vector<4x32xf32> to vector<1x4x32xf32>
    tpu.vector_store %arg14[%c3_277, %c0_278, %c0_279], %603 {strides = array<i32>} : memref<4x4x32xf32, #tpu.memory_space<vmem>>, vector<1x4x32xf32>,
    %c0_280 = arith.constant 0 : index
    %c0_281 = arith.constant 0 : index
    %c0_282 = arith.constant 0 : index
    %604 = vector.load %arg17[%c0_280, %c0_281, %c0_282] : memref<8x4x64xf32, #tpu.memory_space<vmem>>, vector<8x4x64xf32>
    %605 = math.tanh %604 : vector<8x4x64xf32>
    %c0_283 = arith.constant 0 : index
    %c0_284 = arith.constant 0 : index
    %606 = vector.load %arg7[%c0_283, %c0_284] : memref<1x64xf32, #tpu.memory_space<vmem>>, vector<1x64xf32>
    %607 = vector.shape_cast %606 : vector<1x64xf32> to vector<1x1x64xf32>
    %608 = vector.broadcast %607 : vector<1x1x64xf32> to vector<8x4x64xf32>
    %609 = arith.mulf %605, %608 : vector<8x4x64xf32>
    %cst_285 = arith.constant dense<0.000000e+00> : vector<8x4xf32>
    %610 = vector.multi_reduction <add>, %609, %cst_285 [2] : vector<8x4x64xf32> to vector<8x4xf32>
    %cst_286 = arith.constant dense<0xFF800000> : vector<8xf32>
    %611 = vector.multi_reduction <maximumf>, %610, %cst_286 [1] : vector<8x4xf32> to vector<8xf32>
    %612 = vector.shape_cast %611 : vector<8xf32> to vector<8x1xf32>
    %613 = vector.broadcast %612 : vector<8x1xf32> to vector<8x4xf32>
    %614 = arith.subf %610, %613 : vector<8x4xf32>
    %615 = math.exp %614 : vector<8x4xf32>
    %cst_287 = arith.constant dense<0.000000e+00> : vector<8xf32>
    %616 = vector.multi_reduction <add>, %615, %cst_287 [1] : vector<8x4xf32> to vector<8xf32>
    %617 = vector.shape_cast %616 : vector<8xf32> to vector<8x1xf32>
    %618 = tpu.reciprocal %617 {approx = true} : vector<8x1xf32> -> vector<8x1xf32>
    %619 = vector.broadcast %618 : vector<8x1xf32> to vector<8x4xf32>
    %620 = arith.mulf %615, %619 : vector<8x4xf32>
    %621 = vector.shape_cast %620 : vector<8x4xf32> to vector<8x4x1xf32>
    %622 = vector.broadcast %621 : vector<8x4x1xf32> to vector<8x4x64xf32>
    %623 = arith.mulf %604, %622 : vector<8x4x64xf32>
    %cst_288 = arith.constant dense<0.000000e+00> : vector<8x64xf32>
    %624 = vector.multi_reduction <add>, %623, %cst_288 [1] : vector<8x4x64xf32> to vector<8x64xf32>
    %cst_289 = arith.constant 0.000000e+00 : f32
    %625 = vector.broadcast %cst_289 : f32 to vector<8x64xf32>
    %626 = arith.maximumf %624, %625 : vector<8x64xf32>
    %c0_290 = arith.constant 0 : index
    %c0_291 = arith.constant 0 : index
    %627 = vector.load %arg8[%c0_290, %c0_291] : memref<64x64xf32, #tpu.memory_space<vmem>>, vector<64x64xf32>
    %cst_292 = arith.constant dense<0.000000e+00> : vector<8x64xf32>
    %628 = tpu.matmul %626, %627, %cst_292 {dimension_numbers = #tpu.dot_dimension_numbers<[1], [0], [0], [1], [0, 0, 1, 1], [], []>} : vector<8x64xf32>, vector<64x64xf32>, vector<8x64xf32> -> vector<8x64xf32>
    %c0_293 = arith.constant 0 : index
    %c0_294 = arith.constant 0 : index
    %629 = vector.load %arg9[%c0_293, %c0_294] : memref<1x64xf32, #tpu.memory_space<vmem>>, vector<1x64xf32>
    %630 = vector.broadcast %629 : vector<1x64xf32> to vector<8x64xf32>
    %631 = arith.addf %628, %630 : vector<8x64xf32>
    %c0_295 = arith.constant 0 : index
    %c0_296 = arith.constant 0 : index
    %632 = vector.load %arg10[%c0_295, %c0_296] : memref<64x3xf32, #tpu.memory_space<vmem>>, vector<64x3xf32>
    %cst_297 = arith.constant dense<0.000000e+00> : vector<8x3xf32>
    %633 = tpu.matmul %631, %632, %cst_297 {dimension_numbers = #tpu.dot_dimension_numbers<[1], [0], [0], [1], [0, 0, 1, 1], [], []>} : vector<8x64xf32>, vector<64x3xf32>, vector<8x3xf32> -> vector<8x3xf32>
    %c0_298 = arith.constant 0 : index
    %c0_299 = arith.constant 0 : index
    %634 = vector.load %arg11[%c0_298, %c0_299] : memref<1x3xf32, #tpu.memory_space<vmem>>, vector<1x3xf32>
    %635 = vector.broadcast %634 : vector<1x3xf32> to vector<8x3xf32>
    %636 = arith.addf %633, %635 : vector<8x3xf32>
    %637 = arith.negf %636 : vector<8x3xf32>
    %638 = math.exp %637 : vector<8x3xf32>
    %cst_300 = arith.constant 1.000000e+00 : f32
    %639 = vector.broadcast %cst_300 : f32 to vector<8x3xf32>
    %640 = arith.addf %639, %638 : vector<8x3xf32>
    %641 = arith.divf %639, %640 : vector<8x3xf32>
    %c0_301 = arith.constant 0 : index
    %c0_302 = arith.constant 0 : index
    %642 = vector.load %arg12[%c0_301, %c0_302] : memref<8x3xf32, #tpu.memory_space<vmem>>, vector<8x3xf32>
    tpu.vector_store %arg12[%c0_301, %c0_302], %641 {strides = array<i32>} : memref<8x3xf32, #tpu.memory_space<vmem>>, vector<8x3xf32>,
    return
  }
}

</mosaic_0001>

<llo_original>
// kernel: bilstm_att_forward.1
$region0: #{bilstm_att_forward.1}
  #allocation0 [shape = 'u32[]', space=smem, size = 0x4, offset = 0x4, fixed_abs, tag = 'smem constant byte address 0x4 - core index']
  #allocation1 [shape = 'u32[72,128]{1,0:T(1,128)}', space=vmem, size = 0x9000, scoped, tag = 'internal scratch']
  #allocation2 [shape = 'f32[8,8,128]{2,1,0:T(8,128)}', space=vmem, size = 0x8000, scoped, tag = 'scratch operand']
  #allocation3 [shape = 'f32[8,8,64]{2,1,0:T(8,128)}', space=vmem, size = 0x8000, scoped, tag = 'scratch operand']
  #allocation4 [shape = 'f32[8,4,64]{2,1,0:T(4,128)}', space=vmem, size = 0x4000, scoped, tag = 'scratch operand']
  %s0 = inlined_call_operand.vmem [shape: s32[64,1], index: 0, kind: input, shape index: {}]
  %s1 = inlined_call_operand.vmem [shape: f32[50,256], index: 1, kind: input, shape index: {}]
  %s2 = inlined_call_operand.hbm [shape: f32[1,256], index: 2, kind: input, shape index: {}]
  %s3 = inlined_call_operand.vmem [shape: f32[32,256], index: 3, kind: input, shape index: {}]
  %s4 = inlined_call_operand.vmem [shape: f32[64,256], index: 4, kind: input, shape index: {}]
  %s5 = inlined_call_operand.vmem [shape: f32[32,256], index: 5, kind: input, shape index: {}]
  %s6 = inlined_call_operand.hbm [shape: f32[1,256], index: 6, kind: input, shape index: {}]
  %s7 = inlined_call_operand.vmem [shape: f32[1,64], index: 7, kind: input, shape index: {}]
  %s8 = inlined_call_operand.vmem [shape: f32[64,64], index: 8, kind: input, shape index: {}]
  %s9 = inlined_call_operand.hbm [shape: f32[1,64], index: 9, kind: input, shape index: {}]
  %s10 = inlined_call_operand.vmem [shape: f32[64,3], index: 10, kind: input, shape index: {}]
  %s11 = inlined_call_operand.vmem [shape: f32[1,3], index: 11, kind: input, shape index: {}]
  %s12 = inlined_call_operand.vmem [shape: f32[8,3], index: 12, kind: output, shape index: {0}]
  %s13 = inlined_call_operand.hbm [shape: f32[4,4,32], index: 13, kind: output, shape index: {1}]
  %s14 = inlined_call_operand.hbm [shape: f32[4,4,32], index: 14, kind: output, shape index: {2}]
  %15 = xla_tuple %s12, %s13, %s14
  %s16 = sld [smem:[#allocation0]]
  $region86: #{bilstm_att_forward.1} parent=0
    _
  %s18 = ssub.s32 1, %s16
  %s19 = scalar_select 0, %s18, %s16
  $region1: #{bilstm_att_forward.1} parent=0
    #allocation5 [shape = 'u8[1024]{0}', space=vmem, size = 0x400, scoped, tag = 'input window, operand 2, single buffered']
    #allocation6 [shape = 's32[1]{0}', space=sflag, size = 0x4, scoped, tag = 'scoped memory for bilstm_att_forward.1']
    #allocation7 [shape = 's32[1]{0}', space=sflag, size = 0x4, scoped, tag = 'scoped memory for bilstm_att_forward.1']
    #allocation8 [shape = 'u8[1024]{0}', space=vmem, size = 0x400, scoped, tag = 'input window, operand 6, single buffered']
    #allocation9 [shape = 's32[1]{0}', space=sflag, size = 0x4, scoped, tag = 'scoped memory for bilstm_att_forward.1']
    #allocation10 [shape = 'u8[512]{0}', space=vmem, size = 0x400, scoped, tag = 'input window, operand 9, single buffered']
    #allocation11 [shape = 'u8[8192]{0}', space=vmem, size = 0x2000, scoped, tag = 'output window, operand 1, single buffered']
    #allocation12 [shape = 'u8[8192]{0}', space=vmem, size = 0x2000, scoped, tag = 'output window, operand 2, single buffered']
    #allocation13 [shape = 's32[1]{0}', space=sflag, size = 0x4, scoped, tag = 'scoped memory for bilstm_att_forward.1']
    %20 = vsyncpa [#allocation6], 0
    %21 = vsyncpa [#allocation9], 0
    %22 = vsyncpa [#allocation7], 0
    %23 = vsyncpa [#allocation13], 0
    // Predicated region
    $region2: #{bilstm_att_forward.1} parent=1 // pred_check
      _
    $region3: #{bilstm_att_forward.1} parent=1 // pred_check_branch
      %25 = sbr.rel (0) target = $region5
    $region4: #{bilstm_att_forward.1} parent=1 // pred_region
      _
    $region5: #{bilstm_att_forward.1} parent=1 // pred_fallthru
      _
    // Predicated region
    $region6: #{bilstm_att_forward.1} parent=1 // pred_check
      _
    $region7: #{bilstm_att_forward.1} parent=1 // pred_check_branch
      %27 = sbr.rel (0) target = $region9
    $region8: #{bilstm_att_forward.1} parent=1 // pred_region
      _
    $region9: #{bilstm_att_forward.1} parent=1 // pred_fallthru
      _
    // Predicated region
    $region10: #{bilstm_att_forward.1} parent=1 // pred_check
      _
    $region11: #{bilstm_att_forward.1} parent=1 // pred_check_branch
      %29 = sbr.rel (0) target = $region13
    $region12: #{bilstm_att_forward.1} parent=1 // pred_region
      %31 = vsyncadd [#allocation6], 0
      %s33 = sshll.u32 %s2, 4
      %s34 = int_to_ptr.hbm [resolvable:$true] %s33
      %s35 = sshll.u32 [#allocation5], 4
      %s36 = int_to_ptr.vmem [resolvable:$true] %s35
      %38 = dma.hbm_to_vmem [thread:$0]  %s34, 32, %s36, [#allocation6]
    $region13: #{bilstm_att_forward.1} parent=1 // pred_fallthru
      _
    // Predicated region
    $region14: #{bilstm_att_forward.1} parent=1 // pred_check
      _
    $region15: #{bilstm_att_forward.1} parent=1 // pred_check_branch
      %40 = sbr.rel (0) target = $region17
    $region16: #{bilstm_att_forward.1} parent=1 // pred_region
      _
    $region17: #{bilstm_att_forward.1} parent=1 // pred_fallthru
      _
    // Predicated region
    $region18: #{bilstm_att_forward.1} parent=1 // pred_check
      _
    $region19: #{bilstm_att_forward.1} parent=1 // pred_check_branch
      %42 = sbr.rel (0) target = $region21
    $region20: #{bilstm_att_forward.1} parent=1 // pred_region
      _
    $region21: #{bilstm_att_forward.1} parent=1 // pred_fallthru
      _
    // Predicated region
    $region22: #{bilstm_att_forward.1} parent=1 // pred_check
      _
    $region23: #{bilstm_att_forward.1} parent=1 // pred_check_branch
      %44 = sbr.rel (0) target = $region25
    $region24: #{bilstm_att_forward.1} parent=1 // pred_region
      _
    $region25: #{bilstm_att_forward.1} parent=1 // pred_fallthru
      _
    // Predicated region
    $region26: #{bilstm_att_forward.1} parent=1 // pred_check
      _
    $region27: #{bilstm_att_forward.1} parent=1 // pred_check_branch
      %46 = sbr.rel (0) target = $region29
    $region28: #{bilstm_att_forward.1} parent=1 // pred_region
      %48 = vsyncadd [#allocation9], 0
      %s50 = sshll.u32 %s6, 4
      %s51 = int_to_ptr.hbm [resolvable:$true] %s50
      %s52 = sshll.u32 [#allocation8], 4
      %s53 = int_to_ptr.vmem [resolvable:$true] %s52
      %55 = dma.hbm_to_vmem [thread:$0]  %s51, 32, %s53, [#allocation9]
    $region29: #{bilstm_att_forward.1} parent=1 // pred_fallthru
      _
    // Predicated region
    $region30: #{bilstm_att_forward.1} parent=1 // pred_check
      _
    $region31: #{bilstm_att_forward.1} parent=1 // pred_check_branch
      %57 = sbr.rel (0) target = $region33
    $region32: #{bilstm_att_forward.1} parent=1 // pred_region
      _
    $region33: #{bilstm_att_forward.1} parent=1 // pred_fallthru
      _
    // Predicated region
    $region34: #{bilstm_att_forward.1} parent=1 // pred_check
      _
    $region35: #{bilstm_att_forward.1} parent=1 // pred_check_branch
      %59 = sbr.rel (0) target = $region37
    $region36: #{bilstm_att_forward.1} parent=1 // pred_region
      _
    $region37: #{bilstm_att_forward.1} parent=1 // pred_fallthru
      _
    // Predicated region
    $region38: #{bilstm_att_forward.1} parent=1 // pred_check
      _
    $region39: #{bilstm_att_forward.1} parent=1 // pred_check_branch
      %61 = sbr.rel (0) target = $region41
    $region40: #{bilstm_att_forward.1} parent=1 // pred_region
      %63 = vsyncadd [#allocation9], 0
      %s65 = sshll.u32 %s9, 4
      %s66 = int_to_ptr.hbm [resolvable:$true] %s65
      %s67 = sshll.u32 [#allocation10], 4
      %s68 = int_to_ptr.vmem [resolvable:$true] %s67
      %70 = dma.hbm_to_vmem [thread:$0]  %s66, 16, %s68, [#allocation9]
    $region41: #{bilstm_att_forward.1} parent=1 // pred_fallthru
      _
    // Predicated region
    $region42: #{bilstm_att_forward.1} parent=1 // pred_check
      _
    $region43: #{bilstm_att_forward.1} parent=1 // pred_check_branch
      %72 = sbr.rel (0) target = $region45
    $region44: #{bilstm_att_forward.1} parent=1 // pred_region
      _
    $region45: #{bilstm_att_forward.1} parent=1 // pred_fallthru
      _
    // Predicated region
    $region46: #{bilstm_att_forward.1} parent=1 // pred_check
      _
    $region47: #{bilstm_att_forward.1} parent=1 // pred_check_branch
      %74 = sbr.rel (0) target = $region49
    $region48: #{bilstm_att_forward.1} parent=1 // pred_region
      _
    $region49: #{bilstm_att_forward.1} parent=1 // pred_fallthru
      _
    // Predicated region
    $region50: #{bilstm_att_forward.1} parent=1 // pred_check
      _
    $region51: #{bilstm_att_forward.1} parent=1 // pred_check_branch
      %76 = sbr.rel (0) target = $region53
    $region52: #{bilstm_att_forward.1} parent=1 // pred_region
      %78 = dma.done [#allocation6], 32
    $region53: #{bilstm_att_forward.1} parent=1 // pred_fallthru
      _
    // Predicated region
    $region54: #{bilstm_att_forward.1} parent=1 // pred_check
      _
    $region55: #{bilstm_att_forward.1} parent=1 // pred_check_branch
      %80 = sbr.rel (0) target = $region57
    $region56: #{bilstm_att_forward.1} parent=1 // pred_region
      %82 = dma.done [#allocation9], 32
    $region57: #{bilstm_att_forward.1} parent=1 // pred_fallthru
      _
    // Predicated region
    $region58: #{bilstm_att_forward.1} parent=1 // pred_check
      _
    $region59: #{bilstm_att_forward.1} parent=1 // pred_check_branch
      %84 = sbr.rel (0) target = $region61
    $region60: #{bilstm_att_forward.1} parent=1 // pred_region
      %86 = dma.done [#allocation9], 16
    $region61: #{bilstm_att_forward.1} parent=1 // pred_fallthru
      _
    %v87 = vlaneseq
    %v88 = vshrl.u32 %v87, 7
    %vm89 = vcmp.lt.s32.totalorder %v88, 4
    %v90 = vld [vmem:[%s0] sm:$0xff]
    %v91 = vld [vmem:[%s0 + $0x8] sm:$0xff]
    %v92 = vld [vmem:[%s0 + $0x10] sm:$0xff]
    %v93 = vld [vmem:[%s0 + $0x18] sm:$0xff]
    %v94 = vld [vmem:[%s0 + $0x20] sm:$0xff]
    %v95 = vld [vmem:[%s0 + $0x28] sm:$0xff]
    %v96 = vld [vmem:[%s0 + $0x30] sm:$0xff]
    %v97 = vld [vmem:[%s0 + $0x38] sm:$0xff]
    %v98 = vlaneseq
    %v99 = vand.u32 %v98, 127
    %100 = vset.pattern.permute.xlu0 0
    %101 = vperm.xlu0 %100, %v90
    %v102 = vpop.permute.xlu0 %101
    %103 = vset.pattern.permute.xlu0 0
    %104 = vperm.xlu0 %103, %v91
    %v105 = vpop.permute.xlu0 %104
    %106 = vset.pattern.permute.xlu0 0
    %107 = vperm.xlu0 %106, %v92
    %v108 = vpop.permute.xlu0 %107
    %109 = vset.pattern.permute.xlu0 0
    %110 = vperm.xlu0 %109, %v93
    %v111 = vpop.permute.xlu0 %110
    %112 = vset.pattern.permute.xlu0 0
    %113 = vperm.xlu0 %112, %v94
    %v114 = vpop.permute.xlu0 %113
    %115 = vset.pattern.permute.xlu0 0
    %116 = vperm.xlu0 %115, %v95
    %v117 = vpop.permute.xlu0 %116
    %118 = vset.pattern.permute.xlu0 0
    %119 = vperm.xlu0 %118, %v96
    %v120 = vpop.permute.xlu0 %119
    %121 = vset.pattern.permute.xlu0 0
    %122 = vperm.xlu0 %121, %v97
    %v123 = vpop.permute.xlu0 %122
    %vm124 = vcmp.eq.s32.totalorder %v99, %v102
    %vm125 = vcmp.eq.s32.totalorder %v99, %v105
    %vm126 = vcmp.eq.s32.totalorder %v99, %v108
    %vm127 = vcmp.eq.s32.totalorder %v99, %v111
    %vm128 = vcmp.eq.s32.totalorder %v99, %v114
    %vm129 = vcmp.eq.s32.totalorder %v99, %v117
    %vm130 = vcmp.eq.s32.totalorder %v99, %v120
    %vm131 = vcmp.eq.s32.totalorder %v99, %v123
    %v132 = vsel %vm124, 1, 0
    %v133 = vsel %vm125, 1, 0
    %v134 = vsel %vm126, 1, 0
    %v135 = vsel %vm127, 1, 0
    %v136 = vsel %vm128, 1, 0
    %v137 = vsel %vm129, 1, 0
    %v138 = vsel %vm130, 1, 0
    %v139 = vsel %vm131, 1, 0
    %v140 = vcvt.s32.f32 %v132
    %v141 = vcvt.s32.f32 %v133
    %v142 = vcvt.s32.f32 %v134
    %v143 = vcvt.s32.f32 %v135
    %v144 = vcvt.s32.f32 %v136
    %v145 = vcvt.s32.f32 %v137
    %v146 = vcvt.s32.f32 %v138
    %v147 = vcvt.s32.f32 %v139
    %v148 = vld [vmem:[%s1] sm:$0xff]
    %v149 = vld [vmem:[%s1 + $0x8] sm:$0xff]
    %v150 = vld [vmem:[%s1 + $0x10] sm:$0xff]
    %v151 = vld [vmem:[%s1 + $0x18] sm:$0xff]
    %v152 = vld [vmem:[%s1 + $0x20] sm:$0xff]
    %v153 = vld [vmem:[%s1 + $0x28] sm:$0xff]
    %v154 = vld [vmem:[%s1 + $0x30] sm:$0xff]
    %v155 = vld [vmem:[%s1 + $0x38] sm:$0xff]
    %v156 = vld [vmem:[%s1 + $0x40] sm:$0xff]
    %v157 = vld [vmem:[%s1 + $0x48] sm:$0xff]
    %v158 = vld [vmem:[%s1 + $0x50] sm:$0xff]
    %v159 = vld [vmem:[%s1 + $0x58] sm:$0xff]
    %v160 = vld [vmem:[%s1 + $0x60] sm:$0x3]
    %v161 = vld [vmem:[%s1 + $0x68] sm:$0x3]
    %v162 = vld [vmem:[#allocation5] sm:$0x3]
    %v164 = vperm.slane %v162, 0
    %v165 = vperm.slane %v162, 1
    %vm168 = vcmask 408576
    %v170 = vsel %vm168, %v140, 0
    %v173 = vsel %vm168, %v141, 0
    %v176 = vsel %vm168, %v142, 0
    %v179 = vsel %vm168, %v143, 0
    %v182 = vsel %vm168, %v144, 0
    %v185 = vsel %vm168, %v145, 0
    %v188 = vsel %vm168, %v146, 0
    %v191 = vsel %vm168, %v147, 0
    %vm193 = vcmask 1041408
    %v195 = vsel %vm193, %v160, 0
    %v198 = vsel %vm193, %v161, 0
    %200 = vmatpush.msra.mxu0 0.0
    %201 = vmatpush.msra.mxu0 0.0
    %202 = vmatpush.msra.mxu0 0.0
    %203 = vmatpush.msra.mxu0 0.0
    %204 = vmatpush.msra.mxu0 0.0
    %205 = vmatpush.msra.mxu0 0.0
    %206 = vmatpush.msra.mxu0 0.0
    %207 = vmatpush.msra.mxu0 0.0
    %208 = vmatpush.msra.mxu0 0.0
    %209 = vmatpush.msra.mxu0 %v195
    %210 = vmatpush.msra.mxu0 %v158
    %211 = vmatpush.msra.mxu0 %v156
    %212 = vmatpush.msra.mxu0 %v154
    %213 = vmatpush.msra.mxu0 %v152
    %214 = vmatpush.msra.mxu0 %v150
    %215 = vmatpush.msra.mxu0 %v148
    %216 = vmatmul.f32.gmra.mxu0 %v170
    %v217 = vpop.f32.mrf.mxu0
    %v218 = vadd.f32 %v164, %v217
    %219 = vmatmul.f32.gmra.mxu0 %v173
    %v220 = vpop.f32.mrf.mxu0
    %v221 = vadd.f32 %v164, %v220
    %222 = vmatmul.f32.gmra.mxu0 %v176
    %v223 = vpop.f32.mrf.mxu0
    %v224 = vadd.f32 %v164, %v223
    %225 = vmatmul.f32.gmra.mxu0 %v179
    %v226 = vpop.f32.mrf.mxu0
    %v227 = vadd.f32 %v164, %v226
    %228 = vmatmul.f32.gmra.mxu0 %v182
    %v229 = vpop.f32.mrf.mxu0
    %v230 = vadd.f32 %v164, %v229
    %231 = vmatmul.f32.gmra.mxu0 %v185
    %v232 = vpop.f32.mrf.mxu0
    %v233 = vadd.f32 %v164, %v232
    %234 = vmatmul.f32.gmra.mxu0 %v188
    %v235 = vpop.f32.mrf.mxu0
    %v236 = vadd.f32 %v164, %v235
    %237 = vmatmul.f32.gmra.mxu0 %v191
    %v238 = vpop.f32.mrf.mxu0
    %v239 = vadd.f32 %v164, %v238
    %240 = vdwg.mxu0
    %241 = vmatpush.msra.mxu0 0.0
    %242 = vmatpush.msra.mxu0 0.0
    %243 = vmatpush.msra.mxu0 0.0
    %244 = vmatpush.msra.mxu0 0.0
    %245 = vmatpush.msra.mxu0 0.0
    %246 = vmatpush.msra.mxu0 0.0
    %247 = vmatpush.msra.mxu0 0.0
    %248 = vmatpush.msra.mxu0 0.0
    %249 = vmatpush.msra.mxu0 0.0
    %250 = vmatpush.msra.mxu0 %v198
    %251 = vmatpush.msra.mxu0 %v159
    %252 = vmatpush.msra.mxu0 %v157
    %253 = vmatpush.msra.mxu0 %v155
    %254 = vmatpush.msra.mxu0 %v153
    %255 = vmatpush.msra.mxu0 %v151
    %256 = vmatpush.msra.mxu0 %v149
    %257 = vmatmul.f32.gmra.mxu0 %v170
    %v258 = vpop.f32.mrf.mxu0
    %v259 = vadd.f32 %v165, %v258
    %260 = vmatmul.f32.gmra.mxu0 %v173
    %v261 = vpop.f32.mrf.mxu0
    %v262 = vadd.f32 %v165, %v261
    %263 = vmatmul.f32.gmra.mxu0 %v176
    %v264 = vpop.f32.mrf.mxu0
    %v265 = vadd.f32 %v165, %v264
    %266 = vmatmul.f32.gmra.mxu0 %v179
    %v267 = vpop.f32.mrf.mxu0
    %v268 = vadd.f32 %v165, %v267
    %269 = vmatmul.f32.gmra.mxu0 %v182
    %v270 = vpop.f32.mrf.mxu0
    %v271 = vadd.f32 %v165, %v270
    %272 = vmatmul.f32.gmra.mxu0 %v185
    %v273 = vpop.f32.mrf.mxu0
    %v274 = vadd.f32 %v165, %v273
    %275 = vmatmul.f32.gmra.mxu0 %v188
    %v276 = vpop.f32.mrf.mxu0
    %v277 = vadd.f32 %v165, %v276
    %278 = vmatmul.f32.gmra.mxu0 %v191
    %v279 = vpop.f32.mrf.mxu0
    %v280 = vadd.f32 %v165, %v279
    %281 = vdwg.mxu0
    %v282 = vsel %vm89, %v218, %v259
    %v283 = vsel %vm89, %v221, %v262
    %v284 = vsel %vm89, %v224, %v265
    %v285 = vsel %vm89, %v227, %v268
    %v286 = vsel %vm89, %v230, %v271
    %v287 = vsel %vm89, %v233, %v274
    %v288 = vsel %vm89, %v236, %v277
    %v289 = vsel %vm89, %v239, %v280
    %290 = vst [vmem:[#allocation2] sm:$0xff] %v282
    %291 = vst [vmem:[#allocation2 + $0x8] sm:$0xff] %v283
    %292 = vst [vmem:[#allocation2 + $0x10] sm:$0xff] %v284
    %293 = vst [vmem:[#allocation2 + $0x18] sm:$0xff] %v285
    %294 = vst [vmem:[#allocation2 + $0x20] sm:$0xff] %v286
    %295 = vst [vmem:[#allocation2 + $0x28] sm:$0xff] %v287
    %296 = vst [vmem:[#allocation2 + $0x30] sm:$0xff] %v288
    %297 = vst [vmem:[#allocation2 + $0x38] sm:$0xff] %v289
    %v298 = vld [vmem:[%s3] sm:$0xff]
    %v299 = vld [vmem:[%s3 + $0x8] sm:$0xff]
    %v300 = vld [vmem:[%s3 + $0x10] sm:$0xff]
    %v301 = vld [vmem:[%s3 + $0x18] sm:$0xff]
    %v302 = vld [vmem:[%s3 + $0x20] sm:$0xff]
    %v303 = vld [vmem:[%s3 + $0x28] sm:$0xff]
    %v304 = vld [vmem:[%s3 + $0x30] sm:$0xff]
    %v305 = vld [vmem:[%s3 + $0x38] sm:$0xff]
    %v306 = vld [vmem:[#allocation2] sm:$0xff]
    %v307 = vsub.f32 0.0, %v306
    %v308 = vmul.f32 %v307, 1.442695
    %v309 = vpow.pop %v308
    %v310 = vadd.f32 %v309, 1.0
    %v311 = vrcp.pop %v310
    %v312 = vtanh.pop %v306
    %v313 = vmul.f32 %v311, 0.0
    %315 = vrot.lane.b32.xlu0 %v312, 64
    %v316 = vpop.permute.xlu0 %315
    %v318 = vmul.f32 %v311, %v316
    %320 = vrot.lane.b32.xlu0 %v318, 32
    %v321 = vpop.permute.xlu0 %320
    %v323 = vadd.f32 %v313, %v321
    %v324 = vtanh.pop %v323
    %326 = vrot.lane.b32.xlu0 %v324, 64
    %v327 = vpop.permute.xlu0 %326
    %v329 = vmul.f32 %v311, %v327
    %331 = vrot.lane.b32.xlu0 %v329, 32
    %v332 = vpop.permute.xlu0 %331
    %vm334 = vcmask 257024
    %335 = vst.msk [vmem:[#allocation3] sm:$0xf] %vm334, %v332
    %s336 = scalar_lea.vmem [#allocation3], 56
    %337 = vst.msk [vmem:[%s336 + $0x4] sm:$0xf] %vm334, %v332
    %338 = vrot.lane.b32.xlu0 %v329, 64
    %v339 = vpop.permute.xlu0 %338
    %vm341 = vcmask 523524
    %342 = vst.msk [vmem:[%s336 - $0x4] sm:$0xf0] %vm341, %v339
    %343 = vst.msk [vmem:[#allocation3] sm:$0xf0] %vm341, %v339
    %vm344 = vcmask 261120
    %v345 = vsel %vm344, %v332, 0
    %347 = vmatpush.msra.mxu0 0.0
    %348 = vmatpush.msra.mxu0 0.0
    %349 = vmatpush.msra.mxu0 0.0
    %350 = vmatpush.msra.mxu0 0.0
    %351 = vmatpush.msra.mxu0 0.0
    %352 = vmatpush.msra.mxu0 0.0
    %353 = vmatpush.msra.mxu0 0.0
    %354 = vmatpush.msra.mxu0 0.0
    %355 = vmatpush.msra.mxu0 0.0
    %356 = vmatpush.msra.mxu0 0.0
    %357 = vmatpush.msra.mxu0 0.0
    %358 = vmatpush.msra.mxu0 0.0
    %359 = vmatpush.msra.mxu0 %v304
    %360 = vmatpush.msra.mxu0 %v302
    %361 = vmatpush.msra.mxu0 %v300
    %362 = vmatpush.msra.mxu0 %v298
    %363 = vmatmul.f32.gmra.mxu0 %v345
    %v364 = vpop.f32.mrf.mxu0
    %v365 = vadd.f32 0.0, %v364
    %366 = vdwg.mxu0
    %367 = vmatpush.msra.mxu0 0.0
    %368 = vmatpush.msra.mxu0 0.0
    %369 = vmatpush.msra.mxu0 0.0
    %370 = vmatpush.msra.mxu0 0.0
    %371 = vmatpush.msra.mxu0 0.0
    %372 = vmatpush.msra.mxu0 0.0
    %373 = vmatpush.msra.mxu0 0.0
    %374 = vmatpush.msra.mxu0 0.0
    %375 = vmatpush.msra.mxu0 0.0
    %376 = vmatpush.msra.mxu0 0.0
    %377 = vmatpush.msra.mxu0 0.0
    %378 = vmatpush.msra.mxu0 0.0
    %379 = vmatpush.msra.mxu0 %v305
    %380 = vmatpush.msra.mxu0 %v303
    %381 = vmatpush.msra.mxu0 %v301
    %382 = vmatpush.msra.mxu0 %v299
    %383 = vmatmul.f32.gmra.mxu0 %v345
    %v384 = vpop.f32.mrf.mxu0
    %v385 = vadd.f32 0.0, %v384
    %386 = vdwg.mxu0
    %s387 = scalar_lea.vmem [#allocation2], 8
    %v388 = vld [vmem:[%s387] sm:$0xff]
    %v389 = vsel %vm89, %v365, %v385
    %v390 = vadd.f32 %v388, %v389
    %v391 = vsub.f32 0.0, %v390
    %v392 = vmul.f32 %v391, 1.442695
    %v393 = vpow.pop %v392
    %v394 = vadd.f32 %v393, 1.0
    %v395 = vrcp.pop %v394
    %v396 = vtanh.pop %v390
    %v397 = vmul.f32 %v395, %v323
    %399 = vrot.lane.b32.xlu0 %v396, 64
    %v400 = vpop.permute.xlu0 %399
    %v402 = vmul.f32 %v395, %v400
    %404 = vrot.lane.b32.xlu0 %v402, 32
    %v405 = vpop.permute.xlu0 %404
    %v407 = vadd.f32 %v397, %v405
    %v408 = vtanh.pop %v407
    %410 = vrot.lane.b32.xlu0 %v408, 64
    %v411 = vpop.permute.xlu0 %410
    %v413 = vmul.f32 %v395, %v411
    %415 = vrot.lane.b32.xlu0 %v413, 32
    %v416 = vpop.permute.xlu0 %415
    %s418 = scalar_lea.vmem [#allocation3], 8
    %419 = vst.msk [vmem:[%s418] sm:$0xf] %vm334, %v416
    %s420 = scalar_lea.vmem [#allocation3], 48
    %421 = vst.msk [vmem:[%s420 + $0x4] sm:$0xf] %vm334, %v416
    %422 = vrot.lane.b32.xlu0 %v413, 64
    %v423 = vpop.permute.xlu0 %422
    %425 = vst.msk [vmem:[%s420 - $0x4] sm:$0xf0] %vm341, %v423
    %426 = vst.msk [vmem:[%s418] sm:$0xf0] %vm341, %v423
    %v427 = vsel %vm344, %v416, 0
    %429 = vmatpush.msra.mxu0 0.0
    %430 = vmatpush.msra.mxu0 0.0
    %431 = vmatpush.msra.mxu0 0.0
    %432 = vmatpush.msra.mxu0 0.0
    %433 = vmatpush.msra.mxu0 0.0
    %434 = vmatpush.msra.mxu0 0.0
    %435 = vmatpush.msra.mxu0 0.0
    %436 = vmatpush.msra.mxu0 0.0
    %437 = vmatpush.msra.mxu0 0.0
    %438 = vmatpush.msra.mxu0 0.0
    %439 = vmatpush.msra.mxu0 0.0
    %440 = vmatpush.msra.mxu0 0.0
    %441 = vmatpush.msra.mxu0 %v304
    %442 = vmatpush.msra.mxu0 %v302
    %443 = vmatpush.msra.mxu0 %v300
    %444 = vmatpush.msra.mxu0 %v298
    %445 = vmatmul.f32.gmra.mxu0 %v427
    %v446 = vpop.f32.mrf.mxu0
    %v447 = vadd.f32 0.0, %v446
    %448 = vdwg.mxu0
    %449 = vmatpush.msra.mxu0 0.0
    %450 = vmatpush.msra.mxu0 0.0
    %451 = vmatpush.msra.mxu0 0.0
    %452 = vmatpush.msra.mxu0 0.0
    %453 = vmatpush.msra.mxu0 0.0
    %454 = vmatpush.msra.mxu0 0.0
    %455 = vmatpush.msra.mxu0 0.0
    %456 = vmatpush.msra.mxu0 0.0
    %457 = vmatpush.msra.mxu0 0.0
    %458 = vmatpush.msra.mxu0 0.0
    %459 = vmatpush.msra.mxu0 0.0
    %460 = vmatpush.msra.mxu0 0.0
    %461 = vmatpush.msra.mxu0 %v305
    %462 = vmatpush.msra.mxu0 %v303
    %463 = vmatpush.msra.mxu0 %v301
    %464 = vmatpush.msra.mxu0 %v299
    %465 = vmatmul.f32.gmra.mxu0 %v427
    %v466 = vpop.f32.mrf.mxu0
    %v467 = vadd.f32 0.0, %v466
    %468 = vdwg.mxu0
    %s469 = scalar_lea.vmem [#allocation2], 16
    %v470 = vld [vmem:[%s469] sm:$0xff]
    %v471 = vsel %vm89, %v447, %v467
    %v472 = vadd.f32 %v470, %v471
    %v473 = vsub.f32 0.0, %v472
    %v474 = vmul.f32 %v473, 1.442695
    %v475 = vpow.pop %v474
    %v476 = vadd.f32 %v475, 1.0
    %v477 = vrcp.pop %v476
    %v478 = vtanh.pop %v472
    %v479 = vmul.f32 %v477, %v407
    %481 = vrot.lane.b32.xlu0 %v478, 64
    %v482 = vpop.permute.xlu0 %481
    %v484 = vmul.f32 %v477, %v482
    %486 = vrot.lane.b32.xlu0 %v484, 32
    %v487 = vpop.permute.xlu0 %486
    %v489 = vadd.f32 %v479, %v487
    %v490 = vtanh.pop %v489
    %492 = vrot.lane.b32.xlu0 %v490, 64
    %v493 = vpop.permute.xlu0 %492
    %v495 = vmul.f32 %v477, %v493
    %497 = vrot.lane.b32.xlu0 %v495, 32
    %v498 = vpop.permute.xlu0 %497
    %s500 = scalar_lea.vmem [#allocation3], 16
    %501 = vst.msk [vmem:[%s500] sm:$0xf] %vm334, %v498
    %s502 = scalar_lea.vmem [#allocation3], 40
    %503 = vst.msk [vmem:[%s502 + $0x4] sm:$0xf] %vm334, %v498
    %504 = vrot.lane.b32.xlu0 %v495, 64
    %v505 = vpop.permute.xlu0 %504
    %507 = vst.msk [vmem:[%s502 - $0x4] sm:$0xf0] %vm341, %v505
    %508 = vst.msk [vmem:[%s500] sm:$0xf0] %vm341, %v505
    %v509 = vsel %vm344, %v498, 0
    %511 = vmatpush.msra.mxu0 0.0
    %512 = vmatpush.msra.mxu0 0.0
    %513 = vmatpush.msra.mxu0 0.0
    %514 = vmatpush.msra.mxu0 0.0
    %515 = vmatpush.msra.mxu0 0.0
    %516 = vmatpush.msra.mxu0 0.0
    %517 = vmatpush.msra.mxu0 0.0
    %518 = vmatpush.msra.mxu0 0.0
    %519 = vmatpush.msra.mxu0 0.0
    %520 = vmatpush.msra.mxu0 0.0
    %521 = vmatpush.msra.mxu0 0.0
    %522 = vmatpush.msra.mxu0 0.0
    %523 = vmatpush.msra.mxu0 %v304
    %524 = vmatpush.msra.mxu0 %v302
    %525 = vmatpush.msra.mxu0 %v300
    %526 = vmatpush.msra.mxu0 %v298
    %527 = vmatmul.f32.gmra.mxu0 %v509
    %v528 = vpop.f32.mrf.mxu0
    %v529 = vadd.f32 0.0, %v528
    %530 = vdwg.mxu0
    %531 = vmatpush.msra.mxu0 0.0
    %532 = vmatpush.msra.mxu0 0.0
    %533 = vmatpush.msra.mxu0 0.0
    %534 = vmatpush.msra.mxu0 0.0
    %535 = vmatpush.msra.mxu0 0.0
    %536 = vmatpush.msra.mxu0 0.0
    %537 = vmatpush.msra.mxu0 0.0
    %538 = vmatpush.msra.mxu0 0.0
    %539 = vmatpush.msra.mxu0 0.0
    %540 = vmatpush.msra.mxu0 0.0
    %541 = vmatpush.msra.mxu0 0.0
    %542 = vmatpush.msra.mxu0 0.0
    %543 = vmatpush.msra.mxu0 %v305
    %544 = vmatpush.msra.mxu0 %v303
    %545 = vmatpush.msra.mxu0 %v301
    %546 = vmatpush.msra.mxu0 %v299
    %547 = vmatmul.f32.gmra.mxu0 %v509
    %v548 = vpop.f32.mrf.mxu0
    %v549 = vadd.f32 0.0, %v548
    %550 = vdwg.mxu0
    %s551 = scalar_lea.vmem [#allocation2], 24
    %v552 = vld [vmem:[%s551] sm:$0xff]
    %v553 = vsel %vm89, %v529, %v549
    %v554 = vadd.f32 %v552, %v553
    %v555 = vsub.f32 0.0, %v554
    %v556 = vmul.f32 %v555, 1.442695
    %v557 = vpow.pop %v556
    %v558 = vadd.f32 %v557, 1.0
    %v559 = vrcp.pop %v558
    %v560 = vtanh.pop %v554
    %v561 = vmul.f32 %v559, %v489
    %563 = vrot.lane.b32.xlu0 %v560, 64
    %v564 = vpop.permute.xlu0 %563
    %v566 = vmul.f32 %v559, %v564
    %568 = vrot.lane.b32.xlu0 %v566, 32
    %v569 = vpop.permute.xlu0 %568
    %v571 = vadd.f32 %v561, %v569
    %v572 = vtanh.pop %v571
    %574 = vrot.lane.b32.xlu0 %v572, 64
    %v575 = vpop.permute.xlu0 %574
    %v577 = vmul.f32 %v559, %v575
    %579 = vrot.lane.b32.xlu0 %v577, 32
    %v580 = vpop.permute.xlu0 %579
    %s582 = scalar_lea.vmem [#allocation3], 24
    %583 = vst.msk [vmem:[%s582] sm:$0xf] %vm334, %v580
    %s584 = scalar_lea.vmem [#allocation3], 32
    %585 = vst.msk [vmem:[%s584 + $0x4] sm:$0xf] %vm334, %v580
    %586 = vrot.lane.b32.xlu0 %v577, 64
    %v587 = vpop.permute.xlu0 %586
    %589 = vst.msk [vmem:[%s584 - $0x4] sm:$0xf0] %vm341, %v587
    %590 = vst.msk [vmem:[%s582] sm:$0xf0] %vm341, %v587
    %v591 = vsel %vm344, %v580, 0
    %593 = vmatpush.msra.mxu0 0.0
    %594 = vmatpush.msra.mxu0 0.0
    %595 = vmatpush.msra.mxu0 0.0
    %596 = vmatpush.msra.mxu0 0.0
    %597 = vmatpush.msra.mxu0 0.0
    %598 = vmatpush.msra.mxu0 0.0
    %599 = vmatpush.msra.mxu0 0.0
    %600 = vmatpush.msra.mxu0 0.0
    %601 = vmatpush.msra.mxu0 0.0
    %602 = vmatpush.msra.mxu0 0.0
    %603 = vmatpush.msra.mxu0 0.0
    %604 = vmatpush.msra.mxu0 0.0
    %605 = vmatpush.msra.mxu0 %v304
    %606 = vmatpush.msra.mxu0 %v302
    %607 = vmatpush.msra.mxu0 %v300
    %608 = vmatpush.msra.mxu0 %v298
    %609 = vmatmul.f32.gmra.mxu0 %v591
    %v610 = vpop.f32.mrf.mxu0
    %v611 = vadd.f32 0.0, %v610
    %612 = vdwg.mxu0
    %613 = vmatpush.msra.mxu0 0.0
    %614 = vmatpush.msra.mxu0 0.0
    %615 = vmatpush.msra.mxu0 0.0
    %616 = vmatpush.msra.mxu0 0.0
    %617 = vmatpush.msra.mxu0 0.0
    %618 = vmatpush.msra.mxu0 0.0
    %619 = vmatpush.msra.mxu0 0.0
    %620 = vmatpush.msra.mxu0 0.0
    %621 = vmatpush.msra.mxu0 0.0
    %622 = vmatpush.msra.mxu0 0.0
    %623 = vmatpush.msra.mxu0 0.0
    %624 = vmatpush.msra.mxu0 0.0
    %625 = vmatpush.msra.mxu0 %v305
    %626 = vmatpush.msra.mxu0 %v303
    %627 = vmatpush.msra.mxu0 %v301
    %628 = vmatpush.msra.mxu0 %v299
    %629 = vmatmul.f32.gmra.mxu0 %v591
    %v630 = vpop.f32.mrf.mxu0
    %v631 = vadd.f32 0.0, %v630
    %632 = vdwg.mxu0
    %s633 = scalar_lea.vmem [#allocation2], 32
    %v634 = vld [vmem:[%s633] sm:$0xff]
    %v635 = vsel %vm89, %v611, %v631
    %v636 = vadd.f32 %v634, %v635
    %v637 = vsub.f32 0.0, %v636
    %v638 = vmul.f32 %v637, 1.442695
    %v639 = vpow.pop %v638
    %v640 = vadd.f32 %v639, 1.0
    %v641 = vrcp.pop %v640
    %v642 = vtanh.pop %v636
    %v643 = vmul.f32 %v641, %v571
    %645 = vrot.lane.b32.xlu0 %v642, 64
    %v646 = vpop.permute.xlu0 %645
    %v648 = vmul.f32 %v641, %v646
    %650 = vrot.lane.b32.xlu0 %v648, 32
    %v651 = vpop.permute.xlu0 %650
    %v653 = vadd.f32 %v643, %v651
    %v654 = vtanh.pop %v653
    %656 = vrot.lane.b32.xlu0 %v654, 64
    %v657 = vpop.permute.xlu0 %656
    %v659 = vmul.f32 %v641, %v657
    %661 = vrot.lane.b32.xlu0 %v659, 32
    %v662 = vpop.permute.xlu0 %661
    %664 = vst.msk [vmem:[%s584] sm:$0xf] %vm334, %v662
    %665 = vst.msk [vmem:[%s582 + $0x4] sm:$0xf] %vm334, %v662
    %666 = vrot.lane.b32.xlu0 %v659, 64
    %v667 = vpop.permute.xlu0 %666
    %669 = vst.msk [vmem:[%s582 - $0x4] sm:$0xf0] %vm341, %v667
    %670 = vst.msk [vmem:[%s584] sm:$0xf0] %vm341, %v667
    %v671 = vsel %vm344, %v662, 0
    %673 = vmatpush.msra.mxu0 0.0
    %674 = vmatpush.msra.mxu0 0.0
    %675 = vmatpush.msra.mxu0 0.0
    %676 = vmatpush.msra.mxu0 0.0
    %677 = vmatpush.msra.mxu0 0.0
    %678 = vmatpush.msra.mxu0 0.0
    %679 = vmatpush.msra.mxu0 0.0
    %680 = vmatpush.msra.mxu0 0.0
    %681 = vmatpush.msra.mxu0 0.0
    %682 = vmatpush.msra.mxu0 0.0
    %683 = vmatpush.msra.mxu0 0.0
    %684 = vmatpush.msra.mxu0 0.0
    %685 = vmatpush.msra.mxu0 %v304
    %686 = vmatpush.msra.mxu0 %v302
    %687 = vmatpush.msra.mxu0 %v300
    %688 = vmatpush.msra.mxu0 %v298
    %689 = vmatmul.f32.gmra.mxu0 %v671
    %v690 = vpop.f32.mrf.mxu0
    %v691 = vadd.f32 0.0, %v690
    %692 = vdwg.mxu0
    %693 = vmatpush.msra.mxu0 0.0
    %694 = vmatpush.msra.mxu0 0.0
    %695 = vmatpush.msra.mxu0 0.0
    %696 = vmatpush.msra.mxu0 0.0
    %697 = vmatpush.msra.mxu0 0.0
    %698 = vmatpush.msra.mxu0 0.0
    %699 = vmatpush.msra.mxu0 0.0
    %700 = vmatpush.msra.mxu0 0.0
    %701 = vmatpush.msra.mxu0 0.0
    %702 = vmatpush.msra.mxu0 0.0
    %703 = vmatpush.msra.mxu0 0.0
    %704 = vmatpush.msra.mxu0 0.0
    %705 = vmatpush.msra.mxu0 %v305
    %706 = vmatpush.msra.mxu0 %v303
    %707 = vmatpush.msra.mxu0 %v301
    %708 = vmatpush.msra.mxu0 %v299
    %709 = vmatmul.f32.gmra.mxu0 %v671
    %v710 = vpop.f32.mrf.mxu0
    %v711 = vadd.f32 0.0, %v710
    %712 = vdwg.mxu0
    %s713 = scalar_lea.vmem [#allocation2], 40
    %v714 = vld [vmem:[%s713] sm:$0xff]
    %v715 = vsel %vm89, %v691, %v711
    %v716 = vadd.f32 %v714, %v715
    %v717 = vsub.f32 0.0, %v716
    %v718 = vmul.f32 %v717, 1.442695
    %v719 = vpow.pop %v718
    %v720 = vadd.f32 %v719, 1.0
    %v721 = vrcp.pop %v720
    %v722 = vtanh.pop %v716
    %v723 = vmul.f32 %v721, %v653
    %725 = vrot.lane.b32.xlu0 %v722, 64
    %v726 = vpop.permute.xlu0 %725
    %v728 = vmul.f32 %v721, %v726
    %730 = vrot.lane.b32.xlu0 %v728, 32
    %v731 = vpop.permute.xlu0 %730
    %v733 = vadd.f32 %v723, %v731
    %v734 = vtanh.pop %v733
    %736 = vrot.lane.b32.xlu0 %v734, 64
    %v737 = vpop.permute.xlu0 %736
    %v739 = vmul.f32 %v721, %v737
    %741 = vrot.lane.b32.xlu0 %v739, 32
    %v742 = vpop.permute.xlu0 %741
    %744 = vst.msk [vmem:[%s502] sm:$0xf] %vm334, %v742
    %745 = vst.msk [vmem:[%s500 + $0x4] sm:$0xf] %vm334, %v742
    %746 = vrot.lane.b32.xlu0 %v739, 64
    %v747 = vpop.permute.xlu0 %746
    %749 = vst.msk [vmem:[%s500 - $0x4] sm:$0xf0] %vm341, %v747
    %750 = vst.msk [vmem:[%s502] sm:$0xf0] %vm341, %v747
    %v751 = vsel %vm344, %v742, 0
    %753 = vmatpush.msra.mxu0 0.0
    %754 = vmatpush.msra.mxu0 0.0
    %755 = vmatpush.msra.mxu0 0.0
    %756 = vmatpush.msra.mxu0 0.0
    %757 = vmatpush.msra.mxu0 0.0
    %758 = vmatpush.msra.mxu0 0.0
    %759 = vmatpush.msra.mxu0 0.0
    %760 = vmatpush.msra.mxu0 0.0
    %761 = vmatpush.msra.mxu0 0.0
    %762 = vmatpush.msra.mxu0 0.0
    %763 = vmatpush.msra.mxu0 0.0
    %764 = vmatpush.msra.mxu0 0.0
    %765 = vmatpush.msra.mxu0 %v304
    %766 = vmatpush.msra.mxu0 %v302
    %767 = vmatpush.msra.mxu0 %v300
    %768 = vmatpush.msra.mxu0 %v298
    %769 = vmatmul.f32.gmra.mxu0 %v751
    %v770 = vpop.f32.mrf.mxu0
    %v771 = vadd.f32 0.0, %v770
    %772 = vdwg.mxu0
    %773 = vmatpush.msra.mxu0 0.0
    %774 = vmatpush.msra.mxu0 0.0
    %775 = vmatpush.msra.mxu0 0.0
    %776 = vmatpush.msra.mxu0 0.0
    %777 = vmatpush.msra.mxu0 0.0
    %778 = vmatpush.msra.mxu0 0.0
    %779 = vmatpush.msra.mxu0 0.0
    %780 = vmatpush.msra.mxu0 0.0
    %781 = vmatpush.msra.mxu0 0.0
    %782 = vmatpush.msra.mxu0 0.0
    %783 = vmatpush.msra.mxu0 0.0
    %784 = vmatpush.msra.mxu0 0.0
    %785 = vmatpush.msra.mxu0 %v305
    %786 = vmatpush.msra.mxu0 %v303
    %787 = vmatpush.msra.mxu0 %v301
    %788 = vmatpush.msra.mxu0 %v299
    %789 = vmatmul.f32.gmra.mxu0 %v751
    %v790 = vpop.f32.mrf.mxu0
    %v791 = vadd.f32 0.0, %v790
    %792 = vdwg.mxu0
    %s793 = scalar_lea.vmem [#allocation2], 48
    %v794 = vld [vmem:[%s793] sm:$0xff]
    %v795 = vsel %vm89, %v771, %v791
    %v796 = vadd.f32 %v794, %v795
    %v797 = vsub.f32 0.0, %v796
    %v798 = vmul.f32 %v797, 1.442695
    %v799 = vpow.pop %v798
    %v800 = vadd.f32 %v799, 1.0
    %v801 = vrcp.pop %v800
    %v802 = vtanh.pop %v796
    %v803 = vmul.f32 %v801, %v733
    %805 = vrot.lane.b32.xlu0 %v802, 64
    %v806 = vpop.permute.xlu0 %805
    %v808 = vmul.f32 %v801, %v806
    %810 = vrot.lane.b32.xlu0 %v808, 32
    %v811 = vpop.permute.xlu0 %810
    %v813 = vadd.f32 %v803, %v811
    %v814 = vtanh.pop %v813
    %816 = vrot.lane.b32.xlu0 %v814, 64
    %v817 = vpop.permute.xlu0 %816
    %v819 = vmul.f32 %v801, %v817
    %821 = vrot.lane.b32.xlu0 %v819, 32
    %v822 = vpop.permute.xlu0 %821
    %824 = vst.msk [vmem:[%s420] sm:$0xf] %vm334, %v822
    %825 = vst.msk [vmem:[%s418 + $0x4] sm:$0xf] %vm334, %v822
    %826 = vrot.lane.b32.xlu0 %v819, 64
    %v827 = vpop.permute.xlu0 %826
    %829 = vst.msk [vmem:[%s418 - $0x4] sm:$0xf0] %vm341, %v827
    %830 = vst.msk [vmem:[%s420] sm:$0xf0] %vm341, %v827
    %v831 = vsel %vm344, %v822, 0
    %833 = vmatpush.msra.mxu0 0.0
    %834 = vmatpush.msra.mxu0 0.0
    %835 = vmatpush.msra.mxu0 0.0
    %836 = vmatpush.msra.mxu0 0.0
    %837 = vmatpush.msra.mxu0 0.0
    %838 = vmatpush.msra.mxu0 0.0
    %839 = vmatpush.msra.mxu0 0.0
    %840 = vmatpush.msra.mxu0 0.0
    %841 = vmatpush.msra.mxu0 0.0
    %842 = vmatpush.msra.mxu0 0.0
    %843 = vmatpush.msra.mxu0 0.0
    %844 = vmatpush.msra.mxu0 0.0
    %845 = vmatpush.msra.mxu0 %v304
    %846 = vmatpush.msra.mxu0 %v302
    %847 = vmatpush.msra.mxu0 %v300
    %848 = vmatpush.msra.mxu0 %v298
    %849 = vmatmul.f32.gmra.mxu0 %v831
    %v850 = vpop.f32.mrf.mxu0
    %v851 = vadd.f32 0.0, %v850
    %852 = vdwg.mxu0
    %853 = vmatpush.msra.mxu0 0.0
    %854 = vmatpush.msra.mxu0 0.0
    %855 = vmatpush.msra.mxu0 0.0
    %856 = vmatpush.msra.mxu0 0.0
    %857 = vmatpush.msra.mxu0 0.0
    %858 = vmatpush.msra.mxu0 0.0
    %859 = vmatpush.msra.mxu0 0.0
    %860 = vmatpush.msra.mxu0 0.0
    %861 = vmatpush.msra.mxu0 0.0
    %862 = vmatpush.msra.mxu0 0.0
    %863 = vmatpush.msra.mxu0 0.0
    %864 = vmatpush.msra.mxu0 0.0
    %865 = vmatpush.msra.mxu0 %v305
    %866 = vmatpush.msra.mxu0 %v303
    %867 = vmatpush.msra.mxu0 %v301
    %868 = vmatpush.msra.mxu0 %v299
    %869 = vmatmul.f32.gmra.mxu0 %v831
    %v870 = vpop.f32.mrf.mxu0
    %v871 = vadd.f32 0.0, %v870
    %872 = vdwg.mxu0
    %s873 = scalar_lea.vmem [#allocation2], 56
    %v874 = vld [vmem:[%s873] sm:$0xff]
    %v875 = vsel %vm89, %v851, %v871
    %v876 = vadd.f32 %v874, %v875
    %v877 = vsub.f32 0.0, %v876
    %v878 = vmul.f32 %v877, 1.442695
    %v879 = vpow.pop %v878
    %v880 = vadd.f32 %v879, 1.0
    %v881 = vrcp.pop %v880
    %v882 = vtanh.pop %v876
    %v883 = vmul.f32 %v881, %v813
    %885 = vrot.lane.b32.xlu0 %v882, 64
    %v886 = vpop.permute.xlu0 %885
    %v888 = vmul.f32 %v881, %v886
    %890 = vrot.lane.b32.xlu0 %v888, 32
    %v891 = vpop.permute.xlu0 %890
    %v893 = vadd.f32 %v883, %v891
    %v894 = vtanh.pop %v893
    %896 = vrot.lane.b32.xlu0 %v894, 64
    %v897 = vpop.permute.xlu0 %896
    %v899 = vmul.f32 %v881, %v897
    %901 = vrot.lane.b32.xlu0 %v899, 32
    %v902 = vpop.permute.xlu0 %901
    %904 = vst.msk [vmem:[%s336] sm:$0xf] %vm334, %v902
    %905 = vst.msk [vmem:[#allocation3 + $0x4] sm:$0xf] %vm334, %v902
    %906 = vrot.lane.b32.xlu0 %v899, 64
    %v907 = vpop.permute.xlu0 %906
    %909 = vst.msk [vmem:[#allocation3 - $0x4] sm:$0xf0] %vm341, %v907
    %910 = vst.msk [vmem:[%s336] sm:$0xf0] %vm341, %v907
    %911 = vst.msk [vmem:[#allocation11] sm:$0xf] %vm334, %v902
    %s912 = scalar_lea.vmem [#allocation11], 4
    %vm913 = vcmask 261124
    %914 = vst.msk [vmem:[%s912 - $0x4] sm:$0xf0] %vm913, %v902
    %916 = vrot.lane.b32.xlu0 %v893, 96
    %v917 = vpop.permute.xlu0 %916
    %919 = vst.msk [vmem:[#allocation12] sm:$0xf] %vm334, %v917
    %s920 = scalar_lea.vmem [#allocation12], 4
    %921 = vst.msk [vmem:[%s920 - $0x4] sm:$0xf0] %vm913, %v917
    %v922 = vld [vmem:[#allocation3] sm:$0xff]
    %v923 = vld [vmem:[#allocation3 + $0x8] sm:$0xff]
    %v924 = vld [vmem:[#allocation3 + $0x10] sm:$0xff]
    %v925 = vld [vmem:[#allocation3 + $0x18] sm:$0xff]
    %v926 = vld [vmem:[#allocation3 + $0x20] sm:$0xff]
    %v927 = vld [vmem:[#allocation3 + $0x28] sm:$0xff]
    %v928 = vld [vmem:[#allocation3 + $0x30] sm:$0xff]
    %v929 = vld [vmem:[#allocation3 + $0x38] sm:$0xff]
    %v930 = vld [vmem:[%s4] sm:$0xff]
    %v931 = vld [vmem:[%s4 + $0x8] sm:$0xff]
    %v932 = vld [vmem:[%s4 + $0x10] sm:$0xff]
    %v933 = vld [vmem:[%s4 + $0x18] sm:$0xff]
    %v934 = vld [vmem:[%s4 + $0x20] sm:$0xff]
    %v935 = vld [vmem:[%s4 + $0x28] sm:$0xff]
    %v936 = vld [vmem:[%s4 + $0x30] sm:$0xff]
    %v937 = vld [vmem:[%s4 + $0x38] sm:$0xff]
    %v938 = vld [vmem:[%s4 + $0x40] sm:$0xff]
    %v939 = vld [vmem:[%s4 + $0x48] sm:$0xff]
    %v940 = vld [vmem:[%s4 + $0x50] sm:$0xff]
    %v941 = vld [vmem:[%s4 + $0x58] sm:$0xff]
    %v942 = vld [vmem:[%s4 + $0x60] sm:$0xff]
    %v943 = vld [vmem:[%s4 + $0x68] sm:$0xff]
    %v944 = vld [vmem:[%s4 + $0x70] sm:$0xff]
    %v945 = vld [vmem:[%s4 + $0x78] sm:$0xff]
    %v946 = vld [vmem:[#allocation8] sm:$0x3]
    %v948 = vperm.slane %v946, 0
    %v949 = vperm.slane %v946, 1
    %vm952 = vcmask 523264
    %v954 = vsel %vm952, %v922, 0
    %v957 = vsel %vm952, %v923, 0
    %v960 = vsel %vm952, %v924, 0
    %v963 = vsel %vm952, %v925, 0
    %v966 = vsel %vm952, %v926, 0
    %v969 = vsel %vm952, %v927, 0
    %v972 = vsel %vm952, %v928, 0
    %v975 = vsel %vm952, %v929, 0
    %977 = vmatpush.msra.mxu0 0.0
    %978 = vmatpush.msra.mxu0 0.0
    %979 = vmatpush.msra.mxu0 0.0
    %980 = vmatpush.msra.mxu0 0.0
    %981 = vmatpush.msra.mxu0 0.0
    %982 = vmatpush.msra.mxu0 0.0
    %983 = vmatpush.msra.mxu0 0.0
    %984 = vmatpush.msra.mxu0 0.0
    %985 = vmatpush.msra.mxu0 %v944
    %986 = vmatpush.msra.mxu0 %v942
    %987 = vmatpush.msra.mxu0 %v940
    %988 = vmatpush.msra.mxu0 %v938
    %989 = vmatpush.msra.mxu0 %v936
    %990 = vmatpush.msra.mxu0 %v934
    %991 = vmatpush.msra.mxu0 %v932
    %992 = vmatpush.msra.mxu0 %v930
    %993 = vmatmul.f32.gmra.mxu0 %v954
    %v994 = vpop.f32.mrf.mxu0
    %v995 = vadd.f32 %v948, %v994
    %996 = vmatmul.f32.gmra.mxu0 %v957
    %v997 = vpop.f32.mrf.mxu0
    %v998 = vadd.f32 %v948, %v997
    %999 = vmatmul.f32.gmra.mxu0 %v960
    %v1000 = vpop.f32.mrf.mxu0
    %v1001 = vadd.f32 %v948, %v1000
    %1002 = vmatmul.f32.gmra.mxu0 %v963
    %v1003 = vpop.f32.mrf.mxu0
    %v1004 = vadd.f32 %v948, %v1003
    %1005 = vmatmul.f32.gmra.mxu0 %v966
    %v1006 = vpop.f32.mrf.mxu0
    %v1007 = vadd.f32 %v948, %v1006
    %1008 = vmatmul.f32.gmra.mxu0 %v969
    %v1009 = vpop.f32.mrf.mxu0
    %v1010 = vadd.f32 %v948, %v1009
    %1011 = vmatmul.f32.gmra.mxu0 %v972
    %v1012 = vpop.f32.mrf.mxu0
    %v1013 = vadd.f32 %v948, %v1012
    %1014 = vmatmul.f32.gmra.mxu0 %v975
    %v1015 = vpop.f32.mrf.mxu0
    %v1016 = vadd.f32 %v948, %v1015
    %1017 = vdwg.mxu0
    %1018 = vmatpush.msra.mxu0 0.0
    %1019 = vmatpush.msra.mxu0 0.0
    %1020 = vmatpush.msra.mxu0 0.0
    %1021 = vmatpush.msra.mxu0 0.0
    %1022 = vmatpush.msra.mxu0 0.0
    %1023 = vmatpush.msra.mxu0 0.0
    %1024 = vmatpush.msra.mxu0 0.0
    %1025 = vmatpush.msra.mxu0 0.0
    %1026 = vmatpush.msra.mxu0 %v945
    %1027 = vmatpush.msra.mxu0 %v943
    %1028 = vmatpush.msra.mxu0 %v941
    %1029 = vmatpush.msra.mxu0 %v939
    %1030 = vmatpush.msra.mxu0 %v937
    %1031 = vmatpush.msra.mxu0 %v935
    %1032 = vmatpush.msra.mxu0 %v933
    %1033 = vmatpush.msra.mxu0 %v931
    %1034 = vmatmul.f32.gmra.mxu0 %v954
    %v1035 = vpop.f32.mrf.mxu0
    %v1036 = vadd.f32 %v949, %v1035
    %1037 = vmatmul.f32.gmra.mxu0 %v957
    %v1038 = vpop.f32.mrf.mxu0
    %v1039 = vadd.f32 %v949, %v1038
    %1040 = vmatmul.f32.gmra.mxu0 %v960
    %v1041 = vpop.f32.mrf.mxu0
    %v1042 = vadd.f32 %v949, %v1041
    %1043 = vmatmul.f32.gmra.mxu0 %v963
    %v1044 = vpop.f32.mrf.mxu0
    %v1045 = vadd.f32 %v949, %v1044
    %1046 = vmatmul.f32.gmra.mxu0 %v966
    %v1047 = vpop.f32.mrf.mxu0
    %v1048 = vadd.f32 %v949, %v1047
    %1049 = vmatmul.f32.gmra.mxu0 %v969
    %v1050 = vpop.f32.mrf.mxu0
    %v1051 = vadd.f32 %v949, %v1050
    %1052 = vmatmul.f32.gmra.mxu0 %v972
    %v1053 = vpop.f32.mrf.mxu0
    %v1054 = vadd.f32 %v949, %v1053
    %1055 = vmatmul.f32.gmra.mxu0 %v975
    %v1056 = vpop.f32.mrf.mxu0
    %v1057 = vadd.f32 %v949, %v1056
    %1058 = vdwg.mxu0
    %v1059 = vsel %vm89, %v995, %v1036
    %v1060 = vsel %vm89, %v998, %v1039
    %v1061 = vsel %vm89, %v1001, %v1042
    %v1062 = vsel %vm89, %v1004, %v1045
    %v1063 = vsel %vm89, %v1007, %v1048
    %v1064 = vsel %vm89, %v1010, %v1051
    %v1065 = vsel %vm89, %v1013, %v1054
    %v1066 = vsel %vm89, %v1016, %v1057
    %1067 = vst [vmem:[#allocation2] sm:$0xff] %v1059
    %1068 = vst [vmem:[#allocation2 + $0x8] sm:$0xff] %v1060
    %1069 = vst [vmem:[#allocation2 + $0x10] sm:$0xff] %v1061
    %1070 = vst [vmem:[#allocation2 + $0x18] sm:$0xff] %v1062
    %1071 = vst [vmem:[#allocation2 + $0x20] sm:$0xff] %v1063
    %1072 = vst [vmem:[#allocation2 + $0x28] sm:$0xff] %v1064
    %1073 = vst [vmem:[#allocation2 + $0x30] sm:$0xff] %v1065
    %1074 = vst [vmem:[#allocation2 + $0x38] sm:$0xff] %v1066
    %v1075 = vld [vmem:[%s5] sm:$0xff]
    %v1076 = vld [vmem:[%s5 + $0x8] sm:$0xff]
    %v1077 = vld [vmem:[%s5 + $0x10] sm:$0xff]
    %v1078 = vld [vmem:[%s5 + $0x18] sm:$0xff]
    %v1079 = vld [vmem:[%s5 + $0x20] sm:$0xff]
    %v1080 = vld [vmem:[%s5 + $0x28] sm:$0xff]
    %v1081 = vld [vmem:[%s5 + $0x30] sm:$0xff]
    %v1082 = vld [vmem:[%s5 + $0x38] sm:$0xff]
    %v1083 = vld [vmem:[#allocation2] sm:$0xff]
    %v1084 = vsub.f32 0.0, %v1083
    %v1085 = vmul.f32 %v1084, 1.442695
    %v1086 = vpow.pop %v1085
    %v1087 = vadd.f32 %v1086, 1.0
    %v1088 = vrcp.pop %v1087
    %v1089 = vtanh.pop %v1083
    %v1090 = vmul.f32 %v1088, 0.0
    %1092 = vrot.lane.b32.xlu0 %v1089, 64
    %v1093 = vpop.permute.xlu0 %1092
    %v1095 = vmul.f32 %v1088, %v1093
    %1097 = vrot.lane.b32.xlu0 %v1095, 32
    %v1098 = vpop.permute.xlu0 %1097
    %v1100 = vadd.f32 %v1090, %v1098
    %v1101 = vtanh.pop %v1100
    %1103 = vrot.lane.b32.xlu0 %v1101, 64
    %v1104 = vpop.permute.xlu0 %1103
    %v1106 = vmul.f32 %v1088, %v1104
    %1108 = vrot.lane.b32.xlu0 %v1106, 32
    %v1109 = vpop.permute.xlu0 %1108
    %1111 = vst.msk [vmem:[#allocation4] sm:$0xf] %vm334, %v1109
    %1112 = vrot.lane.b32.xlu0 %v1106, 64
    %v1113 = vpop.permute.xlu0 %1112
    %s1115 = scalar_lea.vmem [#allocation4], 28
    %1116 = vst.msk [vmem:[%s1115 - $0x4] sm:$0xf0] %vm341, %v1113
    %v1117 = vsel %vm344, %v1109, 0
    %1119 = vmatpush.msra.mxu0 0.0
    %1120 = vmatpush.msra.mxu0 0.0
    %1121 = vmatpush.msra.mxu0 0.0
    %1122 = vmatpush.msra.mxu0 0.0
    %1123 = vmatpush.msra.mxu0 0.0
    %1124 = vmatpush.msra.mxu0 0.0
    %1125 = vmatpush.msra.mxu0 0.0
    %1126 = vmatpush.msra.mxu0 0.0
    %1127 = vmatpush.msra.mxu0 0.0
    %1128 = vmatpush.msra.mxu0 0.0
    %1129 = vmatpush.msra.mxu0 0.0
    %1130 = vmatpush.msra.mxu0 0.0
    %1131 = vmatpush.msra.mxu0 %v1081
    %1132 = vmatpush.msra.mxu0 %v1079
    %1133 = vmatpush.msra.mxu0 %v1077
    %1134 = vmatpush.msra.mxu0 %v1075
    %1135 = vmatmul.f32.gmra.mxu0 %v1117
    %v1136 = vpop.f32.mrf.mxu0
    %v1137 = vadd.f32 0.0, %v1136
    %1138 = vdwg.mxu0
    %1139 = vmatpush.msra.mxu0 0.0
    %1140 = vmatpush.msra.mxu0 0.0
    %1141 = vmatpush.msra.mxu0 0.0
    %1142 = vmatpush.msra.mxu0 0.0
    %1143 = vmatpush.msra.mxu0 0.0
    %1144 = vmatpush.msra.mxu0 0.0
    %1145 = vmatpush.msra.mxu0 0.0
    %1146 = vmatpush.msra.mxu0 0.0
    %1147 = vmatpush.msra.mxu0 0.0
    %1148 = vmatpush.msra.mxu0 0.0
    %1149 = vmatpush.msra.mxu0 0.0
    %1150 = vmatpush.msra.mxu0 0.0
    %1151 = vmatpush.msra.mxu0 %v1082
    %1152 = vmatpush.msra.mxu0 %v1080
    %1153 = vmatpush.msra.mxu0 %v1078
    %1154 = vmatpush.msra.mxu0 %v1076
    %1155 = vmatmul.f32.gmra.mxu0 %v1117
    %v1156 = vpop.f32.mrf.mxu0
    %v1157 = vadd.f32 0.0, %v1156
    %1158 = vdwg.mxu0
    %v1159 = vld [vmem:[%s387] sm:$0xff]
    %v1160 = vsel %vm89, %v1137, %v1157
    %v1161 = vadd.f32 %v1159, %v1160
    %v1162 = vsub.f32 0.0, %v1161
    %v1163 = vmul.f32 %v1162, 1.442695
    %v1164 = vpow.pop %v1163
    %v1165 = vadd.f32 %v1164, 1.0
    %v1166 = vrcp.pop %v1165
    %v1167 = vtanh.pop %v1161
    %v1168 = vmul.f32 %v1166, %v1100
    %1170 = vrot.lane.b32.xlu0 %v1167, 64
    %v1171 = vpop.permute.xlu0 %1170
    %v1173 = vmul.f32 %v1166, %v1171
    %1175 = vrot.lane.b32.xlu0 %v1173, 32
    %v1176 = vpop.permute.xlu0 %1175
    %v1178 = vadd.f32 %v1168, %v1176
    %v1179 = vtanh.pop %v1178
    %1181 = vrot.lane.b32.xlu0 %v1179, 64
    %v1182 = vpop.permute.xlu0 %1181
    %v1184 = vmul.f32 %v1166, %v1182
    %1186 = vrot.lane.b32.xlu0 %v1184, 32
    %v1187 = vpop.permute.xlu0 %1186
    %s1189 = scalar_lea.vmem [#allocation4], 4
    %1190 = vst.msk [vmem:[%s1189] sm:$0xf] %vm334, %v1187
    %1191 = vrot.lane.b32.xlu0 %v1184, 64
    %v1192 = vpop.permute.xlu0 %1191
    %s1194 = scalar_lea.vmem [#allocation4], 24
    %1195 = vst.msk [vmem:[%s1194 - $0x4] sm:$0xf0] %vm341, %v1192
    %v1196 = vsel %vm344, %v1187, 0
    %1198 = vmatpush.msra.mxu0 0.0
    %1199 = vmatpush.msra.mxu0 0.0
    %1200 = vmatpush.msra.mxu0 0.0
    %1201 = vmatpush.msra.mxu0 0.0
    %1202 = vmatpush.msra.mxu0 0.0
    %1203 = vmatpush.msra.mxu0 0.0
    %1204 = vmatpush.msra.mxu0 0.0
    %1205 = vmatpush.msra.mxu0 0.0
    %1206 = vmatpush.msra.mxu0 0.0
    %1207 = vmatpush.msra.mxu0 0.0
    %1208 = vmatpush.msra.mxu0 0.0
    %1209 = vmatpush.msra.mxu0 0.0
    %1210 = vmatpush.msra.mxu0 %v1081
    %1211 = vmatpush.msra.mxu0 %v1079
    %1212 = vmatpush.msra.mxu0 %v1077
    %1213 = vmatpush.msra.mxu0 %v1075
    %1214 = vmatmul.f32.gmra.mxu0 %v1196
    %v1215 = vpop.f32.mrf.mxu0
    %v1216 = vadd.f32 0.0, %v1215
    %1217 = vdwg.mxu0
    %1218 = vmatpush.msra.mxu0 0.0
    %1219 = vmatpush.msra.mxu0 0.0
    %1220 = vmatpush.msra.mxu0 0.0
    %1221 = vmatpush.msra.mxu0 0.0
    %1222 = vmatpush.msra.mxu0 0.0
    %1223 = vmatpush.msra.mxu0 0.0
    %1224 = vmatpush.msra.mxu0 0.0
    %1225 = vmatpush.msra.mxu0 0.0
    %1226 = vmatpush.msra.mxu0 0.0
    %1227 = vmatpush.msra.mxu0 0.0
    %1228 = vmatpush.msra.mxu0 0.0
    %1229 = vmatpush.msra.mxu0 0.0
    %1230 = vmatpush.msra.mxu0 %v1082
    %1231 = vmatpush.msra.mxu0 %v1080
    %1232 = vmatpush.msra.mxu0 %v1078
    %1233 = vmatpush.msra.mxu0 %v1076
    %1234 = vmatmul.f32.gmra.mxu0 %v1196
    %v1235 = vpop.f32.mrf.mxu0
    %v1236 = vadd.f32 0.0, %v1235
    %1237 = vdwg.mxu0
    %v1238 = vld [vmem:[%s469] sm:$0xff]
    %v1239 = vsel %vm89, %v1216, %v1236
    %v1240 = vadd.f32 %v1238, %v1239
    %v1241 = vsub.f32 0.0, %v1240
    %v1242 = vmul.f32 %v1241, 1.442695
    %v1243 = vpow.pop %v1242
    %v1244 = vadd.f32 %v1243, 1.0
    %v1245 = vrcp.pop %v1244
    %v1246 = vtanh.pop %v1240
    %v1247 = vmul.f32 %v1245, %v1178
    %1249 = vrot.lane.b32.xlu0 %v1246, 64
    %v1250 = vpop.permute.xlu0 %1249
    %v1252 = vmul.f32 %v1245, %v1250
    %1254 = vrot.lane.b32.xlu0 %v1252, 32
    %v1255 = vpop.permute.xlu0 %1254
    %v1257 = vadd.f32 %v1247, %v1255
    %v1258 = vtanh.pop %v1257
    %1260 = vrot.lane.b32.xlu0 %v1258, 64
    %v1261 = vpop.permute.xlu0 %1260
    %v1263 = vmul.f32 %v1245, %v1261
    %1265 = vrot.lane.b32.xlu0 %v1263, 32
    %v1266 = vpop.permute.xlu0 %1265
    %s1268 = scalar_lea.vmem [#allocation4], 8
    %1269 = vst.msk [vmem:[%s1268] sm:$0xf] %vm334, %v1266
    %1270 = vrot.lane.b32.xlu0 %v1263, 64
    %v1271 = vpop.permute.xlu0 %1270
    %s1273 = scalar_lea.vmem [#allocation4], 20
    %1274 = vst.msk [vmem:[%s1273 - $0x4] sm:$0xf0] %vm341, %v1271
    %v1275 = vsel %vm344, %v1266, 0
    %1277 = vmatpush.msra.mxu0 0.0
    %1278 = vmatpush.msra.mxu0 0.0
    %1279 = vmatpush.msra.mxu0 0.0
    %1280 = vmatpush.msra.mxu0 0.0
    %1281 = vmatpush.msra.mxu0 0.0
    %1282 = vmatpush.msra.mxu0 0.0
    %1283 = vmatpush.msra.mxu0 0.0
    %1284 = vmatpush.msra.mxu0 0.0
    %1285 = vmatpush.msra.mxu0 0.0
    %1286 = vmatpush.msra.mxu0 0.0
    %1287 = vmatpush.msra.mxu0 0.0
    %1288 = vmatpush.msra.mxu0 0.0
    %1289 = vmatpush.msra.mxu0 %v1081
    %1290 = vmatpush.msra.mxu0 %v1079
    %1291 = vmatpush.msra.mxu0 %v1077
    %1292 = vmatpush.msra.mxu0 %v1075
    %1293 = vmatmul.f32.gmra.mxu0 %v1275
    %v1294 = vpop.f32.mrf.mxu0
    %v1295 = vadd.f32 0.0, %v1294
    %1296 = vdwg.mxu0
    %1297 = vmatpush.msra.mxu0 0.0
    %1298 = vmatpush.msra.mxu0 0.0
    %1299 = vmatpush.msra.mxu0 0.0
    %1300 = vmatpush.msra.mxu0 0.0
    %1301 = vmatpush.msra.mxu0 0.0
    %1302 = vmatpush.msra.mxu0 0.0
    %1303 = vmatpush.msra.mxu0 0.0
    %1304 = vmatpush.msra.mxu0 0.0
    %1305 = vmatpush.msra.mxu0 0.0
    %1306 = vmatpush.msra.mxu0 0.0
    %1307 = vmatpush.msra.mxu0 0.0
    %1308 = vmatpush.msra.mxu0 0.0
    %1309 = vmatpush.msra.mxu0 %v1082
    %1310 = vmatpush.msra.mxu0 %v1080
    %1311 = vmatpush.msra.mxu0 %v1078
    %1312 = vmatpush.msra.mxu0 %v1076
    %1313 = vmatmul.f32.gmra.mxu0 %v1275
    %v1314 = vpop.f32.mrf.mxu0
    %v1315 = vadd.f32 0.0, %v1314
    %1316 = vdwg.mxu0
    %v1317 = vld [vmem:[%s551] sm:$0xff]
    %v1318 = vsel %vm89, %v1295, %v1315
    %v1319 = vadd.f32 %v1317, %v1318
    %v1320 = vsub.f32 0.0, %v1319
    %v1321 = vmul.f32 %v1320, 1.442695
    %v1322 = vpow.pop %v1321
    %v1323 = vadd.f32 %v1322, 1.0
    %v1324 = vrcp.pop %v1323
    %v1325 = vtanh.pop %v1319
    %v1326 = vmul.f32 %v1324, %v1257
    %1328 = vrot.lane.b32.xlu0 %v1325, 64
    %v1329 = vpop.permute.xlu0 %1328
    %v1331 = vmul.f32 %v1324, %v1329
    %1333 = vrot.lane.b32.xlu0 %v1331, 32
    %v1334 = vpop.permute.xlu0 %1333
    %v1336 = vadd.f32 %v1326, %v1334
    %v1337 = vtanh.pop %v1336
    %1339 = vrot.lane.b32.xlu0 %v1337, 64
    %v1340 = vpop.permute.xlu0 %1339
    %v1342 = vmul.f32 %v1324, %v1340
    %1344 = vrot.lane.b32.xlu0 %v1342, 32
    %v1345 = vpop.permute.xlu0 %1344
    %s1347 = scalar_lea.vmem [#allocation4], 12
    %1348 = vst.msk [vmem:[%s1347] sm:$0xf] %vm334, %v1345
    %1349 = vrot.lane.b32.xlu0 %v1342, 64
    %v1350 = vpop.permute.xlu0 %1349
    %s1352 = scalar_lea.vmem [#allocation4], 16
    %1353 = vst.msk [vmem:[%s1352 - $0x4] sm:$0xf0] %vm341, %v1350
    %v1354 = vsel %vm344, %v1345, 0
    %1356 = vmatpush.msra.mxu0 0.0
    %1357 = vmatpush.msra.mxu0 0.0
    %1358 = vmatpush.msra.mxu0 0.0
    %1359 = vmatpush.msra.mxu0 0.0
    %1360 = vmatpush.msra.mxu0 0.0
    %1361 = vmatpush.msra.mxu0 0.0
    %1362 = vmatpush.msra.mxu0 0.0
    %1363 = vmatpush.msra.mxu0 0.0
    %1364 = vmatpush.msra.mxu0 0.0
    %1365 = vmatpush.msra.mxu0 0.0
    %1366 = vmatpush.msra.mxu0 0.0
    %1367 = vmatpush.msra.mxu0 0.0
    %1368 = vmatpush.msra.mxu0 %v1081
    %1369 = vmatpush.msra.mxu0 %v1079
    %1370 = vmatpush.msra.mxu0 %v1077
    %1371 = vmatpush.msra.mxu0 %v1075
    %1372 = vmatmul.f32.gmra.mxu0 %v1354
    %v1373 = vpop.f32.mrf.mxu0
    %v1374 = vadd.f32 0.0, %v1373
    %1375 = vdwg.mxu0
    %1376 = vmatpush.msra.mxu0 0.0
    %1377 = vmatpush.msra.mxu0 0.0
    %1378 = vmatpush.msra.mxu0 0.0
    %1379 = vmatpush.msra.mxu0 0.0
    %1380 = vmatpush.msra.mxu0 0.0
    %1381 = vmatpush.msra.mxu0 0.0
    %1382 = vmatpush.msra.mxu0 0.0
    %1383 = vmatpush.msra.mxu0 0.0
    %1384 = vmatpush.msra.mxu0 0.0
    %1385 = vmatpush.msra.mxu0 0.0
    %1386 = vmatpush.msra.mxu0 0.0
    %1387 = vmatpush.msra.mxu0 0.0
    %1388 = vmatpush.msra.mxu0 %v1082
    %1389 = vmatpush.msra.mxu0 %v1080
    %1390 = vmatpush.msra.mxu0 %v1078
    %1391 = vmatpush.msra.mxu0 %v1076
    %1392 = vmatmul.f32.gmra.mxu0 %v1354
    %v1393 = vpop.f32.mrf.mxu0
    %v1394 = vadd.f32 0.0, %v1393
    %1395 = vdwg.mxu0
    %v1396 = vld [vmem:[%s633] sm:$0xff]
    %v1397 = vsel %vm89, %v1374, %v1394
    %v1398 = vadd.f32 %v1396, %v1397
    %v1399 = vsub.f32 0.0, %v1398
    %v1400 = vmul.f32 %v1399, 1.442695
    %v1401 = vpow.pop %v1400
    %v1402 = vadd.f32 %v1401, 1.0
    %v1403 = vrcp.pop %v1402
    %v1404 = vtanh.pop %v1398
    %v1405 = vmul.f32 %v1403, %v1336
    %1407 = vrot.lane.b32.xlu0 %v1404, 64
    %v1408 = vpop.permute.xlu0 %1407
    %v1410 = vmul.f32 %v1403, %v1408
    %1412 = vrot.lane.b32.xlu0 %v1410, 32
    %v1413 = vpop.permute.xlu0 %1412
    %v1415 = vadd.f32 %v1405, %v1413
    %v1416 = vtanh.pop %v1415
    %1418 = vrot.lane.b32.xlu0 %v1416, 64
    %v1419 = vpop.permute.xlu0 %1418
    %v1421 = vmul.f32 %v1403, %v1419
    %1423 = vrot.lane.b32.xlu0 %v1421, 32
    %v1424 = vpop.permute.xlu0 %1423
    %1426 = vst.msk [vmem:[%s1352] sm:$0xf] %vm334, %v1424
    %1427 = vrot.lane.b32.xlu0 %v1421, 64
    %v1428 = vpop.permute.xlu0 %1427
    %1430 = vst.msk [vmem:[%s1347 - $0x4] sm:$0xf0] %vm341, %v1428
    %v1431 = vsel %vm344, %v1424, 0
    %1433 = vmatpush.msra.mxu0 0.0
    %1434 = vmatpush.msra.mxu0 0.0
    %1435 = vmatpush.msra.mxu0 0.0
    %1436 = vmatpush.msra.mxu0 0.0
    %1437 = vmatpush.msra.mxu0 0.0
    %1438 = vmatpush.msra.mxu0 0.0
    %1439 = vmatpush.msra.mxu0 0.0
    %1440 = vmatpush.msra.mxu0 0.0
    %1441 = vmatpush.msra.mxu0 0.0
    %1442 = vmatpush.msra.mxu0 0.0
    %1443 = vmatpush.msra.mxu0 0.0
    %1444 = vmatpush.msra.mxu0 0.0
    %1445 = vmatpush.msra.mxu0 %v1081
    %1446 = vmatpush.msra.mxu0 %v1079
    %1447 = vmatpush.msra.mxu0 %v1077
    %1448 = vmatpush.msra.mxu0 %v1075
    %1449 = vmatmul.f32.gmra.mxu0 %v1431
    %v1450 = vpop.f32.mrf.mxu0
    %v1451 = vadd.f32 0.0, %v1450
    %1452 = vdwg.mxu0
    %1453 = vmatpush.msra.mxu0 0.0
    %1454 = vmatpush.msra.mxu0 0.0
    %1455 = vmatpush.msra.mxu0 0.0
    %1456 = vmatpush.msra.mxu0 0.0
    %1457 = vmatpush.msra.mxu0 0.0
    %1458 = vmatpush.msra.mxu0 0.0
    %1459 = vmatpush.msra.mxu0 0.0
    %1460 = vmatpush.msra.mxu0 0.0
    %1461 = vmatpush.msra.mxu0 0.0
    %1462 = vmatpush.msra.mxu0 0.0
    %1463 = vmatpush.msra.mxu0 0.0
    %1464 = vmatpush.msra.mxu0 0.0
    %1465 = vmatpush.msra.mxu0 %v1082
    %1466 = vmatpush.msra.mxu0 %v1080
    %1467 = vmatpush.msra.mxu0 %v1078
    %1468 = vmatpush.msra.mxu0 %v1076
    %1469 = vmatmul.f32.gmra.mxu0 %v1431
    %v1470 = vpop.f32.mrf.mxu0
    %v1471 = vadd.f32 0.0, %v1470
    %1472 = vdwg.mxu0
    %v1473 = vld [vmem:[%s713] sm:$0xff]
    %v1474 = vsel %vm89, %v1451, %v1471
    %v1475 = vadd.f32 %v1473, %v1474
    %v1476 = vsub.f32 0.0, %v1475
    %v1477 = vmul.f32 %v1476, 1.442695
    %v1478 = vpow.pop %v1477
    %v1479 = vadd.f32 %v1478, 1.0
    %v1480 = vrcp.pop %v1479
    %v1481 = vtanh.pop %v1475
    %v1482 = vmul.f32 %v1480, %v1415
    %1484 = vrot.lane.b32.xlu0 %v1481, 64
    %v1485 = vpop.permute.xlu0 %1484
    %v1487 = vmul.f32 %v1480, %v1485
    %1489 = vrot.lane.b32.xlu0 %v1487, 32
    %v1490 = vpop.permute.xlu0 %1489
    %v1492 = vadd.f32 %v1482, %v1490
    %v1493 = vtanh.pop %v1492
    %1495 = vrot.lane.b32.xlu0 %v1493, 64
    %v1496 = vpop.permute.xlu0 %1495
    %v1498 = vmul.f32 %v1480, %v1496
    %1500 = vrot.lane.b32.xlu0 %v1498, 32
    %v1501 = vpop.permute.xlu0 %1500
    %1503 = vst.msk [vmem:[%s1273] sm:$0xf] %vm334, %v1501
    %1504 = vrot.lane.b32.xlu0 %v1498, 64
    %v1505 = vpop.permute.xlu0 %1504
    %1507 = vst.msk [vmem:[%s1268 - $0x4] sm:$0xf0] %vm341, %v1505
    %v1508 = vsel %vm344, %v1501, 0
    %1510 = vmatpush.msra.mxu0 0.0
    %1511 = vmatpush.msra.mxu0 0.0
    %1512 = vmatpush.msra.mxu0 0.0
    %1513 = vmatpush.msra.mxu0 0.0
    %1514 = vmatpush.msra.mxu0 0.0
    %1515 = vmatpush.msra.mxu0 0.0
    %1516 = vmatpush.msra.mxu0 0.0
    %1517 = vmatpush.msra.mxu0 0.0
    %1518 = vmatpush.msra.mxu0 0.0
    %1519 = vmatpush.msra.mxu0 0.0
    %1520 = vmatpush.msra.mxu0 0.0
    %1521 = vmatpush.msra.mxu0 0.0
    %1522 = vmatpush.msra.mxu0 %v1081
    %1523 = vmatpush.msra.mxu0 %v1079
    %1524 = vmatpush.msra.mxu0 %v1077
    %1525 = vmatpush.msra.mxu0 %v1075
    %1526 = vmatmul.f32.gmra.mxu0 %v1508
    %v1527 = vpop.f32.mrf.mxu0
    %v1528 = vadd.f32 0.0, %v1527
    %1529 = vdwg.mxu0
    %1530 = vmatpush.msra.mxu0 0.0
    %1531 = vmatpush.msra.mxu0 0.0
    %1532 = vmatpush.msra.mxu0 0.0
    %1533 = vmatpush.msra.mxu0 0.0
    %1534 = vmatpush.msra.mxu0 0.0
    %1535 = vmatpush.msra.mxu0 0.0
    %1536 = vmatpush.msra.mxu0 0.0
    %1537 = vmatpush.msra.mxu0 0.0
    %1538 = vmatpush.msra.mxu0 0.0
    %1539 = vmatpush.msra.mxu0 0.0
    %1540 = vmatpush.msra.mxu0 0.0
    %1541 = vmatpush.msra.mxu0 0.0
    %1542 = vmatpush.msra.mxu0 %v1082
    %1543 = vmatpush.msra.mxu0 %v1080
    %1544 = vmatpush.msra.mxu0 %v1078
    %1545 = vmatpush.msra.mxu0 %v1076
    %1546 = vmatmul.f32.gmra.mxu0 %v1508
    %v1547 = vpop.f32.mrf.mxu0
    %v1548 = vadd.f32 0.0, %v1547
    %1549 = vdwg.mxu0
    %v1550 = vld [vmem:[%s793] sm:$0xff]
    %v1551 = vsel %vm89, %v1528, %v1548
    %v1552 = vadd.f32 %v1550, %v1551
    %v1553 = vsub.f32 0.0, %v1552
    %v1554 = vmul.f32 %v1553, 1.442695
    %v1555 = vpow.pop %v1554
    %v1556 = vadd.f32 %v1555, 1.0
    %v1557 = vrcp.pop %v1556
    %v1558 = vtanh.pop %v1552
    %v1559 = vmul.f32 %v1557, %v1492
    %1561 = vrot.lane.b32.xlu0 %v1558, 64
    %v1562 = vpop.permute.xlu0 %1561
    %v1564 = vmul.f32 %v1557, %v1562
    %1566 = vrot.lane.b32.xlu0 %v1564, 32
    %v1567 = vpop.permute.xlu0 %1566
    %v1569 = vadd.f32 %v1559, %v1567
    %v1570 = vtanh.pop %v1569
    %1572 = vrot.lane.b32.xlu0 %v1570, 64
    %v1573 = vpop.permute.xlu0 %1572
    %v1575 = vmul.f32 %v1557, %v1573
    %1577 = vrot.lane.b32.xlu0 %v1575, 32
    %v1578 = vpop.permute.xlu0 %1577
    %1580 = vst.msk [vmem:[%s1194] sm:$0xf] %vm334, %v1578
    %1581 = vrot.lane.b32.xlu0 %v1575, 64
    %v1582 = vpop.permute.xlu0 %1581
    %1584 = vst.msk [vmem:[%s1189 - $0x4] sm:$0xf0] %vm341, %v1582
    %v1585 = vsel %vm344, %v1578, 0
    %1587 = vmatpush.msra.mxu0 0.0
    %1588 = vmatpush.msra.mxu0 0.0
    %1589 = vmatpush.msra.mxu0 0.0
    %1590 = vmatpush.msra.mxu0 0.0
    %1591 = vmatpush.msra.mxu0 0.0
    %1592 = vmatpush.msra.mxu0 0.0
    %1593 = vmatpush.msra.mxu0 0.0
    %1594 = vmatpush.msra.mxu0 0.0
    %1595 = vmatpush.msra.mxu0 0.0
    %1596 = vmatpush.msra.mxu0 0.0
    %1597 = vmatpush.msra.mxu0 0.0
    %1598 = vmatpush.msra.mxu0 0.0
    %1599 = vmatpush.msra.mxu0 %v1081
    %1600 = vmatpush.msra.mxu0 %v1079
    %1601 = vmatpush.msra.mxu0 %v1077
    %1602 = vmatpush.msra.mxu0 %v1075
    %1603 = vmatmul.f32.gmra.mxu0 %v1585
    %v1604 = vpop.f32.mrf.mxu0
    %v1605 = vadd.f32 0.0, %v1604
    %1606 = vdwg.mxu0
    %1607 = vmatpush.msra.mxu0 0.0
    %1608 = vmatpush.msra.mxu0 0.0
    %1609 = vmatpush.msra.mxu0 0.0
    %1610 = vmatpush.msra.mxu0 0.0
    %1611 = vmatpush.msra.mxu0 0.0
    %1612 = vmatpush.msra.mxu0 0.0
    %1613 = vmatpush.msra.mxu0 0.0
    %1614 = vmatpush.msra.mxu0 0.0
    %1615 = vmatpush.msra.mxu0 0.0
    %1616 = vmatpush.msra.mxu0 0.0
    %1617 = vmatpush.msra.mxu0 0.0
    %1618 = vmatpush.msra.mxu0 0.0
    %1619 = vmatpush.msra.mxu0 %v1082
    %1620 = vmatpush.msra.mxu0 %v1080
    %1621 = vmatpush.msra.mxu0 %v1078
    %1622 = vmatpush.msra.mxu0 %v1076
    %1623 = vmatmul.f32.gmra.mxu0 %v1585
    %v1624 = vpop.f32.mrf.mxu0
    %v1625 = vadd.f32 0.0, %v1624
    %1626 = vdwg.mxu0
    %v1627 = vld [vmem:[%s873] sm:$0xff]
    %v1628 = vsel %vm89, %v1605, %v1625
    %v1629 = vadd.f32 %v1627, %v1628
    %v1630 = vsub.f32 0.0, %v1629
    %v1631 = vmul.f32 %v1630, 1.442695
    %v1632 = vpow.pop %v1631
    %v1633 = vadd.f32 %v1632, 1.0
    %v1634 = vrcp.pop %v1633
    %v1635 = vtanh.pop %v1629
    %v1636 = vmul.f32 %v1634, %v1569
    %1638 = vrot.lane.b32.xlu0 %v1635, 64
    %v1639 = vpop.permute.xlu0 %1638
    %v1641 = vmul.f32 %v1634, %v1639
    %1643 = vrot.lane.b32.xlu0 %v1641, 32
    %v1644 = vpop.permute.xlu0 %1643
    %v1646 = vadd.f32 %v1636, %v1644
    %v1647 = vtanh.pop %v1646
    %1649 = vrot.lane.b32.xlu0 %v1647, 64
    %v1650 = vpop.permute.xlu0 %1649
    %v1652 = vmul.f32 %v1634, %v1650
    %1654 = vrot.lane.b32.xlu0 %v1652, 32
    %v1655 = vpop.permute.xlu0 %1654
    %1657 = vst.msk [vmem:[%s1115] sm:$0xf] %vm334, %v1655
    %1658 = vrot.lane.b32.xlu0 %v1652, 64
    %v1659 = vpop.permute.xlu0 %1658
    %1661 = vst.msk [vmem:[#allocation4 - $0x4] sm:$0xf0] %vm341, %v1659
    %s1662 = scalar_lea.vmem [#allocation11], 8
    %1663 = vst.msk [vmem:[%s1662] sm:$0xf] %vm334, %v1655
    %s1664 = scalar_lea.vmem [#allocation11], 12
    %1665 = vst.msk [vmem:[%s1664 - $0x4] sm:$0xf0] %vm913, %v1655
    %1667 = vrot.lane.b32.xlu0 %v1646, 96
    %v1668 = vpop.permute.xlu0 %1667
    %s1670 = scalar_lea.vmem [#allocation12], 8
    %1671 = vst.msk [vmem:[%s1670] sm:$0xf] %vm334, %v1668
    %s1672 = scalar_lea.vmem [#allocation12], 12
    %1673 = vst.msk [vmem:[%s1672 - $0x4] sm:$0xf0] %vm913, %v1668
    %v1674 = vld [vmem:[#allocation4] sm:$0xf]
    %v1675 = vld [vmem:[#allocation4 + $0x4] sm:$0xf]
    %v1676 = vld [vmem:[#allocation4 + $0x8] sm:$0xf]
    %v1677 = vld [vmem:[#allocation4 + $0xc] sm:$0xf]
    %v1678 = vld [vmem:[#allocation4 + $0x10] sm:$0xf]
    %v1679 = vld [vmem:[#allocation4 + $0x14] sm:$0xf]
    %v1680 = vld [vmem:[#allocation4 + $0x18] sm:$0xf]
    %v1681 = vld [vmem:[#allocation4 + $0x1c] sm:$0xf]
    %v1682 = vtanh.pop %v1674
    %v1683 = vtanh.pop %v1675
    %v1684 = vtanh.pop %v1676
    %v1685 = vtanh.pop %v1677
    %v1686 = vtanh.pop %v1678
    %v1687 = vtanh.pop %v1679
    %v1688 = vtanh.pop %v1680
    %v1689 = vtanh.pop %v1681
    %v1690 = vld [vmem:[%s7] sm:$0x1]
    %v1692 = vperm.slane %v1690, 0
    %v1694 = vmul.f32 %v1682, %v1692
    %v1695 = vmul.f32 %v1683, %v1692
    %v1696 = vmul.f32 %v1684, %v1692
    %v1697 = vmul.f32 %v1685, %v1692
    %v1698 = vmul.f32 %v1686, %v1692
    %v1699 = vmul.f32 %v1687, %v1692
    %v1700 = vmul.f32 %v1688, %v1692
    %v1701 = vmul.f32 %v1689, %v1692
    %vm1702 = vcmask 519168
    %v1703 = vsel %vm1702, %v1694, 0.0
    %1704 = vadd.xlane.f32.xlu0 %v1703
    %v1705 = vpop.xlane.xlu0 %1704
    %v1706 = vsel %vm1702, %v1695, 0.0
    %1707 = vadd.xlane.f32.xlu0 %v1706
    %v1708 = vpop.xlane.xlu0 %1707
    %v1709 = vsel %vm1702, %v1696, 0.0
    %1710 = vadd.xlane.f32.xlu0 %v1709
    %v1711 = vpop.xlane.xlu0 %1710
    %v1712 = vsel %vm1702, %v1697, 0.0
    %1713 = vadd.xlane.f32.xlu0 %v1712
    %v1714 = vpop.xlane.xlu0 %1713
    %v1715 = vsel %vm1702, %v1698, 0.0
    %1716 = vadd.xlane.f32.xlu0 %v1715
    %v1717 = vpop.xlane.xlu0 %1716
    %v1718 = vsel %vm1702, %v1699, 0.0
    %1719 = vadd.xlane.f32.xlu0 %v1718
    %v1720 = vpop.xlane.xlu0 %1719
    %v1721 = vsel %vm1702, %v1700, 0.0
    %1722 = vadd.xlane.f32.xlu0 %v1721
    %v1723 = vpop.xlane.xlu0 %1722
    %v1724 = vsel %vm1702, %v1701, 0.0
    %1725 = vadd.xlane.f32.xlu0 %v1724
    %v1726 = vpop.xlane.xlu0 %1725
    %v1735 = vperm.slane %v1705, %v99
    %v1736 = vperm.slane %v1708, %v99
    %v1737 = vperm.slane %v1711, %v99
    %v1738 = vperm.slane %v1714, %v99
    %v1739 = vperm.slane %v1717, %v99
    %v1740 = vperm.slane %v1720, %v99
    %v1741 = vperm.slane %v1723, %v99
    %v1742 = vperm.slane %v1726, %v99
    %vm1743 = vcmask 1041409
    %v1744 = vsel %vm1743, %v1736, %v1735
    %vm1745 = vcmask 1042434
    %v1746 = vsel %vm1745, %v1737, %v1744
    %vm1747 = vcmask 1043459
    %v1748 = vsel %vm1747, %v1738, %v1746
    %vm1749 = vcmask 1044484
    %v1750 = vsel %vm1749, %v1739, %v1748
    %vm1751 = vcmask 1045509
    %v1752 = vsel %vm1751, %v1740, %v1750
    %vm1753 = vcmask 1046534
    %v1754 = vsel %vm1753, %v1741, %v1752
    %vm1755 = vcmask 1047559
    %v1756 = vsel %vm1755, %v1742, %v1754
    %vm1758 = vcmask 31744
    %v1759 = vsel %vm1758, %v1756, -inf
    %1760 = vmax.xlane.f32.xlu0 %v1759
    %v1761 = vpop.xlane.xlu0 %1760
    %v1763 = vperm.slane %v1761, 0
    %v1764 = vperm.slane %v1761, 1
    %v1765 = vperm.slane %v1761, 2
    %v1766 = vperm.slane %v1761, 3
    %v1767 = vperm.slane %v1761, 4
    %v1768 = vperm.slane %v1761, 5
    %v1769 = vperm.slane %v1761, 6
    %v1770 = vperm.slane %v1761, 7
    %v1779 = vsub.f32 %v1705, %v1763
    %v1780 = vsub.f32 %v1708, %v1764
    %v1781 = vsub.f32 %v1711, %v1765
    %v1782 = vsub.f32 %v1714, %v1766
    %v1783 = vsub.f32 %v1717, %v1767
    %v1784 = vsub.f32 %v1720, %v1768
    %v1785 = vsub.f32 %v1723, %v1769
    %v1786 = vsub.f32 %v1726, %v1770
    %v1787 = vmul.f32 %v1779, 1.442695
    %v1788 = vpow.pop %v1787
    %v1789 = vmul.f32 %v1780, 1.442695
    %v1790 = vpow.pop %v1789
    %v1791 = vmul.f32 %v1781, 1.442695
    %v1792 = vpow.pop %v1791
    %v1793 = vmul.f32 %v1782, 1.442695
    %v1794 = vpow.pop %v1793
    %v1795 = vmul.f32 %v1783, 1.442695
    %v1796 = vpow.pop %v1795
    %v1797 = vmul.f32 %v1784, 1.442695
    %v1798 = vpow.pop %v1797
    %v1799 = vmul.f32 %v1785, 1.442695
    %v1800 = vpow.pop %v1799
    %v1801 = vmul.f32 %v1786, 1.442695
    %v1802 = vpow.pop %v1801
    %1811 = vset.pattern.permute.xlu0 0
    %1812 = vperm.xlu0 %1811, %v1788
    %v1813 = vpop.permute.xlu0 %1812
    %1814 = vset.pattern.permute.xlu0 0
    %1815 = vperm.xlu0 %1814, %v1790
    %v1816 = vpop.permute.xlu0 %1815
    %1817 = vset.pattern.permute.xlu0 0
    %1818 = vperm.xlu0 %1817, %v1792
    %v1819 = vpop.permute.xlu0 %1818
    %1820 = vset.pattern.permute.xlu0 0
    %1821 = vperm.xlu0 %1820, %v1794
    %v1822 = vpop.permute.xlu0 %1821
    %1823 = vset.pattern.permute.xlu0 0
    %1824 = vperm.xlu0 %1823, %v1796
    %v1825 = vpop.permute.xlu0 %1824
    %1826 = vset.pattern.permute.xlu0 0
    %1827 = vperm.xlu0 %1826, %v1798
    %v1828 = vpop.permute.xlu0 %1827
    %1829 = vset.pattern.permute.xlu0 0
    %1830 = vperm.xlu0 %1829, %v1800
    %v1831 = vpop.permute.xlu0 %1830
    %1832 = vset.pattern.permute.xlu0 0
    %1833 = vperm.xlu0 %1832, %v1802
    %v1834 = vpop.permute.xlu0 %1833
    %v1835 = vperm.slane %v1813, %v99
    %v1836 = vperm.slane %v1816, %v99
    %v1837 = vperm.slane %v1819, %v99
    %v1838 = vperm.slane %v1822, %v99
    %v1839 = vperm.slane %v1825, %v99
    %v1840 = vperm.slane %v1828, %v99
    %v1841 = vperm.slane %v1831, %v99
    %v1842 = vperm.slane %v1834, %v99
    %v1843 = vsel %vm1743, %v1836, %v1835
    %v1844 = vsel %vm1745, %v1837, %v1843
    %v1845 = vsel %vm1747, %v1838, %v1844
    %v1846 = vsel %vm1749, %v1839, %v1845
    %v1847 = vsel %vm1751, %v1840, %v1846
    %v1848 = vsel %vm1753, %v1841, %v1847
    %v1849 = vsel %vm1755, %v1842, %v1848
    %v1851 = vsel %vm1758, %v1849, 0.0
    %1852 = vadd.xlane.f32.xlu0 %v1851
    %v1853 = vpop.xlane.xlu0 %1852
    %v1854 = vrcp.pop %v1853
    %v1856 = vperm.slane %v1854, 0
    %v1857 = vperm.slane %v1854, 1
    %v1858 = vperm.slane %v1854, 2
    %v1859 = vperm.slane %v1854, 3
    %v1860 = vperm.slane %v1854, 4
    %v1861 = vperm.slane %v1854, 5
    %v1862 = vperm.slane %v1854, 6
    %v1863 = vperm.slane %v1854, 7
    %v1872 = vmul.f32 %v1788, %v1856
    %v1873 = vmul.f32 %v1790, %v1857
    %v1874 = vmul.f32 %v1792, %v1858
    %v1875 = vmul.f32 %v1794, %v1859
    %v1876 = vmul.f32 %v1796, %v1860
    %v1877 = vmul.f32 %v1798, %v1861
    %v1878 = vmul.f32 %v1800, %v1862
    %v1879 = vmul.f32 %v1802, %v1863
    %1881 = vset.pattern.permute.xlu0 0
    %1882 = vperm.xlu0 %1881, %v1872
    %v1883 = vpop.permute.xlu0 %1882
    %1886 = vset.pattern.permute.xlu0 0
    %1887 = vperm.xlu0 %1886, %v1873
    %v1888 = vpop.permute.xlu0 %1887
    %1891 = vset.pattern.permute.xlu0 0
    %1892 = vperm.xlu0 %1891, %v1874
    %v1893 = vpop.permute.xlu0 %1892
    %1896 = vset.pattern.permute.xlu0 0
    %1897 = vperm.xlu0 %1896, %v1875
    %v1898 = vpop.permute.xlu0 %1897
    %1901 = vset.pattern.permute.xlu0 0
    %1902 = vperm.xlu0 %1901, %v1876
    %v1903 = vpop.permute.xlu0 %1902
    %1906 = vset.pattern.permute.xlu0 0
    %1907 = vperm.xlu0 %1906, %v1877
    %v1908 = vpop.permute.xlu0 %1907
    %1911 = vset.pattern.permute.xlu0 0
    %1912 = vperm.xlu0 %1911, %v1878
    %v1913 = vpop.permute.xlu0 %1912
    %1916 = vset.pattern.permute.xlu0 0
    %1917 = vperm.xlu0 %1916, %v1879
    %v1918 = vpop.permute.xlu0 %1917
    %v1920 = vmul.f32 %v1674, %v1883
    %v1921 = vmul.f32 %v1675, %v1888
    %v1922 = vmul.f32 %v1676, %v1893
    %v1923 = vmul.f32 %v1677, %v1898
    %v1924 = vmul.f32 %v1678, %v1903
    %v1925 = vmul.f32 %v1679, %v1908
    %v1926 = vmul.f32 %v1680, %v1913
    %v1927 = vmul.f32 %v1681, %v1918
    %v1928 = vsel %vm1702, %v1920, 0.0
    %v1929 = vrot.slane %v1928, 4
    %v1930 = vadd.f32 %v1928, %v1929
    %v1931 = vrot.slane %v1930, 2
    %v1932 = vadd.f32 %v1930, %v1931
    %v1933 = vrot.slane %v1932, 1
    %v1934 = vadd.f32 %v1932, %v1933
    %v1935 = vsel %vm1702, %v1921, 0.0
    %v1936 = vrot.slane %v1935, 4
    %v1937 = vadd.f32 %v1935, %v1936
    %v1938 = vrot.slane %v1937, 2
    %v1939 = vadd.f32 %v1937, %v1938
    %v1940 = vrot.slane %v1939, 1
    %v1941 = vadd.f32 %v1939, %v1940
    %v1942 = vsel %vm1702, %v1922, 0.0
    %v1943 = vrot.slane %v1942, 4
    %v1944 = vadd.f32 %v1942, %v1943
    %v1945 = vrot.slane %v1944, 2
    %v1946 = vadd.f32 %v1944, %v1945
    %v1947 = vrot.slane %v1946, 1
    %v1948 = vadd.f32 %v1946, %v1947
    %v1949 = vsel %vm1702, %v1923, 0.0
    %v1950 = vrot.slane %v1949, 4
    %v1951 = vadd.f32 %v1949, %v1950
    %v1952 = vrot.slane %v1951, 2
    %v1953 = vadd.f32 %v1951, %v1952
    %v1954 = vrot.slane %v1953, 1
    %v1955 = vadd.f32 %v1953, %v1954
    %v1956 = vsel %vm1702, %v1924, 0.0
    %v1957 = vrot.slane %v1956, 4
    %v1958 = vadd.f32 %v1956, %v1957
    %v1959 = vrot.slane %v1958, 2
    %v1960 = vadd.f32 %v1958, %v1959
    %v1961 = vrot.slane %v1960, 1
    %v1962 = vadd.f32 %v1960, %v1961
    %v1963 = vsel %vm1702, %v1925, 0.0
    %v1964 = vrot.slane %v1963, 4
    %v1965 = vadd.f32 %v1963, %v1964
    %v1966 = vrot.slane %v1965, 2
    %v1967 = vadd.f32 %v1965, %v1966
    %v1968 = vrot.slane %v1967, 1
    %v1969 = vadd.f32 %v1967, %v1968
    %v1970 = vsel %vm1702, %v1926, 0.0
    %v1971 = vrot.slane %v1970, 4
    %v1972 = vadd.f32 %v1970, %v1971
    %v1973 = vrot.slane %v1972, 2
    %v1974 = vadd.f32 %v1972, %v1973
    %v1975 = vrot.slane %v1974, 1
    %v1976 = vadd.f32 %v1974, %v1975
    %v1977 = vsel %vm1702, %v1927, 0.0
    %v1978 = vrot.slane %v1977, 4
    %v1979 = vadd.f32 %v1977, %v1978
    %v1980 = vrot.slane %v1979, 2
    %v1981 = vadd.f32 %v1979, %v1980
    %v1982 = vrot.slane %v1981, 1
    %v1983 = vadd.f32 %v1981, %v1982
    %v1984 = vmax.f32 %v1934, 0.0
    %v1985 = vmax.f32 %v1941, 0.0
    %v1986 = vmax.f32 %v1948, 0.0
    %v1987 = vmax.f32 %v1955, 0.0
    %v1988 = vmax.f32 %v1962, 0.0
    %v1989 = vmax.f32 %v1969, 0.0
    %v1990 = vmax.f32 %v1976, 0.0
    %v1991 = vmax.f32 %v1983, 0.0
    %v1992 = vld [vmem:[%s8] sm:$0xff]
    %v1993 = vld [vmem:[%s8 + $0x8] sm:$0xff]
    %v1994 = vld [vmem:[%s8 + $0x10] sm:$0xff]
    %v1995 = vld [vmem:[%s8 + $0x18] sm:$0xff]
    %v1996 = vld [vmem:[%s8 + $0x20] sm:$0xff]
    %v1997 = vld [vmem:[%s8 + $0x28] sm:$0xff]
    %v1998 = vld [vmem:[%s8 + $0x30] sm:$0xff]
    %v1999 = vld [vmem:[%s8 + $0x38] sm:$0xff]
    %v2000 = vld [vmem:[#allocation10] sm:$0x1]
    %v2002 = vperm.slane %v2000, 0
    %v2012 = vsel %vm1743, %v1985, %v1984
    %v2013 = vsel %vm1745, %v1986, %v2012
    %v2014 = vsel %vm1747, %v1987, %v2013
    %v2015 = vsel %vm1749, %v1988, %v2014
    %v2016 = vsel %vm1751, %v1989, %v2015
    %v2017 = vsel %vm1753, %v1990, %v2016
    %v2018 = vsel %vm1755, %v1991, %v2017
    %v2019 = vsel %vm952, %v2018, 0
    %2021 = vmatpush.msra.mxu0 0.0
    %2022 = vmatpush.msra.mxu0 0.0
    %2023 = vmatpush.msra.mxu0 0.0
    %2024 = vmatpush.msra.mxu0 0.0
    %2025 = vmatpush.msra.mxu0 0.0
    %2026 = vmatpush.msra.mxu0 0.0
    %2027 = vmatpush.msra.mxu0 0.0
    %2028 = vmatpush.msra.mxu0 0.0
    %2029 = vmatpush.msra.mxu0 %v1999
    %2030 = vmatpush.msra.mxu0 %v1998
    %2031 = vmatpush.msra.mxu0 %v1997
    %2032 = vmatpush.msra.mxu0 %v1996
    %2033 = vmatpush.msra.mxu0 %v1995
    %2034 = vmatpush.msra.mxu0 %v1994
    %2035 = vmatpush.msra.mxu0 %v1993
    %2036 = vmatpush.msra.mxu0 %v1992
    %2037 = vmatmul.f32.gmra.mxu0 %v2019
    %v2038 = vpop.f32.mrf.mxu0
    %v2039 = vadd.f32 %v2002, %v2038
    %2040 = vdwg.mxu0
    %v2041 = vld [vmem:[%s10] sm:$0xff]
    %v2042 = vld [vmem:[%s10 + $0x8] sm:$0xff]
    %v2043 = vld [vmem:[%s10 + $0x10] sm:$0xff]
    %v2044 = vld [vmem:[%s10 + $0x18] sm:$0xff]
    %v2045 = vld [vmem:[%s10 + $0x20] sm:$0xff]
    %v2046 = vld [vmem:[%s10 + $0x28] sm:$0xff]
    %v2047 = vld [vmem:[%s10 + $0x30] sm:$0xff]
    %v2048 = vld [vmem:[%s10 + $0x38] sm:$0xff]
    %v2049 = vld [vmem:[%s11] sm:$0x1]
    %v2051 = vperm.slane %v2049, 0
    %v2054 = vsel %vm952, %v2039, 0
    %2056 = vmatpush.msra.mxu0 0.0
    %2057 = vmatpush.msra.mxu0 0.0
    %2058 = vmatpush.msra.mxu0 0.0
    %2059 = vmatpush.msra.mxu0 0.0
    %2060 = vmatpush.msra.mxu0 0.0
    %2061 = vmatpush.msra.mxu0 0.0
    %2062 = vmatpush.msra.mxu0 0.0
    %2063 = vmatpush.msra.mxu0 0.0
    %2064 = vmatpush.msra.mxu0 %v2048
    %2065 = vmatpush.msra.mxu0 %v2047
    %2066 = vmatpush.msra.mxu0 %v2046
    %2067 = vmatpush.msra.mxu0 %v2045
    %2068 = vmatpush.msra.mxu0 %v2044
    %2069 = vmatpush.msra.mxu0 %v2043
    %2070 = vmatpush.msra.mxu0 %v2042
    %2071 = vmatpush.msra.mxu0 %v2041
    %2072 = vmatmul.f32.gmra.mxu0 %v2054
    %v2073 = vpop.f32.mrf.mxu0
    %v2074 = vadd.f32 %v2051, %v2073
    %2075 = vdwg.mxu0
    %v2076 = vxor.u32 %v2074, 2147483648
    %v2077 = vmul.f32 %v2076, 1.442695
    %v2078 = vpow.pop %v2077
    %v2079 = vadd.f32 %v2078, 1.0
    %v2080 = vrcp.pop %v2079
    %v2081 = vmul.f32 %v2079, %v2080
    %v2082 = vsub.f32 1.0, %v2081
    %v2083 = vmul.f32 %v2080, %v2082
    %v2084 = vadd.f32 %v2080, %v2083
    %vm2085 = vweird.f32 %v2079
    %vm2086 = vweird.f32 %v2080
    %vm2087 = vmor %vm2085, %vm2086
    %v2088 = vsel %vm2087, %v2080, %v2084
    %v2089 = vand.u32 2147483647, %v2079
    %vm2090 = vcmp.eq.f32.partialorder %v2089, 8.507059e+37
    %v2091 = vand.u32 %v2079, 2147483648
    %v2092 = vor.u32 1.1754944e-38, %v2091
    %v2093 = vsel %vm2090, %v2092, %v2088
    %v2094 = vmul.f32 1.0, %v2093
    %vm2095 = vcmask 23552
    %2096 = vst.msk [vmem:[%s12] sm:$0xff] %vm2095, %v2094
    // Predicated region
    $region62: #{bilstm_att_forward.1} parent=1 // pred_check
      _
    $region63: #{bilstm_att_forward.1} parent=1 // pred_check_branch
      %2098 = sbr.rel (0) target = $region65
    $region64: #{bilstm_att_forward.1} parent=1 // pred_region
      _
    $region65: #{bilstm_att_forward.1} parent=1 // pred_fallthru
      _
    // Predicated region
    $region66: #{bilstm_att_forward.1} parent=1 // pred_check
      _
    $region67: #{bilstm_att_forward.1} parent=1 // pred_check_branch
      %2100 = sbr.rel (0) target = $region69
    $region68: #{bilstm_att_forward.1} parent=1 // pred_region
      %2102 = vsyncadd [#allocation7], 0
      %s2103 = sshll.u32 [#allocation11], 4
      %s2104 = int_to_ptr.vmem [resolvable:$true] %s2103
      %s2105 = sshll.u32 %s13, 4
      %s2106 = int_to_ptr.hbm [resolvable:$true] %s2105
      %2111 = dma.vmem_to_hbm [thread:$0]  %s2104, 256, %s2106, [#allocation7], 64, 64, 4
    $region69: #{bilstm_att_forward.1} parent=1 // pred_fallthru
      _
    // Predicated region
    $region70: #{bilstm_att_forward.1} parent=1 // pred_check
      _
    $region71: #{bilstm_att_forward.1} parent=1 // pred_check_branch
      %2113 = sbr.rel (0) target = $region73
    $region72: #{bilstm_att_forward.1} parent=1 // pred_region
      %2115 = vsyncadd [#allocation13], 0
      %s2116 = sshll.u32 [#allocation12], 4
      %s2117 = int_to_ptr.vmem [resolvable:$true] %s2116
      %s2118 = sshll.u32 %s14, 4
      %s2119 = int_to_ptr.hbm [resolvable:$true] %s2118
      %2124 = dma.vmem_to_hbm [thread:$0]  %s2117, 256, %s2119, [#allocation13], 64, 64, 4
    $region73: #{bilstm_att_forward.1} parent=1 // pred_fallthru
      _
    // Predicated region
    $region74: #{bilstm_att_forward.1} parent=1 // pred_check
      _
    $region75: #{bilstm_att_forward.1} parent=1 // pred_check_branch
      %2126 = sbr.rel (0) target = $region77
    $region76: #{bilstm_att_forward.1} parent=1 // pred_region
      _
    $region77: #{bilstm_att_forward.1} parent=1 // pred_fallthru
      _
    // Predicated region
    $region78: #{bilstm_att_forward.1} parent=1 // pred_check
      _
    $region79: #{bilstm_att_forward.1} parent=1 // pred_check_branch
      %2128 = sbr.rel (0) target = $region81
    $region80: #{bilstm_att_forward.1} parent=1 // pred_region
      %2130 = dma.done [#allocation7], 256
    $region81: #{bilstm_att_forward.1} parent=1 // pred_fallthru
      _
    // Predicated region
    $region82: #{bilstm_att_forward.1} parent=1 // pred_check
      _
    $region83: #{bilstm_att_forward.1} parent=1 // pred_check_branch
      %2132 = sbr.rel (0) target = $region85
    $region84: #{bilstm_att_forward.1} parent=1 // pred_region
      %2134 = dma.done [#allocation13], 256
    $region85: #{bilstm_att_forward.1} parent=1 // pred_fallthru
      _
    %2135 = vsyncpa [#allocation6], 1
    %2136 = vsyncpa [#allocation9], 1
    %2137 = vsyncpa [#allocation7], 1
    %2138 = vsyncpa [#allocation13], 1

</llo_original>
